<compile_context>
chip_gen: v7x
topology: tpu7x:2x2x1
jax: 0.10.0
libtpu: 0.0.40
codegen_flags: <defaults>
</compile_context>

<pallas_src>
import math
import functools

import jax
import jax.numpy as jnp
from jax import lax
from jax.experimental import pallas as pl
from jax.experimental.pallas import tpu as pltpu


# ---------------------------------------------------------------------------
# Fused whole-forward kernel (single invocation, batch packed into lanes)
# ---------------------------------------------------------------------------

def brick_kernel(f_ref, p_ref, wblk_ref, bblk_ref, wx2_ref, bx2_ref, pe_ref,
                 wo1_ref, bo1_ref, wo2_ref, bo2_ref,
                 out_ref, sx_ref, sy_ref,
                 *, steps, beta, gamma, n_osc, num_nodes, batch):
    f = f_ref[...]                       # (F, W)   W = B * num_nodes, lanes
    P = p_ref[...]                       # (W, W)   block-diag normalized adj
    pe = pe_ref[...]                     # (H, W)   positional encoding (tiled)
    H, W = pe.shape

    # --- gst scattering -------------------------------------------------
    # TODO(synk): exact Wavelet(wavelet=[0,1,2], level=1) source is unavailable;
    # stand-in: average of f, |f@P|, |(f@P)@P|, preserving the (F, W) shape
    # BRICK needs downstream.
    s1 = jnp.abs(jnp.dot(f, P, preferred_element_type=jnp.float32))
    s2 = jnp.abs(jnp.dot(s1, P, preferred_element_type=jnp.float32))
    xg = (f + s1 + s2) * (1.0 / 3.0)

    # --- linear_y + x_processor[0] fused into ONE MXU push ----------------
    # wblk = [[Wy, 0], [0, Wx1]] (2H, 2F); stacked rhs = [f ; xg] (2F, W).
    stacked = jnp.concatenate([f, xg], axis=0)                  # (2F, W)
    yz = jnp.dot(wblk_ref[...], stacked,
                 preferred_element_type=jnp.float32) + bblk_ref[...]
    y = yz[0:H, :]                                              # linear_y out
    sy_ref[...] = y            # saved_y (pre positional encoding, as in ref)

    h = jnp.maximum(yz[H:2 * H, :], 0.0)                        # x_processor ReLU
    x = jnp.dot(wx2_ref[...], h,
                preferred_element_type=jnp.float32) + bx2_ref[...]

    # --- positional encodings --------------------------------------------
    y = y + pe
    x = x + pe
    sx_ref[...] = x   # TODO(synk): original solver's saved_x trajectory unavailable.

    # --- per-group reduce/broadcast via sublane roll log-tree (off the MXU)
    # Groups are n_osc consecutive rows of the hidden axis.  Wrapped values of
    # the rolls are never selected (stage d only reads within-group partners).
    row = lax.broadcasted_iota(jnp.int32, (H, W), 0)
    stage_sels = []
    d = 1
    while d < n_osc:
        stage_sels.append((d, (row & (2 * d - 1)) < d))
        d *= 2

    def group_sum(v):
        for dist, sel in stage_sels:
            fwd = pltpu.roll(v, H - dist, axis=0)   # brings v[i+dist] to row i
            bwd = pltpu.roll(v, dist, axis=0)       # brings v[i-dist] to row i
            v = v + jnp.where(sel, fwd, bwd)
        return v

    def group_norm(v):
        nsq = group_sum(v * v)
        return v * lax.rsqrt(nsq + 1e-6)

    # --- Kuramoto solver (stand-in) ---------------------------------------
    # TODO(synk): KuramotoSolver source is unavailable; AKOrN-style coupled
    # oscillators: hidden_dim split into groups of n_osc unit-norm oscillators,
    # adjacency coupling scaled by beta, conditioning x, tangent-space update,
    # renormalization, iterated T steps.  Only y @ P_b touches the MXU.
    y = group_norm(y)

    def step(_, y_cur):
        c = beta * jnp.dot(y_cur, P, preferred_element_type=jnp.float32) + x
        proj = group_sum(y_cur * c)
        y_new = y_cur + gamma * (c - proj * y_cur)
        return group_norm(y_new)

    y = lax.fori_loop(0, steps, step, y, unroll=True)

    # --- out_pred: AdaptiveMaxPool1d(1) -> Flatten -> Linear -> ReLU -> Linear
    wo1 = wo1_ref[...]
    bo1 = bo1_ref[...]
    wo2 = wo2_ref[...]
    bo2 = bo2_ref[...]
    C = wo2.shape[0]

    lane = lax.broadcasted_iota(jnp.int32, (H, W), 1)
    col = lax.broadcasted_iota(jnp.int32, (C, batch), 1)
    neg = jnp.finfo(jnp.float32).min
    out_acc = jnp.zeros((C, batch), jnp.float32)
    for b in range(batch):                       # static, tiny batch loop
        in_b = (lane >= b * num_nodes) & (lane < (b + 1) * num_nodes)
        pooled = jnp.max(jnp.where(in_b, y, neg), axis=1, keepdims=True)  # (H,1)
        h1 = jnp.maximum(
            jnp.dot(wo1, pooled, preferred_element_type=jnp.float32) + bo1, 0.0)
        o = jnp.dot(wo2, h1, preferred_element_type=jnp.float32) + bo2   # (C,1)
        out_acc = out_acc + jnp.where(col == b, o, 0.0)
    out_ref[...] = out_acc


# ---------------------------------------------------------------------------
# pallas_call wrapper (single fused call, no grid — everything stays in VMEM)
# ---------------------------------------------------------------------------

def brick_fused_call(f_packed, p_block, packed, *, steps, beta, gamma,
                     n_osc, num_nodes, batch):
    F, W = f_packed.shape
    H = packed["pe_packed"].shape[0]
    C = packed["wo2"].shape[0]

    kern = functools.partial(brick_kernel, steps=steps, beta=beta, gamma=gamma,
                             n_osc=n_osc, num_nodes=num_nodes, batch=batch)

    out_shape = (jax.ShapeDtypeStruct((C, batch), jnp.float32),   # logits (C,B)
                 jax.ShapeDtypeStruct((H, W), jnp.float32),       # saved_x
                 jax.ShapeDtypeStruct((H, W), jnp.float32))       # saved_y

    return pl.pallas_call(kern, out_shape=out_shape)(
        f_packed, p_block,
        packed["w_blk"], packed["b_blk"],
        packed["wx2"], packed["bx2"],
        packed["pe_packed"],
        packed["wo1"], packed["bo1"],
        packed["wo2"], packed["bo2"])


# ---------------------------------------------------------------------------
# Parameter construction (deterministic, PyTorch-Linear-style uniform init)
# ---------------------------------------------------------------------------

def positional_encoding(d_model, length):
    assert d_model % 2 == 0, "positional_encoding requires even hidden_dim"
    pe = jnp.zeros((d_model, length), jnp.float32)
    position = jnp.arange(length, dtype=jnp.float32)[:, None]
    div_term = jnp.exp(jnp.arange(0, d_model, 2, dtype=jnp.float32)
                       * (-(math.log(10000.0) / d_model)))
    pe = pe.at[0::2, :].set(jnp.sin(position * div_term).T)
    pe = pe.at[1::2, :].set(jnp.cos(position * div_term).T)
    return pe


def _linear_params(key, fan_in, fan_out):
    """PyTorch layout: weight (out, in), bias (out, 1)."""
    bound = 1.0 / math.sqrt(fan_in)
    kw, kb = jax.random.split(key)
    w = jax.random.uniform(kw, (fan_out, fan_in), jnp.float32, -bound, bound)
    b = jax.random.uniform(kb, (fan_out, 1), jnp.float32, -bound, bound)
    return w, b


def init_params(key, feature_dim, num_nodes, hidden_dim, num_classes):
    ks = jax.random.split(key, 5)
    wy, by = _linear_params(ks[0], feature_dim, hidden_dim)        # linear_y
    wx1, bx1 = _linear_params(ks[1], feature_dim, hidden_dim)      # x_processor[0]
    wx2, bx2 = _linear_params(ks[2], hidden_dim, hidden_dim)       # x_processor[2]
    wo1, bo1 = _linear_params(ks[3], hidden_dim, 4 * hidden_dim)   # out_pred lin 1
    wo2, bo2 = _linear_params(ks[4], 4 * hidden_dim, num_classes)  # out_pred lin 2
    pe = positional_encoding(hidden_dim, num_nodes)   # pe_y / pe_x buffers identical
    return dict(wy=wy, by=by, wx1=wx1, bx1=bx1, wx2=wx2, bx2=bx2,
                wo1=wo1, bo1=bo1, wo2=wo2, bo2=bo2, pe=pe)


# ---------------------------------------------------------------------------
# BRICK forward (y_type='linear', use_pe=True, node_cls=False, parcellation=False)
# ---------------------------------------------------------------------------

def brick_forward(features, adj, params, *, n_osc=4, steps=8, beta=2.5,
                  gamma=0.1):
    B, F, M = features.shape
    H = params["wy"].shape[0]
    C = params["wo2"].shape[0]
    assert H % n_osc == 0, "hidden_dim must be divisible by N (oscillators/group)"
    assert n_osc & (n_osc - 1) == 0, "n_osc must be a power of two"
    W = B * M

    # normalized adjacency (one-time, tiny) and its batch block-diagonal form
    deg = jnp.sum(adj, axis=-1)
    dinv = 1.0 / jnp.sqrt(jnp.maximum(deg, 1e-6))
    p_norm = dinv[:, None] * adj * dinv[None, :]                       # (M, M)
    p_block = jnp.kron(jnp.eye(B, dtype=jnp.float32), p_norm)          # (W, W)

    # batch packed into the lane axis: lane index = b * M + m
    f_packed = jnp.transpose(features, (1, 0, 2)).reshape(F, W)        # (F, W)
    pe_packed = jnp.tile(params["pe"], (1, B))                         # (H, W)

    # block-diagonal stacked weight fusing linear_y and x_processor[0]
    w_blk = jnp.zeros((2 * H, 2 * F), jnp.float32)
    w_blk = w_blk.at[:H, :F].set(params["wy"]).at[H:, F:].set(params["wx1"])
    b_blk = jnp.concatenate([params["by"], params["bx1"]], axis=0)     # (2H, 1)

    packed = dict(w_blk=w_blk, b_blk=b_blk,
                  wx2=params["wx2"], bx2=params["bx2"],
                  pe_packed=pe_packed,
                  wo1=params["wo1"], bo1=params["bo1"],
                  wo2=params["wo2"], bo2=params["bo2"])

    out_cb, sx, sy = brick_fused_call(
        f_packed, p_block, packed, steps=steps, beta=beta, gamma=gamma,
        n_osc=n_osc, num_nodes=M, batch=B)

    output = out_cb.T                                                  # (B, C)
    saved_x = sx.reshape(H, B, M).transpose(1, 0, 2)                   # (B, H, M)
    saved_y = sy.reshape(H, B, M).transpose(1, 0, 2)                   # (B, H, M)
    return output, saved_x, saved_y


# ---------------------------------------------------------------------------
# Demo
# ---------------------------------------------------------------------------

if __name__ == "__main__":
    B, FEAT, NODES, HID, CLS = 2, 32, 16, 32, 4
    N_OSC, T_STEPS, BETA = 4, 8, 2.5

    root = jax.random.PRNGKey(0)
    k_feat, k_adj, k_par = jax.random.split(root, 3)

    features = jax.random.normal(k_feat, (B, FEAT, NODES), jnp.float32)
    a = jax.random.uniform(k_adj, (NODES, NODES), jnp.float32)
    adj = ((a + a.T) > 1.0).astype(jnp.float32)
    adj = jnp.clip(adj + jnp.eye(NODES, dtype=jnp.float32), 0.0, 1.0)

    params = init_params(k_par, FEAT, NODES, HID, CLS)

    fwd = jax.jit(lambda f, ad, p: brick_forward(
        f, ad, p, n_osc=N_OSC, steps=T_STEPS, beta=BETA))
    output, saved_x, saved_y = fwd(features, adj, params)
    jax.block_until_ready((output, saved_x, saved_y))

    assert output.shape == (B, CLS)
    assert saved_x.shape == (B, HID, NODES)
    assert saved_y.shape == (B, HID, NODES)
    assert bool(jnp.all(jnp.isfinite(output)))
    assert bool(jnp.all(jnp.isfinite(saved_x)))
    assert bool(jnp.all(jnp.isfinite(saved_y)))
    print("KERNEL_OK")
</pallas_src>

<mosaic_0001>
module attributes {stable_mosaic.version = 11 : i64} {
  func.func @brick_kernel(%arg0: memref<32x32xf32, #tpu.memory_space<vmem>>, %arg1: memref<32x32xf32, #tpu.memory_space<vmem>>, %arg2: memref<64x64xf32, #tpu.memory_space<vmem>>, %arg3: memref<64x1xf32, #tpu.memory_space<vmem>>, %arg4: memref<32x32xf32, #tpu.memory_space<vmem>>, %arg5: memref<32x1xf32, #tpu.memory_space<vmem>>, %arg6: memref<32x32xf32, #tpu.memory_space<vmem>>, %arg7: memref<128x32xf32, #tpu.memory_space<vmem>>, %arg8: memref<128x1xf32, #tpu.memory_space<vmem>>, %arg9: memref<4x128xf32, #tpu.memory_space<vmem>>, %arg10: memref<4x1xf32, #tpu.memory_space<vmem>>, %arg11: memref<4x2xf32, #tpu.memory_space<vmem>>, %arg12: memref<32x32xf32, #tpu.memory_space<vmem>>, %arg13: memref<32x32xf32, #tpu.memory_space<vmem>>) attributes {dimension_semantics = [], scalar_prefetch = 0 : i64, scratch_operands = 0 : i64, tpu.core_type = #tpu.core_type<tc>} {
    %c0 = arith.constant 0 : index
    %c0_0 = arith.constant 0 : index
    %0 = vector.load %arg0[%c0, %c0_0] : memref<32x32xf32, #tpu.memory_space<vmem>>, vector<32x32xf32>
    %c0_1 = arith.constant 0 : index
    %c0_2 = arith.constant 0 : index
    %1 = vector.load %arg1[%c0_1, %c0_2] : memref<32x32xf32, #tpu.memory_space<vmem>>, vector<32x32xf32>
    %c0_3 = arith.constant 0 : index
    %c0_4 = arith.constant 0 : index
    %2 = vector.load %arg6[%c0_3, %c0_4] : memref<32x32xf32, #tpu.memory_space<vmem>>, vector<32x32xf32>
    %cst = arith.constant dense<0.000000e+00> : vector<32x32xf32>
    %3 = tpu.matmul %0, %1, %cst {dimension_numbers = #tpu.dot_dimension_numbers<[1], [0], [0], [1], [0, 0, 1, 1], [], []>} : vector<32x32xf32>, vector<32x32xf32>, vector<32x32xf32> -> vector<32x32xf32>
    %4 = math.absf %3 : vector<32x32xf32>
    %cst_5 = arith.constant dense<0.000000e+00> : vector<32x32xf32>
    %5 = tpu.matmul %4, %1, %cst_5 {dimension_numbers = #tpu.dot_dimension_numbers<[1], [0], [0], [1], [0, 0, 1, 1], [], []>} : vector<32x32xf32>, vector<32x32xf32>, vector<32x32xf32> -> vector<32x32xf32>
    %6 = math.absf %5 : vector<32x32xf32>
    %7 = arith.addf %0, %4 : vector<32x32xf32>
    %8 = arith.addf %7, %6 : vector<32x32xf32>
    %cst_6 = arith.constant 0.333333343 : f32
    %9 = vector.broadcast %cst_6 : f32 to vector<32x32xf32>
    %10 = arith.mulf %8, %9 : vector<32x32xf32>
    %11 = tpu.concatenate %0, %10 in 0 : vector<32x32xf32>, vector<32x32xf32> -> vector<64x32xf32>
    %c0_7 = arith.constant 0 : index
    %c0_8 = arith.constant 0 : index
    %12 = vector.load %arg2[%c0_7, %c0_8] : memref<64x64xf32, #tpu.memory_space<vmem>>, vector<64x64xf32>
    %cst_9 = arith.constant dense<0.000000e+00> : vector<64x32xf32>
    %13 = tpu.matmul %12, %11, %cst_9 {dimension_numbers = #tpu.dot_dimension_numbers<[1], [0], [0], [1], [0, 0, 1, 1], [], []>} : vector<64x64xf32>, vector<64x32xf32>, vector<64x32xf32> -> vector<64x32xf32>
    %c0_10 = arith.constant 0 : index
    %c0_11 = arith.constant 0 : index
    %14 = vector.load %arg3[%c0_10, %c0_11] : memref<64x1xf32, #tpu.memory_space<vmem>>, vector<64x1xf32>
    %15 = vector.broadcast %14 : vector<64x1xf32> to vector<64x32xf32>
    %16 = arith.addf %13, %15 : vector<64x32xf32>
    %17 = vector.extract_strided_slice %16 {offsets = [0, 0], sizes = [32, 32], strides = [1, 1]} : vector<64x32xf32> to vector<32x32xf32>
    %c0_12 = arith.constant 0 : index
    %c0_13 = arith.constant 0 : index
    %18 = vector.load %arg13[%c0_12, %c0_13] : memref<32x32xf32, #tpu.memory_space<vmem>>, vector<32x32xf32>
    tpu.vector_store %arg13[%c0_12, %c0_13], %17 {strides = array<i32>} : memref<32x32xf32, #tpu.memory_space<vmem>>, vector<32x32xf32>,
    %19 = vector.extract_strided_slice %16 {offsets = [32, 0], sizes = [32, 32], strides = [1, 1]} : vector<64x32xf32> to vector<32x32xf32>
    %cst_14 = arith.constant 0.000000e+00 : f32
    %20 = vector.broadcast %cst_14 : f32 to vector<32x32xf32>
    %21 = arith.maximumf %19, %20 : vector<32x32xf32>
    %c0_15 = arith.constant 0 : index
    %c0_16 = arith.constant 0 : index
    %22 = vector.load %arg4[%c0_15, %c0_16] : memref<32x32xf32, #tpu.memory_space<vmem>>, vector<32x32xf32>
    %cst_17 = arith.constant dense<0.000000e+00> : vector<32x32xf32>
    %23 = tpu.matmul %22, %21, %cst_17 {dimension_numbers = #tpu.dot_dimension_numbers<[1], [0], [0], [1], [0, 0, 1, 1], [], []>} : vector<32x32xf32>, vector<32x32xf32>, vector<32x32xf32> -> vector<32x32xf32>
    %c0_18 = arith.constant 0 : index
    %c0_19 = arith.constant 0 : index
    %24 = vector.load %arg5[%c0_18, %c0_19] : memref<32x1xf32, #tpu.memory_space<vmem>>, vector<32x1xf32>
    %25 = vector.broadcast %24 : vector<32x1xf32> to vector<32x32xf32>
    %26 = arith.addf %23, %25 : vector<32x32xf32>
    %27 = arith.addf %17, %2 : vector<32x32xf32>
    %28 = arith.addf %26, %2 : vector<32x32xf32>
    %c0_20 = arith.constant 0 : index
    %c0_21 = arith.constant 0 : index
    %29 = vector.load %arg12[%c0_20, %c0_21] : memref<32x32xf32, #tpu.memory_space<vmem>>, vector<32x32xf32>
    tpu.vector_store %arg12[%c0_20, %c0_21], %28 {strides = array<i32>} : memref<32x32xf32, #tpu.memory_space<vmem>>, vector<32x32xf32>,
    %30 = tpu.iota {dimensions = array<i32: 0>} : vector<32x32xi32>
    %c1_i32 = arith.constant 1 : i32
    %31 = vector.broadcast %c1_i32 : i32 to vector<32x32xi32>
    %32 = arith.andi %30, %31 : vector<32x32xi32>
    %c1_i32_22 = arith.constant 1 : i32
    %33 = vector.broadcast %c1_i32_22 : i32 to vector<32x32xi32>
    %34 = arith.cmpi slt, %32, %33 : vector<32x32xi32>
    %c3_i32 = arith.constant 3 : i32
    %35 = vector.broadcast %c3_i32 : i32 to vector<32x32xi32>
    %36 = arith.andi %30, %35 : vector<32x32xi32>
    %c2_i32 = arith.constant 2 : i32
    %37 = vector.broadcast %c2_i32 : i32 to vector<32x32xi32>
    %38 = arith.cmpi slt, %36, %37 : vector<32x32xi32>
    %39 = arith.mulf %27, %27 : vector<32x32xf32>
    %c31_i32 = arith.constant 31 : i32
    %40 = tpu.dynamic_rotate %39 by %c31_i32 dim 0 : vector<32x32xf32>, i32 -> vector<32x32xf32>
    %c1_i32_23 = arith.constant 1 : i32
    %41 = tpu.dynamic_rotate %39 by %c1_i32_23 dim 0 : vector<32x32xf32>, i32 -> vector<32x32xf32>
    %42 = arith.select %34, %40, %41 : vector<32x32xi1>, vector<32x32xf32>
    %43 = arith.addf %39, %42 : vector<32x32xf32>
    %c30_i32 = arith.constant 30 : i32
    %44 = tpu.dynamic_rotate %43 by %c30_i32 dim 0 : vector<32x32xf32>, i32 -> vector<32x32xf32>
    %c2_i32_24 = arith.constant 2 : i32
    %45 = tpu.dynamic_rotate %43 by %c2_i32_24 dim 0 : vector<32x32xf32>, i32 -> vector<32x32xf32>
    %46 = arith.select %38, %44, %45 : vector<32x32xi1>, vector<32x32xf32>
    %47 = arith.addf %43, %46 : vector<32x32xf32>
    %cst_25 = arith.constant 9.99999997E-7 : f32
    %48 = vector.broadcast %cst_25 : f32 to vector<32x32xf32>
    %49 = arith.addf %47, %48 : vector<32x32xf32>
    %50 = math.rsqrt %49 : vector<32x32xf32>
    %51 = arith.mulf %27, %50 : vector<32x32xf32>
    %c0_i32 = arith.constant 0 : i32
    %cst_26 = arith.constant dense<0.000000e+00> : vector<32x32xf32>
    %52 = tpu.matmul %51, %1, %cst_26 {dimension_numbers = #tpu.dot_dimension_numbers<[1], [0], [0], [1], [0, 0, 1, 1], [], []>} : vector<32x32xf32>, vector<32x32xf32>, vector<32x32xf32> -> vector<32x32xf32>
    %cst_27 = arith.constant 2.500000e+00 : f32
    %53 = vector.broadcast %cst_27 : f32 to vector<32x32xf32>
    %54 = arith.mulf %53, %52 : vector<32x32xf32>
    %55 = arith.addf %54, %28 : vector<32x32xf32>
    %56 = arith.mulf %51, %55 : vector<32x32xf32>
    %c31_i32_28 = arith.constant 31 : i32
    %57 = tpu.dynamic_rotate %56 by %c31_i32_28 dim 0 : vector<32x32xf32>, i32 -> vector<32x32xf32>
    %c1_i32_29 = arith.constant 1 : i32
    %58 = tpu.dynamic_rotate %56 by %c1_i32_29 dim 0 : vector<32x32xf32>, i32 -> vector<32x32xf32>
    %59 = arith.select %34, %57, %58 : vector<32x32xi1>, vector<32x32xf32>
    %60 = arith.addf %56, %59 : vector<32x32xf32>
    %c30_i32_30 = arith.constant 30 : i32
    %61 = tpu.dynamic_rotate %60 by %c30_i32_30 dim 0 : vector<32x32xf32>, i32 -> vector<32x32xf32>
    %c2_i32_31 = arith.constant 2 : i32
    %62 = tpu.dynamic_rotate %60 by %c2_i32_31 dim 0 : vector<32x32xf32>, i32 -> vector<32x32xf32>
    %63 = arith.select %38, %61, %62 : vector<32x32xi1>, vector<32x32xf32>
    %64 = arith.addf %60, %63 : vector<32x32xf32>
    %65 = arith.mulf %64, %51 : vector<32x32xf32>
    %66 = arith.subf %55, %65 : vector<32x32xf32>
    %cst_32 = arith.constant 1.000000e-01 : f32
    %67 = vector.broadcast %cst_32 : f32 to vector<32x32xf32>
    %68 = arith.mulf %67, %66 : vector<32x32xf32>
    %69 = arith.addf %51, %68 : vector<32x32xf32>
    %70 = arith.mulf %69, %69 : vector<32x32xf32>
    %c31_i32_33 = arith.constant 31 : i32
    %71 = tpu.dynamic_rotate %70 by %c31_i32_33 dim 0 : vector<32x32xf32>, i32 -> vector<32x32xf32>
    %c1_i32_34 = arith.constant 1 : i32
    %72 = tpu.dynamic_rotate %70 by %c1_i32_34 dim 0 : vector<32x32xf32>, i32 -> vector<32x32xf32>
    %73 = arith.select %34, %71, %72 : vector<32x32xi1>, vector<32x32xf32>
    %74 = arith.addf %70, %73 : vector<32x32xf32>
    %c30_i32_35 = arith.constant 30 : i32
    %75 = tpu.dynamic_rotate %74 by %c30_i32_35 dim 0 : vector<32x32xf32>, i32 -> vector<32x32xf32>
    %c2_i32_36 = arith.constant 2 : i32
    %76 = tpu.dynamic_rotate %74 by %c2_i32_36 dim 0 : vector<32x32xf32>, i32 -> vector<32x32xf32>
    %77 = arith.select %38, %75, %76 : vector<32x32xi1>, vector<32x32xf32>
    %78 = arith.addf %74, %77 : vector<32x32xf32>
    %cst_37 = arith.constant 9.99999997E-7 : f32
    %79 = vector.broadcast %cst_37 : f32 to vector<32x32xf32>
    %80 = arith.addf %78, %79 : vector<32x32xf32>
    %81 = math.rsqrt %80 : vector<32x32xf32>
    %82 = arith.mulf %69, %81 : vector<32x32xf32>
    %c1_i32_38 = arith.constant 1 : i32
    %cst_39 = arith.constant dense<0.000000e+00> : vector<32x32xf32>
    %83 = tpu.matmul %82, %1, %cst_39 {dimension_numbers = #tpu.dot_dimension_numbers<[1], [0], [0], [1], [0, 0, 1, 1], [], []>} : vector<32x32xf32>, vector<32x32xf32>, vector<32x32xf32> -> vector<32x32xf32>
    %cst_40 = arith.constant 2.500000e+00 : f32
    %84 = vector.broadcast %cst_40 : f32 to vector<32x32xf32>
    %85 = arith.mulf %84, %83 : vector<32x32xf32>
    %86 = arith.addf %85, %28 : vector<32x32xf32>
    %87 = arith.mulf %82, %86 : vector<32x32xf32>
    %c31_i32_41 = arith.constant 31 : i32
    %88 = tpu.dynamic_rotate %87 by %c31_i32_41 dim 0 : vector<32x32xf32>, i32 -> vector<32x32xf32>
    %c1_i32_42 = arith.constant 1 : i32
    %89 = tpu.dynamic_rotate %87 by %c1_i32_42 dim 0 : vector<32x32xf32>, i32 -> vector<32x32xf32>
    %90 = arith.select %34, %88, %89 : vector<32x32xi1>, vector<32x32xf32>
    %91 = arith.addf %87, %90 : vector<32x32xf32>
    %c30_i32_43 = arith.constant 30 : i32
    %92 = tpu.dynamic_rotate %91 by %c30_i32_43 dim 0 : vector<32x32xf32>, i32 -> vector<32x32xf32>
    %c2_i32_44 = arith.constant 2 : i32
    %93 = tpu.dynamic_rotate %91 by %c2_i32_44 dim 0 : vector<32x32xf32>, i32 -> vector<32x32xf32>
    %94 = arith.select %38, %92, %93 : vector<32x32xi1>, vector<32x32xf32>
    %95 = arith.addf %91, %94 : vector<32x32xf32>
    %96 = arith.mulf %95, %82 : vector<32x32xf32>
    %97 = arith.subf %86, %96 : vector<32x32xf32>
    %cst_45 = arith.constant 1.000000e-01 : f32
    %98 = vector.broadcast %cst_45 : f32 to vector<32x32xf32>
    %99 = arith.mulf %98, %97 : vector<32x32xf32>
    %100 = arith.addf %82, %99 : vector<32x32xf32>
    %101 = arith.mulf %100, %100 : vector<32x32xf32>
    %c31_i32_46 = arith.constant 31 : i32
    %102 = tpu.dynamic_rotate %101 by %c31_i32_46 dim 0 : vector<32x32xf32>, i32 -> vector<32x32xf32>
    %c1_i32_47 = arith.constant 1 : i32
    %103 = tpu.dynamic_rotate %101 by %c1_i32_47 dim 0 : vector<32x32xf32>, i32 -> vector<32x32xf32>
    %104 = arith.select %34, %102, %103 : vector<32x32xi1>, vector<32x32xf32>
    %105 = arith.addf %101, %104 : vector<32x32xf32>
    %c30_i32_48 = arith.constant 30 : i32
    %106 = tpu.dynamic_rotate %105 by %c30_i32_48 dim 0 : vector<32x32xf32>, i32 -> vector<32x32xf32>
    %c2_i32_49 = arith.constant 2 : i32
    %107 = tpu.dynamic_rotate %105 by %c2_i32_49 dim 0 : vector<32x32xf32>, i32 -> vector<32x32xf32>
    %108 = arith.select %38, %106, %107 : vector<32x32xi1>, vector<32x32xf32>
    %109 = arith.addf %105, %108 : vector<32x32xf32>
    %cst_50 = arith.constant 9.99999997E-7 : f32
    %110 = vector.broadcast %cst_50 : f32 to vector<32x32xf32>
    %111 = arith.addf %109, %110 : vector<32x32xf32>
    %112 = math.rsqrt %111 : vector<32x32xf32>
    %113 = arith.mulf %100, %112 : vector<32x32xf32>
    %c2_i32_51 = arith.constant 2 : i32
    %cst_52 = arith.constant dense<0.000000e+00> : vector<32x32xf32>
    %114 = tpu.matmul %113, %1, %cst_52 {dimension_numbers = #tpu.dot_dimension_numbers<[1], [0], [0], [1], [0, 0, 1, 1], [], []>} : vector<32x32xf32>, vector<32x32xf32>, vector<32x32xf32> -> vector<32x32xf32>
    %cst_53 = arith.constant 2.500000e+00 : f32
    %115 = vector.broadcast %cst_53 : f32 to vector<32x32xf32>
    %116 = arith.mulf %115, %114 : vector<32x32xf32>
    %117 = arith.addf %116, %28 : vector<32x32xf32>
    %118 = arith.mulf %113, %117 : vector<32x32xf32>
    %c31_i32_54 = arith.constant 31 : i32
    %119 = tpu.dynamic_rotate %118 by %c31_i32_54 dim 0 : vector<32x32xf32>, i32 -> vector<32x32xf32>
    %c1_i32_55 = arith.constant 1 : i32
    %120 = tpu.dynamic_rotate %118 by %c1_i32_55 dim 0 : vector<32x32xf32>, i32 -> vector<32x32xf32>
    %121 = arith.select %34, %119, %120 : vector<32x32xi1>, vector<32x32xf32>
    %122 = arith.addf %118, %121 : vector<32x32xf32>
    %c30_i32_56 = arith.constant 30 : i32
    %123 = tpu.dynamic_rotate %122 by %c30_i32_56 dim 0 : vector<32x32xf32>, i32 -> vector<32x32xf32>
    %c2_i32_57 = arith.constant 2 : i32
    %124 = tpu.dynamic_rotate %122 by %c2_i32_57 dim 0 : vector<32x32xf32>, i32 -> vector<32x32xf32>
    %125 = arith.select %38, %123, %124 : vector<32x32xi1>, vector<32x32xf32>
    %126 = arith.addf %122, %125 : vector<32x32xf32>
    %127 = arith.mulf %126, %113 : vector<32x32xf32>
    %128 = arith.subf %117, %127 : vector<32x32xf32>
    %cst_58 = arith.constant 1.000000e-01 : f32
    %129 = vector.broadcast %cst_58 : f32 to vector<32x32xf32>
    %130 = arith.mulf %129, %128 : vector<32x32xf32>
    %131 = arith.addf %113, %130 : vector<32x32xf32>
    %132 = arith.mulf %131, %131 : vector<32x32xf32>
    %c31_i32_59 = arith.constant 31 : i32
    %133 = tpu.dynamic_rotate %132 by %c31_i32_59 dim 0 : vector<32x32xf32>, i32 -> vector<32x32xf32>
    %c1_i32_60 = arith.constant 1 : i32
    %134 = tpu.dynamic_rotate %132 by %c1_i32_60 dim 0 : vector<32x32xf32>, i32 -> vector<32x32xf32>
    %135 = arith.select %34, %133, %134 : vector<32x32xi1>, vector<32x32xf32>
    %136 = arith.addf %132, %135 : vector<32x32xf32>
    %c30_i32_61 = arith.constant 30 : i32
    %137 = tpu.dynamic_rotate %136 by %c30_i32_61 dim 0 : vector<32x32xf32>, i32 -> vector<32x32xf32>
    %c2_i32_62 = arith.constant 2 : i32
    %138 = tpu.dynamic_rotate %136 by %c2_i32_62 dim 0 : vector<32x32xf32>, i32 -> vector<32x32xf32>
    %139 = arith.select %38, %137, %138 : vector<32x32xi1>, vector<32x32xf32>
    %140 = arith.addf %136, %139 : vector<32x32xf32>
    %cst_63 = arith.constant 9.99999997E-7 : f32
    %141 = vector.broadcast %cst_63 : f32 to vector<32x32xf32>
    %142 = arith.addf %140, %141 : vector<32x32xf32>
    %143 = math.rsqrt %142 : vector<32x32xf32>
    %144 = arith.mulf %131, %143 : vector<32x32xf32>
    %c3_i32_64 = arith.constant 3 : i32
    %cst_65 = arith.constant dense<0.000000e+00> : vector<32x32xf32>
    %145 = tpu.matmul %144, %1, %cst_65 {dimension_numbers = #tpu.dot_dimension_numbers<[1], [0], [0], [1], [0, 0, 1, 1], [], []>} : vector<32x32xf32>, vector<32x32xf32>, vector<32x32xf32> -> vector<32x32xf32>
    %cst_66 = arith.constant 2.500000e+00 : f32
    %146 = vector.broadcast %cst_66 : f32 to vector<32x32xf32>
    %147 = arith.mulf %146, %145 : vector<32x32xf32>
    %148 = arith.addf %147, %28 : vector<32x32xf32>
    %149 = arith.mulf %144, %148 : vector<32x32xf32>
    %c31_i32_67 = arith.constant 31 : i32
    %150 = tpu.dynamic_rotate %149 by %c31_i32_67 dim 0 : vector<32x32xf32>, i32 -> vector<32x32xf32>
    %c1_i32_68 = arith.constant 1 : i32
    %151 = tpu.dynamic_rotate %149 by %c1_i32_68 dim 0 : vector<32x32xf32>, i32 -> vector<32x32xf32>
    %152 = arith.select %34, %150, %151 : vector<32x32xi1>, vector<32x32xf32>
    %153 = arith.addf %149, %152 : vector<32x32xf32>
    %c30_i32_69 = arith.constant 30 : i32
    %154 = tpu.dynamic_rotate %153 by %c30_i32_69 dim 0 : vector<32x32xf32>, i32 -> vector<32x32xf32>
    %c2_i32_70 = arith.constant 2 : i32
    %155 = tpu.dynamic_rotate %153 by %c2_i32_70 dim 0 : vector<32x32xf32>, i32 -> vector<32x32xf32>
    %156 = arith.select %38, %154, %155 : vector<32x32xi1>, vector<32x32xf32>
    %157 = arith.addf %153, %156 : vector<32x32xf32>
    %158 = arith.mulf %157, %144 : vector<32x32xf32>
    %159 = arith.subf %148, %158 : vector<32x32xf32>
    %cst_71 = arith.constant 1.000000e-01 : f32
    %160 = vector.broadcast %cst_71 : f32 to vector<32x32xf32>
    %161 = arith.mulf %160, %159 : vector<32x32xf32>
    %162 = arith.addf %144, %161 : vector<32x32xf32>
    %163 = arith.mulf %162, %162 : vector<32x32xf32>
    %c31_i32_72 = arith.constant 31 : i32
    %164 = tpu.dynamic_rotate %163 by %c31_i32_72 dim 0 : vector<32x32xf32>, i32 -> vector<32x32xf32>
    %c1_i32_73 = arith.constant 1 : i32
    %165 = tpu.dynamic_rotate %163 by %c1_i32_73 dim 0 : vector<32x32xf32>, i32 -> vector<32x32xf32>
    %166 = arith.select %34, %164, %165 : vector<32x32xi1>, vector<32x32xf32>
    %167 = arith.addf %163, %166 : vector<32x32xf32>
    %c30_i32_74 = arith.constant 30 : i32
    %168 = tpu.dynamic_rotate %167 by %c30_i32_74 dim 0 : vector<32x32xf32>, i32 -> vector<32x32xf32>
    %c2_i32_75 = arith.constant 2 : i32
    %169 = tpu.dynamic_rotate %167 by %c2_i32_75 dim 0 : vector<32x32xf32>, i32 -> vector<32x32xf32>
    %170 = arith.select %38, %168, %169 : vector<32x32xi1>, vector<32x32xf32>
    %171 = arith.addf %167, %170 : vector<32x32xf32>
    %cst_76 = arith.constant 9.99999997E-7 : f32
    %172 = vector.broadcast %cst_76 : f32 to vector<32x32xf32>
    %173 = arith.addf %171, %172 : vector<32x32xf32>
    %174 = math.rsqrt %173 : vector<32x32xf32>
    %175 = arith.mulf %162, %174 : vector<32x32xf32>
    %c4_i32 = arith.constant 4 : i32
    %cst_77 = arith.constant dense<0.000000e+00> : vector<32x32xf32>
    %176 = tpu.matmul %175, %1, %cst_77 {dimension_numbers = #tpu.dot_dimension_numbers<[1], [0], [0], [1], [0, 0, 1, 1], [], []>} : vector<32x32xf32>, vector<32x32xf32>, vector<32x32xf32> -> vector<32x32xf32>
    %cst_78 = arith.constant 2.500000e+00 : f32
    %177 = vector.broadcast %cst_78 : f32 to vector<32x32xf32>
    %178 = arith.mulf %177, %176 : vector<32x32xf32>
    %179 = arith.addf %178, %28 : vector<32x32xf32>
    %180 = arith.mulf %175, %179 : vector<32x32xf32>
    %c31_i32_79 = arith.constant 31 : i32
    %181 = tpu.dynamic_rotate %180 by %c31_i32_79 dim 0 : vector<32x32xf32>, i32 -> vector<32x32xf32>
    %c1_i32_80 = arith.constant 1 : i32
    %182 = tpu.dynamic_rotate %180 by %c1_i32_80 dim 0 : vector<32x32xf32>, i32 -> vector<32x32xf32>
    %183 = arith.select %34, %181, %182 : vector<32x32xi1>, vector<32x32xf32>
    %184 = arith.addf %180, %183 : vector<32x32xf32>
    %c30_i32_81 = arith.constant 30 : i32
    %185 = tpu.dynamic_rotate %184 by %c30_i32_81 dim 0 : vector<32x32xf32>, i32 -> vector<32x32xf32>
    %c2_i32_82 = arith.constant 2 : i32
    %186 = tpu.dynamic_rotate %184 by %c2_i32_82 dim 0 : vector<32x32xf32>, i32 -> vector<32x32xf32>
    %187 = arith.select %38, %185, %186 : vector<32x32xi1>, vector<32x32xf32>
    %188 = arith.addf %184, %187 : vector<32x32xf32>
    %189 = arith.mulf %188, %175 : vector<32x32xf32>
    %190 = arith.subf %179, %189 : vector<32x32xf32>
    %cst_83 = arith.constant 1.000000e-01 : f32
    %191 = vector.broadcast %cst_83 : f32 to vector<32x32xf32>
    %192 = arith.mulf %191, %190 : vector<32x32xf32>
    %193 = arith.addf %175, %192 : vector<32x32xf32>
    %194 = arith.mulf %193, %193 : vector<32x32xf32>
    %c31_i32_84 = arith.constant 31 : i32
    %195 = tpu.dynamic_rotate %194 by %c31_i32_84 dim 0 : vector<32x32xf32>, i32 -> vector<32x32xf32>
    %c1_i32_85 = arith.constant 1 : i32
    %196 = tpu.dynamic_rotate %194 by %c1_i32_85 dim 0 : vector<32x32xf32>, i32 -> vector<32x32xf32>
    %197 = arith.select %34, %195, %196 : vector<32x32xi1>, vector<32x32xf32>
    %198 = arith.addf %194, %197 : vector<32x32xf32>
    %c30_i32_86 = arith.constant 30 : i32
    %199 = tpu.dynamic_rotate %198 by %c30_i32_86 dim 0 : vector<32x32xf32>, i32 -> vector<32x32xf32>
    %c2_i32_87 = arith.constant 2 : i32
    %200 = tpu.dynamic_rotate %198 by %c2_i32_87 dim 0 : vector<32x32xf32>, i32 -> vector<32x32xf32>
    %201 = arith.select %38, %199, %200 : vector<32x32xi1>, vector<32x32xf32>
    %202 = arith.addf %198, %201 : vector<32x32xf32>
    %cst_88 = arith.constant 9.99999997E-7 : f32
    %203 = vector.broadcast %cst_88 : f32 to vector<32x32xf32>
    %204 = arith.addf %202, %203 : vector<32x32xf32>
    %205 = math.rsqrt %204 : vector<32x32xf32>
    %206 = arith.mulf %193, %205 : vector<32x32xf32>
    %c5_i32 = arith.constant 5 : i32
    %cst_89 = arith.constant dense<0.000000e+00> : vector<32x32xf32>
    %207 = tpu.matmul %206, %1, %cst_89 {dimension_numbers = #tpu.dot_dimension_numbers<[1], [0], [0], [1], [0, 0, 1, 1], [], []>} : vector<32x32xf32>, vector<32x32xf32>, vector<32x32xf32> -> vector<32x32xf32>
    %cst_90 = arith.constant 2.500000e+00 : f32
    %208 = vector.broadcast %cst_90 : f32 to vector<32x32xf32>
    %209 = arith.mulf %208, %207 : vector<32x32xf32>
    %210 = arith.addf %209, %28 : vector<32x32xf32>
    %211 = arith.mulf %206, %210 : vector<32x32xf32>
    %c31_i32_91 = arith.constant 31 : i32
    %212 = tpu.dynamic_rotate %211 by %c31_i32_91 dim 0 : vector<32x32xf32>, i32 -> vector<32x32xf32>
    %c1_i32_92 = arith.constant 1 : i32
    %213 = tpu.dynamic_rotate %211 by %c1_i32_92 dim 0 : vector<32x32xf32>, i32 -> vector<32x32xf32>
    %214 = arith.select %34, %212, %213 : vector<32x32xi1>, vector<32x32xf32>
    %215 = arith.addf %211, %214 : vector<32x32xf32>
    %c30_i32_93 = arith.constant 30 : i32
    %216 = tpu.dynamic_rotate %215 by %c30_i32_93 dim 0 : vector<32x32xf32>, i32 -> vector<32x32xf32>
    %c2_i32_94 = arith.constant 2 : i32
    %217 = tpu.dynamic_rotate %215 by %c2_i32_94 dim 0 : vector<32x32xf32>, i32 -> vector<32x32xf32>
    %218 = arith.select %38, %216, %217 : vector<32x32xi1>, vector<32x32xf32>
    %219 = arith.addf %215, %218 : vector<32x32xf32>
    %220 = arith.mulf %219, %206 : vector<32x32xf32>
    %221 = arith.subf %210, %220 : vector<32x32xf32>
    %cst_95 = arith.constant 1.000000e-01 : f32
    %222 = vector.broadcast %cst_95 : f32 to vector<32x32xf32>
    %223 = arith.mulf %222, %221 : vector<32x32xf32>
    %224 = arith.addf %206, %223 : vector<32x32xf32>
    %225 = arith.mulf %224, %224 : vector<32x32xf32>
    %c31_i32_96 = arith.constant 31 : i32
    %226 = tpu.dynamic_rotate %225 by %c31_i32_96 dim 0 : vector<32x32xf32>, i32 -> vector<32x32xf32>
    %c1_i32_97 = arith.constant 1 : i32
    %227 = tpu.dynamic_rotate %225 by %c1_i32_97 dim 0 : vector<32x32xf32>, i32 -> vector<32x32xf32>
    %228 = arith.select %34, %226, %227 : vector<32x32xi1>, vector<32x32xf32>
    %229 = arith.addf %225, %228 : vector<32x32xf32>
    %c30_i32_98 = arith.constant 30 : i32
    %230 = tpu.dynamic_rotate %229 by %c30_i32_98 dim 0 : vector<32x32xf32>, i32 -> vector<32x32xf32>
    %c2_i32_99 = arith.constant 2 : i32
    %231 = tpu.dynamic_rotate %229 by %c2_i32_99 dim 0 : vector<32x32xf32>, i32 -> vector<32x32xf32>
    %232 = arith.select %38, %230, %231 : vector<32x32xi1>, vector<32x32xf32>
    %233 = arith.addf %229, %232 : vector<32x32xf32>
    %cst_100 = arith.constant 9.99999997E-7 : f32
    %234 = vector.broadcast %cst_100 : f32 to vector<32x32xf32>
    %235 = arith.addf %233, %234 : vector<32x32xf32>
    %236 = math.rsqrt %235 : vector<32x32xf32>
    %237 = arith.mulf %224, %236 : vector<32x32xf32>
    %c6_i32 = arith.constant 6 : i32
    %cst_101 = arith.constant dense<0.000000e+00> : vector<32x32xf32>
    %238 = tpu.matmul %237, %1, %cst_101 {dimension_numbers = #tpu.dot_dimension_numbers<[1], [0], [0], [1], [0, 0, 1, 1], [], []>} : vector<32x32xf32>, vector<32x32xf32>, vector<32x32xf32> -> vector<32x32xf32>
    %cst_102 = arith.constant 2.500000e+00 : f32
    %239 = vector.broadcast %cst_102 : f32 to vector<32x32xf32>
    %240 = arith.mulf %239, %238 : vector<32x32xf32>
    %241 = arith.addf %240, %28 : vector<32x32xf32>
    %242 = arith.mulf %237, %241 : vector<32x32xf32>
    %c31_i32_103 = arith.constant 31 : i32
    %243 = tpu.dynamic_rotate %242 by %c31_i32_103 dim 0 : vector<32x32xf32>, i32 -> vector<32x32xf32>
    %c1_i32_104 = arith.constant 1 : i32
    %244 = tpu.dynamic_rotate %242 by %c1_i32_104 dim 0 : vector<32x32xf32>, i32 -> vector<32x32xf32>
    %245 = arith.select %34, %243, %244 : vector<32x32xi1>, vector<32x32xf32>
    %246 = arith.addf %242, %245 : vector<32x32xf32>
    %c30_i32_105 = arith.constant 30 : i32
    %247 = tpu.dynamic_rotate %246 by %c30_i32_105 dim 0 : vector<32x32xf32>, i32 -> vector<32x32xf32>
    %c2_i32_106 = arith.constant 2 : i32
    %248 = tpu.dynamic_rotate %246 by %c2_i32_106 dim 0 : vector<32x32xf32>, i32 -> vector<32x32xf32>
    %249 = arith.select %38, %247, %248 : vector<32x32xi1>, vector<32x32xf32>
    %250 = arith.addf %246, %249 : vector<32x32xf32>
    %251 = arith.mulf %250, %237 : vector<32x32xf32>
    %252 = arith.subf %241, %251 : vector<32x32xf32>
    %cst_107 = arith.constant 1.000000e-01 : f32
    %253 = vector.broadcast %cst_107 : f32 to vector<32x32xf32>
    %254 = arith.mulf %253, %252 : vector<32x32xf32>
    %255 = arith.addf %237, %254 : vector<32x32xf32>
    %256 = arith.mulf %255, %255 : vector<32x32xf32>
    %c31_i32_108 = arith.constant 31 : i32
    %257 = tpu.dynamic_rotate %256 by %c31_i32_108 dim 0 : vector<32x32xf32>, i32 -> vector<32x32xf32>
    %c1_i32_109 = arith.constant 1 : i32
    %258 = tpu.dynamic_rotate %256 by %c1_i32_109 dim 0 : vector<32x32xf32>, i32 -> vector<32x32xf32>
    %259 = arith.select %34, %257, %258 : vector<32x32xi1>, vector<32x32xf32>
    %260 = arith.addf %256, %259 : vector<32x32xf32>
    %c30_i32_110 = arith.constant 30 : i32
    %261 = tpu.dynamic_rotate %260 by %c30_i32_110 dim 0 : vector<32x32xf32>, i32 -> vector<32x32xf32>
    %c2_i32_111 = arith.constant 2 : i32
    %262 = tpu.dynamic_rotate %260 by %c2_i32_111 dim 0 : vector<32x32xf32>, i32 -> vector<32x32xf32>
    %263 = arith.select %38, %261, %262 : vector<32x32xi1>, vector<32x32xf32>
    %264 = arith.addf %260, %263 : vector<32x32xf32>
    %cst_112 = arith.constant 9.99999997E-7 : f32
    %265 = vector.broadcast %cst_112 : f32 to vector<32x32xf32>
    %266 = arith.addf %264, %265 : vector<32x32xf32>
    %267 = math.rsqrt %266 : vector<32x32xf32>
    %268 = arith.mulf %255, %267 : vector<32x32xf32>
    %c7_i32 = arith.constant 7 : i32
    %cst_113 = arith.constant dense<0.000000e+00> : vector<32x32xf32>
    %269 = tpu.matmul %268, %1, %cst_113 {dimension_numbers = #tpu.dot_dimension_numbers<[1], [0], [0], [1], [0, 0, 1, 1], [], []>} : vector<32x32xf32>, vector<32x32xf32>, vector<32x32xf32> -> vector<32x32xf32>
    %cst_114 = arith.constant 2.500000e+00 : f32
    %270 = vector.broadcast %cst_114 : f32 to vector<32x32xf32>
    %271 = arith.mulf %270, %269 : vector<32x32xf32>
    %272 = arith.addf %271, %28 : vector<32x32xf32>
    %273 = arith.mulf %268, %272 : vector<32x32xf32>
    %c31_i32_115 = arith.constant 31 : i32
    %274 = tpu.dynamic_rotate %273 by %c31_i32_115 dim 0 : vector<32x32xf32>, i32 -> vector<32x32xf32>
    %c1_i32_116 = arith.constant 1 : i32
    %275 = tpu.dynamic_rotate %273 by %c1_i32_116 dim 0 : vector<32x32xf32>, i32 -> vector<32x32xf32>
    %276 = arith.select %34, %274, %275 : vector<32x32xi1>, vector<32x32xf32>
    %277 = arith.addf %273, %276 : vector<32x32xf32>
    %c30_i32_117 = arith.constant 30 : i32
    %278 = tpu.dynamic_rotate %277 by %c30_i32_117 dim 0 : vector<32x32xf32>, i32 -> vector<32x32xf32>
    %c2_i32_118 = arith.constant 2 : i32
    %279 = tpu.dynamic_rotate %277 by %c2_i32_118 dim 0 : vector<32x32xf32>, i32 -> vector<32x32xf32>
    %280 = arith.select %38, %278, %279 : vector<32x32xi1>, vector<32x32xf32>
    %281 = arith.addf %277, %280 : vector<32x32xf32>
    %282 = arith.mulf %281, %268 : vector<32x32xf32>
    %283 = arith.subf %272, %282 : vector<32x32xf32>
    %cst_119 = arith.constant 1.000000e-01 : f32
    %284 = vector.broadcast %cst_119 : f32 to vector<32x32xf32>
    %285 = arith.mulf %284, %283 : vector<32x32xf32>
    %286 = arith.addf %268, %285 : vector<32x32xf32>
    %287 = arith.mulf %286, %286 : vector<32x32xf32>
    %c31_i32_120 = arith.constant 31 : i32
    %288 = tpu.dynamic_rotate %287 by %c31_i32_120 dim 0 : vector<32x32xf32>, i32 -> vector<32x32xf32>
    %c1_i32_121 = arith.constant 1 : i32
    %289 = tpu.dynamic_rotate %287 by %c1_i32_121 dim 0 : vector<32x32xf32>, i32 -> vector<32x32xf32>
    %290 = arith.select %34, %288, %289 : vector<32x32xi1>, vector<32x32xf32>
    %291 = arith.addf %287, %290 : vector<32x32xf32>
    %c30_i32_122 = arith.constant 30 : i32
    %292 = tpu.dynamic_rotate %291 by %c30_i32_122 dim 0 : vector<32x32xf32>, i32 -> vector<32x32xf32>
    %c2_i32_123 = arith.constant 2 : i32
    %293 = tpu.dynamic_rotate %291 by %c2_i32_123 dim 0 : vector<32x32xf32>, i32 -> vector<32x32xf32>
    %294 = arith.select %38, %292, %293 : vector<32x32xi1>, vector<32x32xf32>
    %295 = arith.addf %291, %294 : vector<32x32xf32>
    %cst_124 = arith.constant 9.99999997E-7 : f32
    %296 = vector.broadcast %cst_124 : f32 to vector<32x32xf32>
    %297 = arith.addf %295, %296 : vector<32x32xf32>
    %298 = math.rsqrt %297 : vector<32x32xf32>
    %299 = arith.mulf %286, %298 : vector<32x32xf32>
    %c0_125 = arith.constant 0 : index
    %c0_126 = arith.constant 0 : index
    %300 = vector.load %arg7[%c0_125, %c0_126] : memref<128x32xf32, #tpu.memory_space<vmem>>, vector<128x32xf32>
    %c0_127 = arith.constant 0 : index
    %c0_128 = arith.constant 0 : index
    %301 = vector.load %arg8[%c0_127, %c0_128] : memref<128x1xf32, #tpu.memory_space<vmem>>, vector<128x1xf32>
    %c0_129 = arith.constant 0 : index
    %c0_130 = arith.constant 0 : index
    %302 = vector.load %arg9[%c0_129, %c0_130] : memref<4x128xf32, #tpu.memory_space<vmem>>, vector<4x128xf32>
    %c0_131 = arith.constant 0 : index
    %c0_132 = arith.constant 0 : index
    %303 = vector.load %arg10[%c0_131, %c0_132] : memref<4x1xf32, #tpu.memory_space<vmem>>, vector<4x1xf32>
    %304 = tpu.iota {dimensions = array<i32: 1>} : vector<32x32xi32>
    %305 = tpu.iota {dimensions = array<i32: 1>} : vector<4x2xi32>
    %cst_133 = arith.constant 0.000000e+00 : f32
    %306 = vector.broadcast %cst_133 : f32 to vector<4x2xf32>
    %c0_i32_134 = arith.constant 0 : i32
    %307 = vector.broadcast %c0_i32_134 : i32 to vector<32x32xi32>
    %308 = arith.cmpi sge, %304, %307 : vector<32x32xi32>
    %c16_i32 = arith.constant 16 : i32
    %309 = vector.broadcast %c16_i32 : i32 to vector<32x32xi32>
    %310 = arith.cmpi slt, %304, %309 : vector<32x32xi32>
    %311 = arith.andi %308, %310 : vector<32x32xi1>
    %cst_135 = arith.constant -3.40282347E+38 : f32
    %312 = vector.broadcast %cst_135 : f32 to vector<32x32xf32>
    %313 = arith.select %311, %299, %312 : vector<32x32xi1>, vector<32x32xf32>
    %cst_136 = arith.constant dense<0xFF800000> : vector<32xf32>
    %314 = vector.multi_reduction <maximumf>, %313, %cst_136 [1] : vector<32x32xf32> to vector<32xf32>
    %315 = vector.shape_cast %314 : vector<32xf32> to vector<32x1xf32>
    %cst_137 = arith.constant dense<0.000000e+00> : vector<128x1xf32>
    %316 = tpu.matmul %300, %315, %cst_137 {dimension_numbers = #tpu.dot_dimension_numbers<[1], [0], [0], [1], [0, 0, 1, 1], [], []>} : vector<128x32xf32>, vector<32x1xf32>, vector<128x1xf32> -> vector<128x1xf32>
    %317 = arith.addf %316, %301 : vector<128x1xf32>
    %cst_138 = arith.constant 0.000000e+00 : f32
    %318 = vector.broadcast %cst_138 : f32 to vector<128x1xf32>
    %319 = arith.maximumf %317, %318 : vector<128x1xf32>
    %cst_139 = arith.constant dense<0.000000e+00> : vector<4x1xf32>
    %320 = tpu.matmul %302, %319, %cst_139 {dimension_numbers = #tpu.dot_dimension_numbers<[1], [0], [0], [1], [0, 0, 1, 1], [], []>} : vector<4x128xf32>, vector<128x1xf32>, vector<4x1xf32> -> vector<4x1xf32>
    %321 = arith.addf %320, %303 : vector<4x1xf32>
    %c0_i32_140 = arith.constant 0 : i32
    %322 = vector.broadcast %c0_i32_140 : i32 to vector<4x2xi32>
    %323 = arith.cmpi eq, %305, %322 : vector<4x2xi32>
    %cst_141 = arith.constant 0.000000e+00 : f32
    %324 = vector.shape_cast %321 : vector<4x1xf32> to vector<4x1xf32>
    %325 = vector.broadcast %324 : vector<4x1xf32> to vector<4x2xf32>
    %326 = vector.broadcast %cst_141 : f32 to vector<4x2xf32>
    %327 = arith.select %323, %325, %326 : vector<4x2xi1>, vector<4x2xf32>
    %328 = arith.addf %306, %327 : vector<4x2xf32>
    %c16_i32_142 = arith.constant 16 : i32
    %329 = vector.broadcast %c16_i32_142 : i32 to vector<32x32xi32>
    %330 = arith.cmpi sge, %304, %329 : vector<32x32xi32>
    %c32_i32 = arith.constant 32 : i32
    %331 = vector.broadcast %c32_i32 : i32 to vector<32x32xi32>
    %332 = arith.cmpi slt, %304, %331 : vector<32x32xi32>
    %333 = arith.andi %330, %332 : vector<32x32xi1>
    %cst_143 = arith.constant -3.40282347E+38 : f32
    %334 = vector.broadcast %cst_143 : f32 to vector<32x32xf32>
    %335 = arith.select %333, %299, %334 : vector<32x32xi1>, vector<32x32xf32>
    %cst_144 = arith.constant dense<0xFF800000> : vector<32xf32>
    %336 = vector.multi_reduction <maximumf>, %335, %cst_144 [1] : vector<32x32xf32> to vector<32xf32>
    %337 = vector.shape_cast %336 : vector<32xf32> to vector<32x1xf32>
    %cst_145 = arith.constant dense<0.000000e+00> : vector<128x1xf32>
    %338 = tpu.matmul %300, %337, %cst_145 {dimension_numbers = #tpu.dot_dimension_numbers<[1], [0], [0], [1], [0, 0, 1, 1], [], []>} : vector<128x32xf32>, vector<32x1xf32>, vector<128x1xf32> -> vector<128x1xf32>
    %339 = arith.addf %338, %301 : vector<128x1xf32>
    %cst_146 = arith.constant 0.000000e+00 : f32
    %340 = vector.broadcast %cst_146 : f32 to vector<128x1xf32>
    %341 = arith.maximumf %339, %340 : vector<128x1xf32>
    %cst_147 = arith.constant dense<0.000000e+00> : vector<4x1xf32>
    %342 = tpu.matmul %302, %341, %cst_147 {dimension_numbers = #tpu.dot_dimension_numbers<[1], [0], [0], [1], [0, 0, 1, 1], [], []>} : vector<4x128xf32>, vector<128x1xf32>, vector<4x1xf32> -> vector<4x1xf32>
    %343 = arith.addf %342, %303 : vector<4x1xf32>
    %c1_i32_148 = arith.constant 1 : i32
    %344 = vector.broadcast %c1_i32_148 : i32 to vector<4x2xi32>
    %345 = arith.cmpi eq, %305, %344 : vector<4x2xi32>
    %cst_149 = arith.constant 0.000000e+00 : f32
    %346 = vector.shape_cast %343 : vector<4x1xf32> to vector<4x1xf32>
    %347 = vector.broadcast %346 : vector<4x1xf32> to vector<4x2xf32>
    %348 = vector.broadcast %cst_149 : f32 to vector<4x2xf32>
    %349 = arith.select %345, %347, %348 : vector<4x2xi1>, vector<4x2xf32>
    %350 = arith.addf %328, %349 : vector<4x2xf32>
    %c0_150 = arith.constant 0 : index
    %c0_151 = arith.constant 0 : index
    %351 = vector.load %arg11[%c0_150, %c0_151] : memref<4x2xf32, #tpu.memory_space<vmem>>, vector<4x2xf32>
    tpu.vector_store %arg11[%c0_150, %c0_151], %350 {strides = array<i32>} : memref<4x2xf32, #tpu.memory_space<vmem>>, vector<4x2xf32>,
    return
  }
}

</mosaic_0001>

<llo_original>
// kernel: _lambda_.1
$region0: #{_lambda_.1}
  #allocation0 [shape = 'u32[]', space=smem, size = 0x4, offset = 0x4, fixed_abs, tag = 'smem constant byte address 0x4 - core index']
  #allocation1 [shape = 'u32[144,128]{1,0:T(1,128)}', space=vmem, size = 0x12000, scoped, tag = 'internal scratch']
  %s0 = inlined_call_operand.vmem [shape: f32[32,32], index: 0, kind: input, shape index: {}]
  %s1 = inlined_call_operand.vmem [shape: f32[32,32], index: 1, kind: input, shape index: {}]
  %s2 = inlined_call_operand.vmem [shape: f32[64,64], index: 2, kind: input, shape index: {}]
  %s3 = inlined_call_operand.vmem [shape: f32[64,1], index: 3, kind: input, shape index: {}]
  %s4 = inlined_call_operand.vmem [shape: f32[32,32], index: 4, kind: input, shape index: {}]
  %s5 = inlined_call_operand.vmem [shape: f32[32,1], index: 5, kind: input, shape index: {}]
  %s6 = inlined_call_operand.vmem [shape: f32[32,32], index: 6, kind: input, shape index: {}]
  %s7 = inlined_call_operand.vmem [shape: f32[128,32], index: 7, kind: input, shape index: {}]
  %s8 = inlined_call_operand.vmem [shape: f32[128,1], index: 8, kind: input, shape index: {}]
  %s9 = inlined_call_operand.vmem [shape: f32[4,128], index: 9, kind: input, shape index: {}]
  %s10 = inlined_call_operand.vmem [shape: f32[4,1], index: 10, kind: input, shape index: {}]
  %s11 = inlined_call_operand.vmem [shape: f32[4,2], index: 11, kind: output, shape index: {0}]
  %s12 = inlined_call_operand.vmem [shape: f32[32,32], index: 12, kind: output, shape index: {1}]
  %s13 = inlined_call_operand.vmem [shape: f32[32,32], index: 13, kind: output, shape index: {2}]
  %14 = xla_tuple %s11, %s12, %s13
  %s15 = sld [smem:[#allocation0]]
  $region70: #{_lambda_.1} parent=0
    _
  %s17 = ssub.s32 1, %s15
  %s18 = scalar_select 0, %s17, %s15
  // Predicated region
  $region2: #{_lambda_.1} parent=0 // pred_check
    _
  $region3: #{_lambda_.1} parent=0 // pred_check_branch
    %20 = sbr.rel (0) target = $region5
  $region4: #{_lambda_.1} parent=0 // pred_region
    _
  $region5: #{_lambda_.1} parent=0 // pred_fallthru
    _
  // Predicated region
  $region6: #{_lambda_.1} parent=0 // pred_check
    _
  $region7: #{_lambda_.1} parent=0 // pred_check_branch
    %22 = sbr.rel (0) target = $region9
  $region8: #{_lambda_.1} parent=0 // pred_region
    _
  $region9: #{_lambda_.1} parent=0 // pred_fallthru
    _
  // Predicated region
  $region10: #{_lambda_.1} parent=0 // pred_check
    _
  $region11: #{_lambda_.1} parent=0 // pred_check_branch
    %24 = sbr.rel (0) target = $region13
  $region12: #{_lambda_.1} parent=0 // pred_region
    _
  $region13: #{_lambda_.1} parent=0 // pred_fallthru
    _
  // Predicated region
  $region14: #{_lambda_.1} parent=0 // pred_check
    _
  $region15: #{_lambda_.1} parent=0 // pred_check_branch
    %26 = sbr.rel (0) target = $region17
  $region16: #{_lambda_.1} parent=0 // pred_region
    _
  $region17: #{_lambda_.1} parent=0 // pred_fallthru
    _
  // Predicated region
  $region18: #{_lambda_.1} parent=0 // pred_check
    _
  $region19: #{_lambda_.1} parent=0 // pred_check_branch
    %28 = sbr.rel (0) target = $region21
  $region20: #{_lambda_.1} parent=0 // pred_region
    _
  $region21: #{_lambda_.1} parent=0 // pred_fallthru
    _
  // Predicated region
  $region22: #{_lambda_.1} parent=0 // pred_check
    _
  $region23: #{_lambda_.1} parent=0 // pred_check_branch
    %30 = sbr.rel (0) target = $region25
  $region24: #{_lambda_.1} parent=0 // pred_region
    _
  $region25: #{_lambda_.1} parent=0 // pred_fallthru
    _
  // Predicated region
  $region26: #{_lambda_.1} parent=0 // pred_check
    _
  $region27: #{_lambda_.1} parent=0 // pred_check_branch
    %32 = sbr.rel (0) target = $region29
  $region28: #{_lambda_.1} parent=0 // pred_region
    _
  $region29: #{_lambda_.1} parent=0 // pred_fallthru
    _
  // Predicated region
  $region30: #{_lambda_.1} parent=0 // pred_check
    _
  $region31: #{_lambda_.1} parent=0 // pred_check_branch
    %34 = sbr.rel (0) target = $region33
  $region32: #{_lambda_.1} parent=0 // pred_region
    _
  $region33: #{_lambda_.1} parent=0 // pred_fallthru
    _
  // Predicated region
  $region34: #{_lambda_.1} parent=0 // pred_check
    _
  $region35: #{_lambda_.1} parent=0 // pred_check_branch
    %36 = sbr.rel (0) target = $region37
  $region36: #{_lambda_.1} parent=0 // pred_region
    _
  $region37: #{_lambda_.1} parent=0 // pred_fallthru
    _
  // Predicated region
  $region38: #{_lambda_.1} parent=0 // pred_check
    _
  $region39: #{_lambda_.1} parent=0 // pred_check_branch
    %38 = sbr.rel (0) target = $region41
  $region40: #{_lambda_.1} parent=0 // pred_region
    _
  $region41: #{_lambda_.1} parent=0 // pred_fallthru
    _
  // Predicated region
  $region42: #{_lambda_.1} parent=0 // pred_check
    _
  $region43: #{_lambda_.1} parent=0 // pred_check_branch
    %40 = sbr.rel (0) target = $region45
  $region44: #{_lambda_.1} parent=0 // pred_region
    _
  $region45: #{_lambda_.1} parent=0 // pred_fallthru
    _
  %v41 = vld [vmem:[%s0] sm:$0xff]
  %v42 = vld [vmem:[%s0 + $0x8] sm:$0xff]
  %v43 = vld [vmem:[%s0 + $0x10] sm:$0xff]
  %v44 = vld [vmem:[%s0 + $0x18] sm:$0xff]
  %v45 = vld [vmem:[%s1] sm:$0xff]
  %v46 = vld [vmem:[%s1 + $0x8] sm:$0xff]
  %v47 = vld [vmem:[%s1 + $0x10] sm:$0xff]
  %v48 = vld [vmem:[%s1 + $0x18] sm:$0xff]
  %v49 = vld [vmem:[%s6] sm:$0xff]
  %v50 = vld [vmem:[%s6 + $0x8] sm:$0xff]
  %v51 = vld [vmem:[%s6 + $0x10] sm:$0xff]
  %v52 = vld [vmem:[%s6 + $0x18] sm:$0xff]
  %vm53 = vcmask 261120
  %v55 = vsel %vm53, %v41, 0
  %v58 = vsel %vm53, %v42, 0
  %v61 = vsel %vm53, %v43, 0
  %v64 = vsel %vm53, %v44, 0
  %66 = vmatprep.subr.mxu0 0.0
  %67 = vmatpush1.msra.mxu0 %v45
  %68 = vmatprep.subr.mxu0 0.0
  %69 = vmatpush1.msra.mxu0 %v46
  %70 = vmatprep.subr.mxu0 0.0
  %71 = vmatpush1.msra.mxu0 %v47
  %72 = vmatprep.subr.mxu0 0.0
  %73 = vmatpush1.msra.mxu0 %v48
  %74 = vmatprep.subr.mxu0 0.0
  %75 = vmatpush1.msra.mxu0 0.0
  %76 = vmatprep.subr.mxu0 0.0
  %77 = vmatpush1.msra.mxu0 0.0
  %78 = vmatprep.subr.mxu0 0.0
  %79 = vmatpush1.msra.mxu0 0.0
  %80 = vmatprep.subr.mxu0 0.0
  %81 = vmatpush1.msra.mxu0 0.0
  %82 = vmatprep.subr.mxu0 0.0
  %83 = vmatpush1.msra.mxu0 0.0
  %84 = vmatprep.subr.mxu0 0.0
  %85 = vmatpush1.msra.mxu0 0.0
  %86 = vmatprep.subr.mxu0 0.0
  %87 = vmatpush1.msra.mxu0 0.0
  %88 = vmatprep.subr.mxu0 0.0
  %89 = vmatpush1.msra.mxu0 0.0
  %90 = vmatprep.subr.mxu0 0.0
  %91 = vmatpush1.msra.mxu0 0.0
  %92 = vmatprep.subr.mxu0 0.0
  %93 = vmatpush1.msra.mxu0 0.0
  %94 = vmatprep.subr.mxu0 0.0
  %95 = vmatpush1.msra.mxu0 0.0
  %96 = vmatprep.subr.mxu0 0.0
  %97 = vmatpush1.msra.mxu0 0.0
  %98 = vmatprep.subr.mxu0 0.0
  %99 = vmatpush1.msra.mxu0 0.0
  %100 = vmatprep.subr.mxu0 0.0
  %101 = vmatpush1.msra.mxu0 0.0
  %102 = vmatprep.subr.mxu0 0.0
  %103 = vmatpush1.msra.mxu0 0.0
  %104 = vmatprep.subr.mxu0 0.0
  %105 = vmatpush1.msra.mxu0 0.0
  %106 = vmatprep.subr.mxu0 0.0
  %107 = vmatpush1.msra.mxu0 0.0
  %108 = vmatprep.subr.mxu0 0.0
  %109 = vmatpush1.msra.mxu0 0.0
  %110 = vmatprep.subr.mxu0 0.0
  %111 = vmatpush1.msra.mxu0 0.0
  %112 = vmatprep.subr.mxu0 0.0
  %113 = vmatpush1.msra.mxu0 0.0
  %114 = vmatprep.subr.mxu0 0.0
  %115 = vmatpush1.msra.mxu0 0.0
  %116 = vmatprep.subr.mxu0 0.0
  %117 = vmatpush1.msra.mxu0 0.0
  %118 = vmatprep.subr.mxu0 0.0
  %119 = vmatpush1.msra.mxu0 0.0
  %120 = vmatprep.subr.mxu0 0.0
  %121 = vmatpush1.msra.mxu0 0.0
  %122 = vmatprep.subr.mxu0 0.0
  %123 = vmatpush1.msra.mxu0 0.0
  %124 = vmatprep.subr.mxu0 0.0
  %125 = vmatpush1.msra.mxu0 0.0
  %126 = vmatprep.subr.mxu0 0.0
  %127 = vmatpush1.msra.mxu0 0.0
  %128 = vmatprep.subr.mxu0 0.0
  %129 = vmatpush1.msra.mxu0 0.0
  %130 = vmatprep.mubr.f32.mxu0 0.0
  %131 = vmatmul.mubr.f32.gmra.mrb[0].mxu0 %v55
  %v132 = vpop.f32.mrb[0].mxu0
  %v133 = vadd.f32 0.0, %v132
  %v134 = vpop.f32.mrb[0].mxu0
  %135 = vmatprep.mubr.f32.mxu0 0.0
  %136 = vmatmul.mubr.f32.gmra.mrb[0].mxu0 %v58
  %v137 = vpop.f32.mrb[0].mxu0
  %v138 = vadd.f32 0.0, %v137
  %v139 = vpop.f32.mrb[0].mxu0
  %140 = vmatprep.mubr.f32.mxu0 0.0
  %141 = vmatmul.mubr.f32.gmra.mrb[0].mxu0 %v61
  %v142 = vpop.f32.mrb[0].mxu0
  %v143 = vadd.f32 0.0, %v142
  %v144 = vpop.f32.mrb[0].mxu0
  %145 = vmatprep.mubr.f32.mxu0 0.0
  %146 = vmatmul.mubr.f32.gmra.mrb[0].mxu0 %v64
  %v147 = vpop.f32.mrb[0].mxu0
  %v148 = vadd.f32 0.0, %v147
  %v149 = vpop.f32.mrb[0].mxu0
  %150 = vdwg.mxu0
  %v151 = vand.u32 2147483647, %v133
  %v152 = vand.u32 2147483647, %v138
  %v153 = vand.u32 2147483647, %v143
  %v154 = vand.u32 2147483647, %v148
  %v156 = vsel %vm53, %v151, 0
  %v159 = vsel %vm53, %v152, 0
  %v162 = vsel %vm53, %v153, 0
  %v165 = vsel %vm53, %v154, 0
  %167 = vmatprep.subr.mxu0 0.0
  %168 = vmatpush1.msra.mxu0 %v45
  %169 = vmatprep.subr.mxu0 0.0
  %170 = vmatpush1.msra.mxu0 %v46
  %171 = vmatprep.subr.mxu0 0.0
  %172 = vmatpush1.msra.mxu0 %v47
  %173 = vmatprep.subr.mxu0 0.0
  %174 = vmatpush1.msra.mxu0 %v48
  %175 = vmatprep.subr.mxu0 0.0
  %176 = vmatpush1.msra.mxu0 0.0
  %177 = vmatprep.subr.mxu0 0.0
  %178 = vmatpush1.msra.mxu0 0.0
  %179 = vmatprep.subr.mxu0 0.0
  %180 = vmatpush1.msra.mxu0 0.0
  %181 = vmatprep.subr.mxu0 0.0
  %182 = vmatpush1.msra.mxu0 0.0
  %183 = vmatprep.subr.mxu0 0.0
  %184 = vmatpush1.msra.mxu0 0.0
  %185 = vmatprep.subr.mxu0 0.0
  %186 = vmatpush1.msra.mxu0 0.0
  %187 = vmatprep.subr.mxu0 0.0
  %188 = vmatpush1.msra.mxu0 0.0
  %189 = vmatprep.subr.mxu0 0.0
  %190 = vmatpush1.msra.mxu0 0.0
  %191 = vmatprep.subr.mxu0 0.0
  %192 = vmatpush1.msra.mxu0 0.0
  %193 = vmatprep.subr.mxu0 0.0
  %194 = vmatpush1.msra.mxu0 0.0
  %195 = vmatprep.subr.mxu0 0.0
  %196 = vmatpush1.msra.mxu0 0.0
  %197 = vmatprep.subr.mxu0 0.0
  %198 = vmatpush1.msra.mxu0 0.0
  %199 = vmatprep.subr.mxu0 0.0
  %200 = vmatpush1.msra.mxu0 0.0
  %201 = vmatprep.subr.mxu0 0.0
  %202 = vmatpush1.msra.mxu0 0.0
  %203 = vmatprep.subr.mxu0 0.0
  %204 = vmatpush1.msra.mxu0 0.0
  %205 = vmatprep.subr.mxu0 0.0
  %206 = vmatpush1.msra.mxu0 0.0
  %207 = vmatprep.subr.mxu0 0.0
  %208 = vmatpush1.msra.mxu0 0.0
  %209 = vmatprep.subr.mxu0 0.0
  %210 = vmatpush1.msra.mxu0 0.0
  %211 = vmatprep.subr.mxu0 0.0
  %212 = vmatpush1.msra.mxu0 0.0
  %213 = vmatprep.subr.mxu0 0.0
  %214 = vmatpush1.msra.mxu0 0.0
  %215 = vmatprep.subr.mxu0 0.0
  %216 = vmatpush1.msra.mxu0 0.0
  %217 = vmatprep.subr.mxu0 0.0
  %218 = vmatpush1.msra.mxu0 0.0
  %219 = vmatprep.subr.mxu0 0.0
  %220 = vmatpush1.msra.mxu0 0.0
  %221 = vmatprep.subr.mxu0 0.0
  %222 = vmatpush1.msra.mxu0 0.0
  %223 = vmatprep.subr.mxu0 0.0
  %224 = vmatpush1.msra.mxu0 0.0
  %225 = vmatprep.subr.mxu0 0.0
  %226 = vmatpush1.msra.mxu0 0.0
  %227 = vmatprep.subr.mxu0 0.0
  %228 = vmatpush1.msra.mxu0 0.0
  %229 = vmatprep.subr.mxu0 0.0
  %230 = vmatpush1.msra.mxu0 0.0
  %231 = vmatprep.mubr.f32.mxu0 0.0
  %232 = vmatmul.mubr.f32.gmra.mrb[0].mxu0 %v156
  %v233 = vpop.f32.mrb[0].mxu0
  %v234 = vadd.f32 0.0, %v233
  %v235 = vpop.f32.mrb[0].mxu0
  %236 = vmatprep.mubr.f32.mxu0 0.0
  %237 = vmatmul.mubr.f32.gmra.mrb[0].mxu0 %v159
  %v238 = vpop.f32.mrb[0].mxu0
  %v239 = vadd.f32 0.0, %v238
  %v240 = vpop.f32.mrb[0].mxu0
  %241 = vmatprep.mubr.f32.mxu0 0.0
  %242 = vmatmul.mubr.f32.gmra.mrb[0].mxu0 %v162
  %v243 = vpop.f32.mrb[0].mxu0
  %v244 = vadd.f32 0.0, %v243
  %v245 = vpop.f32.mrb[0].mxu0
  %246 = vmatprep.mubr.f32.mxu0 0.0
  %247 = vmatmul.mubr.f32.gmra.mrb[0].mxu0 %v165
  %v248 = vpop.f32.mrb[0].mxu0
  %v249 = vadd.f32 0.0, %v248
  %v250 = vpop.f32.mrb[0].mxu0
  %251 = vdwg.mxu0
  %v252 = vand.u32 2147483647, %v234
  %v253 = vand.u32 2147483647, %v239
  %v254 = vand.u32 2147483647, %v244
  %v255 = vand.u32 2147483647, %v249
  %v256 = vadd.f32 %v41, %v151
  %v257 = vadd.f32 %v42, %v152
  %v258 = vadd.f32 %v43, %v153
  %v259 = vadd.f32 %v44, %v154
  %v260 = vadd.f32 %v256, %v252
  %v261 = vadd.f32 %v257, %v253
  %v262 = vadd.f32 %v258, %v254
  %v263 = vadd.f32 %v259, %v255
  %v264 = vmul.f32 %v260, 0.33333334
  %v265 = vmul.f32 %v261, 0.33333334
  %v266 = vmul.f32 %v262, 0.33333334
  %v267 = vmul.f32 %v263, 0.33333334
  %v268 = vld [vmem:[%s2] sm:$0xff]
  %v269 = vld [vmem:[%s2 + $0x8] sm:$0xff]
  %v270 = vld [vmem:[%s2 + $0x10] sm:$0xff]
  %v271 = vld [vmem:[%s2 + $0x18] sm:$0xff]
  %v272 = vld [vmem:[%s2 + $0x20] sm:$0xff]
  %v273 = vld [vmem:[%s2 + $0x28] sm:$0xff]
  %v274 = vld [vmem:[%s2 + $0x30] sm:$0xff]
  %v275 = vld [vmem:[%s2 + $0x38] sm:$0xff]
  %v276 = vld [vmem:[%s3] sm:$0xff]
  %v277 = vld [vmem:[%s3 + $0x8] sm:$0xff]
  %v278 = vld [vmem:[%s3 + $0x10] sm:$0xff]
  %v279 = vld [vmem:[%s3 + $0x18] sm:$0xff]
  %v280 = vld [vmem:[%s3 + $0x20] sm:$0xff]
  %v281 = vld [vmem:[%s3 + $0x28] sm:$0xff]
  %v282 = vld [vmem:[%s3 + $0x30] sm:$0xff]
  %v283 = vld [vmem:[%s3 + $0x38] sm:$0xff]
  %285 = vset.pattern.permute.xlu0 0
  %286 = vperm.xlu0 %285, %v276
  %v287 = vpop.permute.xlu0 %286
  %290 = vset.pattern.permute.xlu0 0
  %291 = vperm.xlu0 %290, %v277
  %v292 = vpop.permute.xlu0 %291
  %295 = vset.pattern.permute.xlu0 0
  %296 = vperm.xlu0 %295, %v278
  %v297 = vpop.permute.xlu0 %296
  %300 = vset.pattern.permute.xlu0 0
  %301 = vperm.xlu0 %300, %v279
  %v302 = vpop.permute.xlu0 %301
  %305 = vset.pattern.permute.xlu0 0
  %306 = vperm.xlu0 %305, %v280
  %v307 = vpop.permute.xlu0 %306
  %310 = vset.pattern.permute.xlu0 0
  %311 = vperm.xlu0 %310, %v281
  %v312 = vpop.permute.xlu0 %311
  %315 = vset.pattern.permute.xlu0 0
  %316 = vperm.xlu0 %315, %v282
  %v317 = vpop.permute.xlu0 %316
  %320 = vset.pattern.permute.xlu0 0
  %321 = vperm.xlu0 %320, %v283
  %v322 = vpop.permute.xlu0 %321
  %vm324 = vcmask 523264
  %v326 = vsel %vm324, %v268, 0
  %v329 = vsel %vm324, %v269, 0
  %v332 = vsel %vm324, %v270, 0
  %v335 = vsel %vm324, %v271, 0
  %v338 = vsel %vm324, %v272, 0
  %v341 = vsel %vm324, %v273, 0
  %v344 = vsel %vm324, %v274, 0
  %v347 = vsel %vm324, %v275, 0
  %349 = vmatprep.subr.mxu0 0.0
  %350 = vmatpush1.msra.mxu0 %v41
  %351 = vmatprep.subr.mxu0 0.0
  %352 = vmatpush1.msra.mxu0 %v42
  %353 = vmatprep.subr.mxu0 0.0
  %354 = vmatpush1.msra.mxu0 %v43
  %355 = vmatprep.subr.mxu0 0.0
  %356 = vmatpush1.msra.mxu0 %v44
  %357 = vmatprep.subr.mxu0 0.0
  %358 = vmatpush1.msra.mxu0 %v264
  %359 = vmatprep.subr.mxu0 0.0
  %360 = vmatpush1.msra.mxu0 %v265
  %361 = vmatprep.subr.mxu0 0.0
  %362 = vmatpush1.msra.mxu0 %v266
  %363 = vmatprep.subr.mxu0 0.0
  %364 = vmatpush1.msra.mxu0 %v267
  %365 = vmatprep.subr.mxu0 0.0
  %366 = vmatpush1.msra.mxu0 0.0
  %367 = vmatprep.subr.mxu0 0.0
  %368 = vmatpush1.msra.mxu0 0.0
  %369 = vmatprep.subr.mxu0 0.0
  %370 = vmatpush1.msra.mxu0 0.0
  %371 = vmatprep.subr.mxu0 0.0
  %372 = vmatpush1.msra.mxu0 0.0
  %373 = vmatprep.subr.mxu0 0.0
  %374 = vmatpush1.msra.mxu0 0.0
  %375 = vmatprep.subr.mxu0 0.0
  %376 = vmatpush1.msra.mxu0 0.0
  %377 = vmatprep.subr.mxu0 0.0
  %378 = vmatpush1.msra.mxu0 0.0
  %379 = vmatprep.subr.mxu0 0.0
  %380 = vmatpush1.msra.mxu0 0.0
  %381 = vmatprep.subr.mxu0 0.0
  %382 = vmatpush1.msra.mxu0 0.0
  %383 = vmatprep.subr.mxu0 0.0
  %384 = vmatpush1.msra.mxu0 0.0
  %385 = vmatprep.subr.mxu0 0.0
  %386 = vmatpush1.msra.mxu0 0.0
  %387 = vmatprep.subr.mxu0 0.0
  %388 = vmatpush1.msra.mxu0 0.0
  %389 = vmatprep.subr.mxu0 0.0
  %390 = vmatpush1.msra.mxu0 0.0
  %391 = vmatprep.subr.mxu0 0.0
  %392 = vmatpush1.msra.mxu0 0.0
  %393 = vmatprep.subr.mxu0 0.0
  %394 = vmatpush1.msra.mxu0 0.0
  %395 = vmatprep.subr.mxu0 0.0
  %396 = vmatpush1.msra.mxu0 0.0
  %397 = vmatprep.subr.mxu0 0.0
  %398 = vmatpush1.msra.mxu0 0.0
  %399 = vmatprep.subr.mxu0 0.0
  %400 = vmatpush1.msra.mxu0 0.0
  %401 = vmatprep.subr.mxu0 0.0
  %402 = vmatpush1.msra.mxu0 0.0
  %403 = vmatprep.subr.mxu0 0.0
  %404 = vmatpush1.msra.mxu0 0.0
  %405 = vmatprep.subr.mxu0 0.0
  %406 = vmatpush1.msra.mxu0 0.0
  %407 = vmatprep.subr.mxu0 0.0
  %408 = vmatpush1.msra.mxu0 0.0
  %409 = vmatprep.subr.mxu0 0.0
  %410 = vmatpush1.msra.mxu0 0.0
  %411 = vmatprep.subr.mxu0 0.0
  %412 = vmatpush1.msra.mxu0 0.0
  %413 = vmatprep.mubr.f32.mxu0 0.0
  %414 = vmatmul.mubr.f32.gmra.mrb[0].mxu0 %v326
  %v415 = vpop.f32.mrb[0].mxu0
  %v416 = vadd.f32 %v287, %v415
  %v417 = vpop.f32.mrb[0].mxu0
  %418 = vmatprep.mubr.f32.mxu0 0.0
  %419 = vmatmul.mubr.f32.gmra.mrb[0].mxu0 %v329
  %v420 = vpop.f32.mrb[0].mxu0
  %v421 = vadd.f32 %v292, %v420
  %v422 = vpop.f32.mrb[0].mxu0
  %423 = vmatprep.mubr.f32.mxu0 0.0
  %424 = vmatmul.mubr.f32.gmra.mrb[0].mxu0 %v332
  %v425 = vpop.f32.mrb[0].mxu0
  %v426 = vadd.f32 %v297, %v425
  %v427 = vpop.f32.mrb[0].mxu0
  %428 = vmatprep.mubr.f32.mxu0 0.0
  %429 = vmatmul.mubr.f32.gmra.mrb[0].mxu0 %v335
  %v430 = vpop.f32.mrb[0].mxu0
  %v431 = vadd.f32 %v302, %v430
  %v432 = vpop.f32.mrb[0].mxu0
  %433 = vmatprep.mubr.f32.mxu0 0.0
  %434 = vmatmul.mubr.f32.gmra.mrb[0].mxu0 %v338
  %v435 = vpop.f32.mrb[0].mxu0
  %v436 = vadd.f32 %v307, %v435
  %v437 = vpop.f32.mrb[0].mxu0
  %438 = vmatprep.mubr.f32.mxu0 0.0
  %439 = vmatmul.mubr.f32.gmra.mrb[0].mxu0 %v341
  %v440 = vpop.f32.mrb[0].mxu0
  %v441 = vadd.f32 %v312, %v440
  %v442 = vpop.f32.mrb[0].mxu0
  %443 = vmatprep.mubr.f32.mxu0 0.0
  %444 = vmatmul.mubr.f32.gmra.mrb[0].mxu0 %v344
  %v445 = vpop.f32.mrb[0].mxu0
  %v446 = vadd.f32 %v317, %v445
  %v447 = vpop.f32.mrb[0].mxu0
  %448 = vmatprep.mubr.f32.mxu0 0.0
  %449 = vmatmul.mubr.f32.gmra.mrb[0].mxu0 %v347
  %v450 = vpop.f32.mrb[0].mxu0
  %v451 = vadd.f32 %v322, %v450
  %v452 = vpop.f32.mrb[0].mxu0
  %453 = vdwg.mxu0
  %454 = vst.msk [vmem:[%s13] sm:$0xff] %vm53, %v416
  %455 = vst.msk [vmem:[%s13 + $0x8] sm:$0xff] %vm53, %v421
  %456 = vst.msk [vmem:[%s13 + $0x10] sm:$0xff] %vm53, %v426
  %457 = vst.msk [vmem:[%s13 + $0x18] sm:$0xff] %vm53, %v431
  %v458 = vmax.f32 %v436, 0.0
  %v459 = vmax.f32 %v441, 0.0
  %v460 = vmax.f32 %v446, 0.0
  %v461 = vmax.f32 %v451, 0.0
  %v462 = vld [vmem:[%s4] sm:$0xff]
  %v463 = vld [vmem:[%s4 + $0x8] sm:$0xff]
  %v464 = vld [vmem:[%s4 + $0x10] sm:$0xff]
  %v465 = vld [vmem:[%s4 + $0x18] sm:$0xff]
  %v466 = vld [vmem:[%s5] sm:$0xff]
  %v467 = vld [vmem:[%s5 + $0x8] sm:$0xff]
  %v468 = vld [vmem:[%s5 + $0x10] sm:$0xff]
  %v469 = vld [vmem:[%s5 + $0x18] sm:$0xff]
  %471 = vset.pattern.permute.xlu0 0
  %472 = vperm.xlu0 %471, %v466
  %v473 = vpop.permute.xlu0 %472
  %476 = vset.pattern.permute.xlu0 0
  %477 = vperm.xlu0 %476, %v467
  %v478 = vpop.permute.xlu0 %477
  %481 = vset.pattern.permute.xlu0 0
  %482 = vperm.xlu0 %481, %v468
  %v483 = vpop.permute.xlu0 %482
  %486 = vset.pattern.permute.xlu0 0
  %487 = vperm.xlu0 %486, %v469
  %v488 = vpop.permute.xlu0 %487
  %v491 = vsel %vm53, %v462, 0
  %v494 = vsel %vm53, %v463, 0
  %v497 = vsel %vm53, %v464, 0
  %v500 = vsel %vm53, %v465, 0
  %502 = vmatprep.subr.mxu0 0.0
  %503 = vmatpush1.msra.mxu0 %v458
  %504 = vmatprep.subr.mxu0 0.0
  %505 = vmatpush1.msra.mxu0 %v459
  %506 = vmatprep.subr.mxu0 0.0
  %507 = vmatpush1.msra.mxu0 %v460
  %508 = vmatprep.subr.mxu0 0.0
  %509 = vmatpush1.msra.mxu0 %v461
  %510 = vmatprep.subr.mxu0 0.0
  %511 = vmatpush1.msra.mxu0 0.0
  %512 = vmatprep.subr.mxu0 0.0
  %513 = vmatpush1.msra.mxu0 0.0
  %514 = vmatprep.subr.mxu0 0.0
  %515 = vmatpush1.msra.mxu0 0.0
  %516 = vmatprep.subr.mxu0 0.0
  %517 = vmatpush1.msra.mxu0 0.0
  %518 = vmatprep.subr.mxu0 0.0
  %519 = vmatpush1.msra.mxu0 0.0
  %520 = vmatprep.subr.mxu0 0.0
  %521 = vmatpush1.msra.mxu0 0.0
  %522 = vmatprep.subr.mxu0 0.0
  %523 = vmatpush1.msra.mxu0 0.0
  %524 = vmatprep.subr.mxu0 0.0
  %525 = vmatpush1.msra.mxu0 0.0
  %526 = vmatprep.subr.mxu0 0.0
  %527 = vmatpush1.msra.mxu0 0.0
  %528 = vmatprep.subr.mxu0 0.0
  %529 = vmatpush1.msra.mxu0 0.0
  %530 = vmatprep.subr.mxu0 0.0
  %531 = vmatpush1.msra.mxu0 0.0
  %532 = vmatprep.subr.mxu0 0.0
  %533 = vmatpush1.msra.mxu0 0.0
  %534 = vmatprep.subr.mxu0 0.0
  %535 = vmatpush1.msra.mxu0 0.0
  %536 = vmatprep.subr.mxu0 0.0
  %537 = vmatpush1.msra.mxu0 0.0
  %538 = vmatprep.subr.mxu0 0.0
  %539 = vmatpush1.msra.mxu0 0.0
  %540 = vmatprep.subr.mxu0 0.0
  %541 = vmatpush1.msra.mxu0 0.0
  %542 = vmatprep.subr.mxu0 0.0
  %543 = vmatpush1.msra.mxu0 0.0
  %544 = vmatprep.subr.mxu0 0.0
  %545 = vmatpush1.msra.mxu0 0.0
  %546 = vmatprep.subr.mxu0 0.0
  %547 = vmatpush1.msra.mxu0 0.0
  %548 = vmatprep.subr.mxu0 0.0
  %549 = vmatpush1.msra.mxu0 0.0
  %550 = vmatprep.subr.mxu0 0.0
  %551 = vmatpush1.msra.mxu0 0.0
  %552 = vmatprep.subr.mxu0 0.0
  %553 = vmatpush1.msra.mxu0 0.0
  %554 = vmatprep.subr.mxu0 0.0
  %555 = vmatpush1.msra.mxu0 0.0
  %556 = vmatprep.subr.mxu0 0.0
  %557 = vmatpush1.msra.mxu0 0.0
  %558 = vmatprep.subr.mxu0 0.0
  %559 = vmatpush1.msra.mxu0 0.0
  %560 = vmatprep.subr.mxu0 0.0
  %561 = vmatpush1.msra.mxu0 0.0
  %562 = vmatprep.subr.mxu0 0.0
  %563 = vmatpush1.msra.mxu0 0.0
  %564 = vmatprep.subr.mxu0 0.0
  %565 = vmatpush1.msra.mxu0 0.0
  %566 = vmatprep.mubr.f32.mxu0 0.0
  %567 = vmatmul.mubr.f32.gmra.mrb[0].mxu0 %v491
  %v568 = vpop.f32.mrb[0].mxu0
  %v569 = vadd.f32 %v473, %v568
  %v570 = vpop.f32.mrb[0].mxu0
  %571 = vmatprep.mubr.f32.mxu0 0.0
  %572 = vmatmul.mubr.f32.gmra.mrb[0].mxu0 %v494
  %v573 = vpop.f32.mrb[0].mxu0
  %v574 = vadd.f32 %v478, %v573
  %v575 = vpop.f32.mrb[0].mxu0
  %576 = vmatprep.mubr.f32.mxu0 0.0
  %577 = vmatmul.mubr.f32.gmra.mrb[0].mxu0 %v497
  %v578 = vpop.f32.mrb[0].mxu0
  %v579 = vadd.f32 %v483, %v578
  %v580 = vpop.f32.mrb[0].mxu0
  %581 = vmatprep.mubr.f32.mxu0 0.0
  %582 = vmatmul.mubr.f32.gmra.mrb[0].mxu0 %v500
  %v583 = vpop.f32.mrb[0].mxu0
  %v584 = vadd.f32 %v488, %v583
  %v585 = vpop.f32.mrb[0].mxu0
  %586 = vdwg.mxu0
  %v587 = vadd.f32 %v416, %v49
  %v588 = vadd.f32 %v421, %v50
  %v589 = vadd.f32 %v426, %v51
  %v590 = vadd.f32 %v431, %v52
  %v591 = vadd.f32 %v569, %v49
  %v592 = vadd.f32 %v574, %v50
  %v593 = vadd.f32 %v579, %v51
  %v594 = vadd.f32 %v584, %v52
  %595 = vst.msk [vmem:[%s12] sm:$0xff] %vm53, %v591
  %596 = vst.msk [vmem:[%s12 + $0x8] sm:$0xff] %vm53, %v592
  %597 = vst.msk [vmem:[%s12 + $0x10] sm:$0xff] %vm53, %v593
  %598 = vst.msk [vmem:[%s12 + $0x18] sm:$0xff] %vm53, %v594
  %v599 = vlaneseq
  %v600 = vshrl.u32 %v599, 7
  %v601 = vadd.s32 %v600, 8
  %v602 = vadd.s32 %v600, 16
  %v603 = vadd.s32 %v600, 24
  %v604 = vand.u32 %v600, 1
  %v605 = vand.u32 %v601, 1
  %v606 = vand.u32 %v602, 1
  %v607 = vand.u32 %v603, 1
  %vm608 = vcmp.lt.s32.totalorder %v604, 1
  %vm609 = vcmp.lt.s32.totalorder %v605, 1
  %vm610 = vcmp.lt.s32.totalorder %v606, 1
  %vm611 = vcmp.lt.s32.totalorder %v607, 1
  %v612 = vand.u32 %v600, 3
  %v613 = vand.u32 %v601, 3
  %v614 = vand.u32 %v602, 3
  %v615 = vand.u32 %v603, 3
  %vm616 = vcmp.lt.s32.totalorder %v612, 2
  %vm617 = vcmp.lt.s32.totalorder %v613, 2
  %vm618 = vcmp.lt.s32.totalorder %v614, 2
  %vm619 = vcmp.lt.s32.totalorder %v615, 2
  %v620 = vmul.f32 %v587, %v587
  %v621 = vmul.f32 %v588, %v588
  %v622 = vmul.f32 %v589, %v589
  %v623 = vmul.f32 %v590, %v590
  %v624 = vrot.slane %v620, 1
  %v625 = vrot.slane %v621, 1
  %v626 = vrot.slane %v622, 1
  %v627 = vrot.slane %v623, 1
  %vm628 = vcmp.lt.s32.totalorder %v600, 7
  %v629 = vsel %vm628, %v626, %v627
  %v630 = vsel %vm628, %v625, %v626
  %v631 = vsel %vm628, %v624, %v625
  %v632 = vsel %vm628, %v627, %v624
  %v633 = vrot.slane %v620, 7
  %v634 = vrot.slane %v621, 7
  %v635 = vrot.slane %v622, 7
  %v636 = vrot.slane %v623, 7
  %vm637 = vcmp.lt.s32.totalorder %v600, 1
  %v638 = vsel %vm637, %v635, %v636
  %v639 = vsel %vm637, %v634, %v635
  %v640 = vsel %vm637, %v633, %v634
  %v641 = vsel %vm637, %v636, %v633
  %v642 = vsel %vm608, %v631, %v641
  %v643 = vsel %vm609, %v630, %v640
  %v644 = vsel %vm610, %v629, %v639
  %v645 = vsel %vm611, %v632, %v638
  %v646 = vadd.f32 %v620, %v642
  %v647 = vadd.f32 %v621, %v643
  %v648 = vadd.f32 %v622, %v644
  %v649 = vadd.f32 %v623, %v645
  %v650 = vrot.slane %v646, 2
  %v651 = vrot.slane %v647, 2
  %v652 = vrot.slane %v648, 2
  %v653 = vrot.slane %v649, 2
  %vm654 = vcmp.lt.s32.totalorder %v600, 6
  %v655 = vsel %vm654, %v652, %v653
  %v656 = vsel %vm654, %v651, %v652
  %v657 = vsel %vm654, %v650, %v651
  %v658 = vsel %vm654, %v653, %v650
  %v659 = vrot.slane %v646, 6
  %v660 = vrot.slane %v647, 6
  %v661 = vrot.slane %v648, 6
  %v662 = vrot.slane %v649, 6
  %vm663 = vcmp.lt.s32.totalorder %v600, 2
  %v664 = vsel %vm663, %v661, %v662
  %v665 = vsel %vm663, %v660, %v661
  %v666 = vsel %vm663, %v659, %v660
  %v667 = vsel %vm663, %v662, %v659
  %v668 = vsel %vm616, %v657, %v667
  %v669 = vsel %vm617, %v656, %v666
  %v670 = vsel %vm618, %v655, %v665
  %v671 = vsel %vm619, %v658, %v664
  %v672 = vadd.f32 %v646, %v668
  %v673 = vadd.f32 %v647, %v669
  %v674 = vadd.f32 %v648, %v670
  %v675 = vadd.f32 %v649, %v671
  %v676 = vadd.f32 %v672, 1e-06
  %v677 = vadd.f32 %v673, 1e-06
  %v678 = vadd.f32 %v674, 1e-06
  %v679 = vadd.f32 %v675, 1e-06
  %v680 = vrsqrt.pop %v676
  %v681 = vrsqrt.pop %v677
  %v682 = vrsqrt.pop %v678
  %v683 = vrsqrt.pop %v679
  %v684 = vmul.f32 %v587, %v680
  %v685 = vmul.f32 %v588, %v681
  %v686 = vmul.f32 %v589, %v682
  %v687 = vmul.f32 %v590, %v683
  %v689 = vsel %vm53, %v684, 0
  %v692 = vsel %vm53, %v685, 0
  %v695 = vsel %vm53, %v686, 0
  %v698 = vsel %vm53, %v687, 0
  %700 = vmatprep.subr.mxu0 0.0
  %701 = vmatpush1.msra.mxu0 %v45
  %702 = vmatprep.subr.mxu0 0.0
  %703 = vmatpush1.msra.mxu0 %v46
  %704 = vmatprep.subr.mxu0 0.0
  %705 = vmatpush1.msra.mxu0 %v47
  %706 = vmatprep.subr.mxu0 0.0
  %707 = vmatpush1.msra.mxu0 %v48
  %708 = vmatprep.subr.mxu0 0.0
  %709 = vmatpush1.msra.mxu0 0.0
  %710 = vmatprep.subr.mxu0 0.0
  %711 = vmatpush1.msra.mxu0 0.0
  %712 = vmatprep.subr.mxu0 0.0
  %713 = vmatpush1.msra.mxu0 0.0
  %714 = vmatprep.subr.mxu0 0.0
  %715 = vmatpush1.msra.mxu0 0.0
  %716 = vmatprep.subr.mxu0 0.0
  %717 = vmatpush1.msra.mxu0 0.0
  %718 = vmatprep.subr.mxu0 0.0
  %719 = vmatpush1.msra.mxu0 0.0
  %720 = vmatprep.subr.mxu0 0.0
  %721 = vmatpush1.msra.mxu0 0.0
  %722 = vmatprep.subr.mxu0 0.0
  %723 = vmatpush1.msra.mxu0 0.0
  %724 = vmatprep.subr.mxu0 0.0
  %725 = vmatpush1.msra.mxu0 0.0
  %726 = vmatprep.subr.mxu0 0.0
  %727 = vmatpush1.msra.mxu0 0.0
  %728 = vmatprep.subr.mxu0 0.0
  %729 = vmatpush1.msra.mxu0 0.0
  %730 = vmatprep.subr.mxu0 0.0
  %731 = vmatpush1.msra.mxu0 0.0
  %732 = vmatprep.subr.mxu0 0.0
  %733 = vmatpush1.msra.mxu0 0.0
  %734 = vmatprep.subr.mxu0 0.0
  %735 = vmatpush1.msra.mxu0 0.0
  %736 = vmatprep.subr.mxu0 0.0
  %737 = vmatpush1.msra.mxu0 0.0
  %738 = vmatprep.subr.mxu0 0.0
  %739 = vmatpush1.msra.mxu0 0.0
  %740 = vmatprep.subr.mxu0 0.0
  %741 = vmatpush1.msra.mxu0 0.0
  %742 = vmatprep.subr.mxu0 0.0
  %743 = vmatpush1.msra.mxu0 0.0
  %744 = vmatprep.subr.mxu0 0.0
  %745 = vmatpush1.msra.mxu0 0.0
  %746 = vmatprep.subr.mxu0 0.0
  %747 = vmatpush1.msra.mxu0 0.0
  %748 = vmatprep.subr.mxu0 0.0
  %749 = vmatpush1.msra.mxu0 0.0
  %750 = vmatprep.subr.mxu0 0.0
  %751 = vmatpush1.msra.mxu0 0.0
  %752 = vmatprep.subr.mxu0 0.0
  %753 = vmatpush1.msra.mxu0 0.0
  %754 = vmatprep.subr.mxu0 0.0
  %755 = vmatpush1.msra.mxu0 0.0
  %756 = vmatprep.subr.mxu0 0.0
  %757 = vmatpush1.msra.mxu0 0.0
  %758 = vmatprep.subr.mxu0 0.0
  %759 = vmatpush1.msra.mxu0 0.0
  %760 = vmatprep.subr.mxu0 0.0
  %761 = vmatpush1.msra.mxu0 0.0
  %762 = vmatprep.subr.mxu0 0.0
  %763 = vmatpush1.msra.mxu0 0.0
  %764 = vmatprep.mubr.f32.mxu0 0.0
  %765 = vmatmul.mubr.f32.gmra.mrb[0].mxu0 %v689
  %v766 = vpop.f32.mrb[0].mxu0
  %v767 = vadd.f32 0.0, %v766
  %v768 = vpop.f32.mrb[0].mxu0
  %769 = vmatprep.mubr.f32.mxu0 0.0
  %770 = vmatmul.mubr.f32.gmra.mrb[0].mxu0 %v692
  %v771 = vpop.f32.mrb[0].mxu0
  %v772 = vadd.f32 0.0, %v771
  %v773 = vpop.f32.mrb[0].mxu0
  %774 = vmatprep.mubr.f32.mxu0 0.0
  %775 = vmatmul.mubr.f32.gmra.mrb[0].mxu0 %v695
  %v776 = vpop.f32.mrb[0].mxu0
  %v777 = vadd.f32 0.0, %v776
  %v778 = vpop.f32.mrb[0].mxu0
  %779 = vmatprep.mubr.f32.mxu0 0.0
  %780 = vmatmul.mubr.f32.gmra.mrb[0].mxu0 %v698
  %v781 = vpop.f32.mrb[0].mxu0
  %v782 = vadd.f32 0.0, %v781
  %v783 = vpop.f32.mrb[0].mxu0
  %784 = vdwg.mxu0
  %v785 = vmul.f32 %v767, 2.5
  %v786 = vmul.f32 %v772, 2.5
  %v787 = vmul.f32 %v777, 2.5
  %v788 = vmul.f32 %v782, 2.5
  %v789 = vadd.f32 %v785, %v591
  %v790 = vadd.f32 %v786, %v592
  %v791 = vadd.f32 %v787, %v593
  %v792 = vadd.f32 %v788, %v594
  %v793 = vmul.f32 %v684, %v789
  %v794 = vmul.f32 %v685, %v790
  %v795 = vmul.f32 %v686, %v791
  %v796 = vmul.f32 %v687, %v792
  %v797 = vrot.slane %v793, 1
  %v798 = vrot.slane %v794, 1
  %v799 = vrot.slane %v795, 1
  %v800 = vrot.slane %v796, 1
  %v801 = vsel %vm628, %v799, %v800
  %v802 = vsel %vm628, %v798, %v799
  %v803 = vsel %vm628, %v797, %v798
  %v804 = vsel %vm628, %v800, %v797
  %v805 = vrot.slane %v793, 7
  %v806 = vrot.slane %v794, 7
  %v807 = vrot.slane %v795, 7
  %v808 = vrot.slane %v796, 7
  %v809 = vsel %vm637, %v807, %v808
  %v810 = vsel %vm637, %v806, %v807
  %v811 = vsel %vm637, %v805, %v806
  %v812 = vsel %vm637, %v808, %v805
  %v813 = vsel %vm608, %v803, %v812
  %v814 = vsel %vm609, %v802, %v811
  %v815 = vsel %vm610, %v801, %v810
  %v816 = vsel %vm611, %v804, %v809
  %v817 = vadd.f32 %v793, %v813
  %v818 = vadd.f32 %v794, %v814
  %v819 = vadd.f32 %v795, %v815
  %v820 = vadd.f32 %v796, %v816
  %v821 = vrot.slane %v817, 2
  %v822 = vrot.slane %v818, 2
  %v823 = vrot.slane %v819, 2
  %v824 = vrot.slane %v820, 2
  %v825 = vsel %vm654, %v823, %v824
  %v826 = vsel %vm654, %v822, %v823
  %v827 = vsel %vm654, %v821, %v822
  %v828 = vsel %vm654, %v824, %v821
  %v829 = vrot.slane %v817, 6
  %v830 = vrot.slane %v818, 6
  %v831 = vrot.slane %v819, 6
  %v832 = vrot.slane %v820, 6
  %v833 = vsel %vm663, %v831, %v832
  %v834 = vsel %vm663, %v830, %v831
  %v835 = vsel %vm663, %v829, %v830
  %v836 = vsel %vm663, %v832, %v829
  %v837 = vsel %vm616, %v827, %v836
  %v838 = vsel %vm617, %v826, %v835
  %v839 = vsel %vm618, %v825, %v834
  %v840 = vsel %vm619, %v828, %v833
  %v841 = vadd.f32 %v817, %v837
  %v842 = vadd.f32 %v818, %v838
  %v843 = vadd.f32 %v819, %v839
  %v844 = vadd.f32 %v820, %v840
  %v845 = vmul.f32 %v841, %v684
  %v846 = vmul.f32 %v842, %v685
  %v847 = vmul.f32 %v843, %v686
  %v848 = vmul.f32 %v844, %v687
  %v849 = vsub.f32 %v789, %v845
  %v850 = vsub.f32 %v790, %v846
  %v851 = vsub.f32 %v791, %v847
  %v852 = vsub.f32 %v792, %v848
  %v853 = vmul.f32 %v849, 0.1
  %v854 = vmul.f32 %v850, 0.1
  %v855 = vmul.f32 %v851, 0.1
  %v856 = vmul.f32 %v852, 0.1
  %v857 = vadd.f32 %v684, %v853
  %v858 = vadd.f32 %v685, %v854
  %v859 = vadd.f32 %v686, %v855
  %v860 = vadd.f32 %v687, %v856
  %v861 = vmul.f32 %v857, %v857
  %v862 = vmul.f32 %v858, %v858
  %v863 = vmul.f32 %v859, %v859
  %v864 = vmul.f32 %v860, %v860
  %v865 = vrot.slane %v861, 1
  %v866 = vrot.slane %v862, 1
  %v867 = vrot.slane %v863, 1
  %v868 = vrot.slane %v864, 1
  %v869 = vsel %vm628, %v867, %v868
  %v870 = vsel %vm628, %v866, %v867
  %v871 = vsel %vm628, %v865, %v866
  %v872 = vsel %vm628, %v868, %v865
  %v873 = vrot.slane %v861, 7
  %v874 = vrot.slane %v862, 7
  %v875 = vrot.slane %v863, 7
  %v876 = vrot.slane %v864, 7
  %v877 = vsel %vm637, %v875, %v876
  %v878 = vsel %vm637, %v874, %v875
  %v879 = vsel %vm637, %v873, %v874
  %v880 = vsel %vm637, %v876, %v873
  %v881 = vsel %vm608, %v871, %v880
  %v882 = vsel %vm609, %v870, %v879
  %v883 = vsel %vm610, %v869, %v878
  %v884 = vsel %vm611, %v872, %v877
  %v885 = vadd.f32 %v861, %v881
  %v886 = vadd.f32 %v862, %v882
  %v887 = vadd.f32 %v863, %v883
  %v888 = vadd.f32 %v864, %v884
  %v889 = vrot.slane %v885, 2
  %v890 = vrot.slane %v886, 2
  %v891 = vrot.slane %v887, 2
  %v892 = vrot.slane %v888, 2
  %v893 = vsel %vm654, %v891, %v892
  %v894 = vsel %vm654, %v890, %v891
  %v895 = vsel %vm654, %v889, %v890
  %v896 = vsel %vm654, %v892, %v889
  %v897 = vrot.slane %v885, 6
  %v898 = vrot.slane %v886, 6
  %v899 = vrot.slane %v887, 6
  %v900 = vrot.slane %v888, 6
  %v901 = vsel %vm663, %v899, %v900
  %v902 = vsel %vm663, %v898, %v899
  %v903 = vsel %vm663, %v897, %v898
  %v904 = vsel %vm663, %v900, %v897
  %v905 = vsel %vm616, %v895, %v904
  %v906 = vsel %vm617, %v894, %v903
  %v907 = vsel %vm618, %v893, %v902
  %v908 = vsel %vm619, %v896, %v901
  %v909 = vadd.f32 %v885, %v905
  %v910 = vadd.f32 %v886, %v906
  %v911 = vadd.f32 %v887, %v907
  %v912 = vadd.f32 %v888, %v908
  %v913 = vadd.f32 %v909, 1e-06
  %v914 = vadd.f32 %v910, 1e-06
  %v915 = vadd.f32 %v911, 1e-06
  %v916 = vadd.f32 %v912, 1e-06
  %v917 = vrsqrt.pop %v913
  %v918 = vrsqrt.pop %v914
  %v919 = vrsqrt.pop %v915
  %v920 = vrsqrt.pop %v916
  %v921 = vmul.f32 %v857, %v917
  %v922 = vmul.f32 %v858, %v918
  %v923 = vmul.f32 %v859, %v919
  %v924 = vmul.f32 %v860, %v920
  %v926 = vsel %vm53, %v921, 0
  %v929 = vsel %vm53, %v922, 0
  %v932 = vsel %vm53, %v923, 0
  %v935 = vsel %vm53, %v924, 0
  %937 = vmatprep.subr.mxu0 0.0
  %938 = vmatpush1.msra.mxu0 %v45
  %939 = vmatprep.subr.mxu0 0.0
  %940 = vmatpush1.msra.mxu0 %v46
  %941 = vmatprep.subr.mxu0 0.0
  %942 = vmatpush1.msra.mxu0 %v47
  %943 = vmatprep.subr.mxu0 0.0
  %944 = vmatpush1.msra.mxu0 %v48
  %945 = vmatprep.subr.mxu0 0.0
  %946 = vmatpush1.msra.mxu0 0.0
  %947 = vmatprep.subr.mxu0 0.0
  %948 = vmatpush1.msra.mxu0 0.0
  %949 = vmatprep.subr.mxu0 0.0
  %950 = vmatpush1.msra.mxu0 0.0
  %951 = vmatprep.subr.mxu0 0.0
  %952 = vmatpush1.msra.mxu0 0.0
  %953 = vmatprep.subr.mxu0 0.0
  %954 = vmatpush1.msra.mxu0 0.0
  %955 = vmatprep.subr.mxu0 0.0
  %956 = vmatpush1.msra.mxu0 0.0
  %957 = vmatprep.subr.mxu0 0.0
  %958 = vmatpush1.msra.mxu0 0.0
  %959 = vmatprep.subr.mxu0 0.0
  %960 = vmatpush1.msra.mxu0 0.0
  %961 = vmatprep.subr.mxu0 0.0
  %962 = vmatpush1.msra.mxu0 0.0
  %963 = vmatprep.subr.mxu0 0.0
  %964 = vmatpush1.msra.mxu0 0.0
  %965 = vmatprep.subr.mxu0 0.0
  %966 = vmatpush1.msra.mxu0 0.0
  %967 = vmatprep.subr.mxu0 0.0
  %968 = vmatpush1.msra.mxu0 0.0
  %969 = vmatprep.subr.mxu0 0.0
  %970 = vmatpush1.msra.mxu0 0.0
  %971 = vmatprep.subr.mxu0 0.0
  %972 = vmatpush1.msra.mxu0 0.0
  %973 = vmatprep.subr.mxu0 0.0
  %974 = vmatpush1.msra.mxu0 0.0
  %975 = vmatprep.subr.mxu0 0.0
  %976 = vmatpush1.msra.mxu0 0.0
  %977 = vmatprep.subr.mxu0 0.0
  %978 = vmatpush1.msra.mxu0 0.0
  %979 = vmatprep.subr.mxu0 0.0
  %980 = vmatpush1.msra.mxu0 0.0
  %981 = vmatprep.subr.mxu0 0.0
  %982 = vmatpush1.msra.mxu0 0.0
  %983 = vmatprep.subr.mxu0 0.0
  %984 = vmatpush1.msra.mxu0 0.0
  %985 = vmatprep.subr.mxu0 0.0
  %986 = vmatpush1.msra.mxu0 0.0
  %987 = vmatprep.subr.mxu0 0.0
  %988 = vmatpush1.msra.mxu0 0.0
  %989 = vmatprep.subr.mxu0 0.0
  %990 = vmatpush1.msra.mxu0 0.0
  %991 = vmatprep.subr.mxu0 0.0
  %992 = vmatpush1.msra.mxu0 0.0
  %993 = vmatprep.subr.mxu0 0.0
  %994 = vmatpush1.msra.mxu0 0.0
  %995 = vmatprep.subr.mxu0 0.0
  %996 = vmatpush1.msra.mxu0 0.0
  %997 = vmatprep.subr.mxu0 0.0
  %998 = vmatpush1.msra.mxu0 0.0
  %999 = vmatprep.subr.mxu0 0.0
  %1000 = vmatpush1.msra.mxu0 0.0
  %1001 = vmatprep.mubr.f32.mxu0 0.0
  %1002 = vmatmul.mubr.f32.gmra.mrb[0].mxu0 %v926
  %v1003 = vpop.f32.mrb[0].mxu0
  %v1004 = vadd.f32 0.0, %v1003
  %v1005 = vpop.f32.mrb[0].mxu0
  %1006 = vmatprep.mubr.f32.mxu0 0.0
  %1007 = vmatmul.mubr.f32.gmra.mrb[0].mxu0 %v929
  %v1008 = vpop.f32.mrb[0].mxu0
  %v1009 = vadd.f32 0.0, %v1008
  %v1010 = vpop.f32.mrb[0].mxu0
  %1011 = vmatprep.mubr.f32.mxu0 0.0
  %1012 = vmatmul.mubr.f32.gmra.mrb[0].mxu0 %v932
  %v1013 = vpop.f32.mrb[0].mxu0
  %v1014 = vadd.f32 0.0, %v1013
  %v1015 = vpop.f32.mrb[0].mxu0
  %1016 = vmatprep.mubr.f32.mxu0 0.0
  %1017 = vmatmul.mubr.f32.gmra.mrb[0].mxu0 %v935
  %v1018 = vpop.f32.mrb[0].mxu0
  %v1019 = vadd.f32 0.0, %v1018
  %v1020 = vpop.f32.mrb[0].mxu0
  %1021 = vdwg.mxu0
  %v1022 = vmul.f32 %v1004, 2.5
  %v1023 = vmul.f32 %v1009, 2.5
  %v1024 = vmul.f32 %v1014, 2.5
  %v1025 = vmul.f32 %v1019, 2.5
  %v1026 = vadd.f32 %v1022, %v591
  %v1027 = vadd.f32 %v1023, %v592
  %v1028 = vadd.f32 %v1024, %v593
  %v1029 = vadd.f32 %v1025, %v594
  %v1030 = vmul.f32 %v921, %v1026
  %v1031 = vmul.f32 %v922, %v1027
  %v1032 = vmul.f32 %v923, %v1028
  %v1033 = vmul.f32 %v924, %v1029
  %v1034 = vrot.slane %v1030, 1
  %v1035 = vrot.slane %v1031, 1
  %v1036 = vrot.slane %v1032, 1
  %v1037 = vrot.slane %v1033, 1
  %v1038 = vsel %vm628, %v1036, %v1037
  %v1039 = vsel %vm628, %v1035, %v1036
  %v1040 = vsel %vm628, %v1034, %v1035
  %v1041 = vsel %vm628, %v1037, %v1034
  %v1042 = vrot.slane %v1030, 7
  %v1043 = vrot.slane %v1031, 7
  %v1044 = vrot.slane %v1032, 7
  %v1045 = vrot.slane %v1033, 7
  %v1046 = vsel %vm637, %v1044, %v1045
  %v1047 = vsel %vm637, %v1043, %v1044
  %v1048 = vsel %vm637, %v1042, %v1043
  %v1049 = vsel %vm637, %v1045, %v1042
  %v1050 = vsel %vm608, %v1040, %v1049
  %v1051 = vsel %vm609, %v1039, %v1048
  %v1052 = vsel %vm610, %v1038, %v1047
  %v1053 = vsel %vm611, %v1041, %v1046
  %v1054 = vadd.f32 %v1030, %v1050
  %v1055 = vadd.f32 %v1031, %v1051
  %v1056 = vadd.f32 %v1032, %v1052
  %v1057 = vadd.f32 %v1033, %v1053
  %v1058 = vrot.slane %v1054, 2
  %v1059 = vrot.slane %v1055, 2
  %v1060 = vrot.slane %v1056, 2
  %v1061 = vrot.slane %v1057, 2
  %v1062 = vsel %vm654, %v1060, %v1061
  %v1063 = vsel %vm654, %v1059, %v1060
  %v1064 = vsel %vm654, %v1058, %v1059
  %v1065 = vsel %vm654, %v1061, %v1058
  %v1066 = vrot.slane %v1054, 6
  %v1067 = vrot.slane %v1055, 6
  %v1068 = vrot.slane %v1056, 6
  %v1069 = vrot.slane %v1057, 6
  %v1070 = vsel %vm663, %v1068, %v1069
  %v1071 = vsel %vm663, %v1067, %v1068
  %v1072 = vsel %vm663, %v1066, %v1067
  %v1073 = vsel %vm663, %v1069, %v1066
  %v1074 = vsel %vm616, %v1064, %v1073
  %v1075 = vsel %vm617, %v1063, %v1072
  %v1076 = vsel %vm618, %v1062, %v1071
  %v1077 = vsel %vm619, %v1065, %v1070
  %v1078 = vadd.f32 %v1054, %v1074
  %v1079 = vadd.f32 %v1055, %v1075
  %v1080 = vadd.f32 %v1056, %v1076
  %v1081 = vadd.f32 %v1057, %v1077
  %v1082 = vmul.f32 %v1078, %v921
  %v1083 = vmul.f32 %v1079, %v922
  %v1084 = vmul.f32 %v1080, %v923
  %v1085 = vmul.f32 %v1081, %v924
  %v1086 = vsub.f32 %v1026, %v1082
  %v1087 = vsub.f32 %v1027, %v1083
  %v1088 = vsub.f32 %v1028, %v1084
  %v1089 = vsub.f32 %v1029, %v1085
  %v1090 = vmul.f32 %v1086, 0.1
  %v1091 = vmul.f32 %v1087, 0.1
  %v1092 = vmul.f32 %v1088, 0.1
  %v1093 = vmul.f32 %v1089, 0.1
  %v1094 = vadd.f32 %v921, %v1090
  %v1095 = vadd.f32 %v922, %v1091
  %v1096 = vadd.f32 %v923, %v1092
  %v1097 = vadd.f32 %v924, %v1093
  %v1098 = vmul.f32 %v1094, %v1094
  %v1099 = vmul.f32 %v1095, %v1095
  %v1100 = vmul.f32 %v1096, %v1096
  %v1101 = vmul.f32 %v1097, %v1097
  %v1102 = vrot.slane %v1098, 1
  %v1103 = vrot.slane %v1099, 1
  %v1104 = vrot.slane %v1100, 1
  %v1105 = vrot.slane %v1101, 1
  %v1106 = vsel %vm628, %v1104, %v1105
  %v1107 = vsel %vm628, %v1103, %v1104
  %v1108 = vsel %vm628, %v1102, %v1103
  %v1109 = vsel %vm628, %v1105, %v1102
  %v1110 = vrot.slane %v1098, 7
  %v1111 = vrot.slane %v1099, 7
  %v1112 = vrot.slane %v1100, 7
  %v1113 = vrot.slane %v1101, 7
  %v1114 = vsel %vm637, %v1112, %v1113
  %v1115 = vsel %vm637, %v1111, %v1112
  %v1116 = vsel %vm637, %v1110, %v1111
  %v1117 = vsel %vm637, %v1113, %v1110
  %v1118 = vsel %vm608, %v1108, %v1117
  %v1119 = vsel %vm609, %v1107, %v1116
  %v1120 = vsel %vm610, %v1106, %v1115
  %v1121 = vsel %vm611, %v1109, %v1114
  %v1122 = vadd.f32 %v1098, %v1118
  %v1123 = vadd.f32 %v1099, %v1119
  %v1124 = vadd.f32 %v1100, %v1120
  %v1125 = vadd.f32 %v1101, %v1121
  %v1126 = vrot.slane %v1122, 2
  %v1127 = vrot.slane %v1123, 2
  %v1128 = vrot.slane %v1124, 2
  %v1129 = vrot.slane %v1125, 2
  %v1130 = vsel %vm654, %v1128, %v1129
  %v1131 = vsel %vm654, %v1127, %v1128
  %v1132 = vsel %vm654, %v1126, %v1127
  %v1133 = vsel %vm654, %v1129, %v1126
  %v1134 = vrot.slane %v1122, 6
  %v1135 = vrot.slane %v1123, 6
  %v1136 = vrot.slane %v1124, 6
  %v1137 = vrot.slane %v1125, 6
  %v1138 = vsel %vm663, %v1136, %v1137
  %v1139 = vsel %vm663, %v1135, %v1136
  %v1140 = vsel %vm663, %v1134, %v1135
  %v1141 = vsel %vm663, %v1137, %v1134
  %v1142 = vsel %vm616, %v1132, %v1141
  %v1143 = vsel %vm617, %v1131, %v1140
  %v1144 = vsel %vm618, %v1130, %v1139
  %v1145 = vsel %vm619, %v1133, %v1138
  %v1146 = vadd.f32 %v1122, %v1142
  %v1147 = vadd.f32 %v1123, %v1143
  %v1148 = vadd.f32 %v1124, %v1144
  %v1149 = vadd.f32 %v1125, %v1145
  %v1150 = vadd.f32 %v1146, 1e-06
  %v1151 = vadd.f32 %v1147, 1e-06
  %v1152 = vadd.f32 %v1148, 1e-06
  %v1153 = vadd.f32 %v1149, 1e-06
  %v1154 = vrsqrt.pop %v1150
  %v1155 = vrsqrt.pop %v1151
  %v1156 = vrsqrt.pop %v1152
  %v1157 = vrsqrt.pop %v1153
  %v1158 = vmul.f32 %v1094, %v1154
  %v1159 = vmul.f32 %v1095, %v1155
  %v1160 = vmul.f32 %v1096, %v1156
  %v1161 = vmul.f32 %v1097, %v1157
  %v1163 = vsel %vm53, %v1158, 0
  %v1166 = vsel %vm53, %v1159, 0
  %v1169 = vsel %vm53, %v1160, 0
  %v1172 = vsel %vm53, %v1161, 0
  %1174 = vmatprep.subr.mxu0 0.0
  %1175 = vmatpush1.msra.mxu0 %v45
  %1176 = vmatprep.subr.mxu0 0.0
  %1177 = vmatpush1.msra.mxu0 %v46
  %1178 = vmatprep.subr.mxu0 0.0
  %1179 = vmatpush1.msra.mxu0 %v47
  %1180 = vmatprep.subr.mxu0 0.0
  %1181 = vmatpush1.msra.mxu0 %v48
  %1182 = vmatprep.subr.mxu0 0.0
  %1183 = vmatpush1.msra.mxu0 0.0
  %1184 = vmatprep.subr.mxu0 0.0
  %1185 = vmatpush1.msra.mxu0 0.0
  %1186 = vmatprep.subr.mxu0 0.0
  %1187 = vmatpush1.msra.mxu0 0.0
  %1188 = vmatprep.subr.mxu0 0.0
  %1189 = vmatpush1.msra.mxu0 0.0
  %1190 = vmatprep.subr.mxu0 0.0
  %1191 = vmatpush1.msra.mxu0 0.0
  %1192 = vmatprep.subr.mxu0 0.0
  %1193 = vmatpush1.msra.mxu0 0.0
  %1194 = vmatprep.subr.mxu0 0.0
  %1195 = vmatpush1.msra.mxu0 0.0
  %1196 = vmatprep.subr.mxu0 0.0
  %1197 = vmatpush1.msra.mxu0 0.0
  %1198 = vmatprep.subr.mxu0 0.0
  %1199 = vmatpush1.msra.mxu0 0.0
  %1200 = vmatprep.subr.mxu0 0.0
  %1201 = vmatpush1.msra.mxu0 0.0
  %1202 = vmatprep.subr.mxu0 0.0
  %1203 = vmatpush1.msra.mxu0 0.0
  %1204 = vmatprep.subr.mxu0 0.0
  %1205 = vmatpush1.msra.mxu0 0.0
  %1206 = vmatprep.subr.mxu0 0.0
  %1207 = vmatpush1.msra.mxu0 0.0
  %1208 = vmatprep.subr.mxu0 0.0
  %1209 = vmatpush1.msra.mxu0 0.0
  %1210 = vmatprep.subr.mxu0 0.0
  %1211 = vmatpush1.msra.mxu0 0.0
  %1212 = vmatprep.subr.mxu0 0.0
  %1213 = vmatpush1.msra.mxu0 0.0
  %1214 = vmatprep.subr.mxu0 0.0
  %1215 = vmatpush1.msra.mxu0 0.0
  %1216 = vmatprep.subr.mxu0 0.0
  %1217 = vmatpush1.msra.mxu0 0.0
  %1218 = vmatprep.subr.mxu0 0.0
  %1219 = vmatpush1.msra.mxu0 0.0
  %1220 = vmatprep.subr.mxu0 0.0
  %1221 = vmatpush1.msra.mxu0 0.0
  %1222 = vmatprep.subr.mxu0 0.0
  %1223 = vmatpush1.msra.mxu0 0.0
  %1224 = vmatprep.subr.mxu0 0.0
  %1225 = vmatpush1.msra.mxu0 0.0
  %1226 = vmatprep.subr.mxu0 0.0
  %1227 = vmatpush1.msra.mxu0 0.0
  %1228 = vmatprep.subr.mxu0 0.0
  %1229 = vmatpush1.msra.mxu0 0.0
  %1230 = vmatprep.subr.mxu0 0.0
  %1231 = vmatpush1.msra.mxu0 0.0
  %1232 = vmatprep.subr.mxu0 0.0
  %1233 = vmatpush1.msra.mxu0 0.0
  %1234 = vmatprep.subr.mxu0 0.0
  %1235 = vmatpush1.msra.mxu0 0.0
  %1236 = vmatprep.subr.mxu0 0.0
  %1237 = vmatpush1.msra.mxu0 0.0
  %1238 = vmatprep.mubr.f32.mxu0 0.0
  %1239 = vmatmul.mubr.f32.gmra.mrb[0].mxu0 %v1163
  %v1240 = vpop.f32.mrb[0].mxu0
  %v1241 = vadd.f32 0.0, %v1240
  %v1242 = vpop.f32.mrb[0].mxu0
  %1243 = vmatprep.mubr.f32.mxu0 0.0
  %1244 = vmatmul.mubr.f32.gmra.mrb[0].mxu0 %v1166
  %v1245 = vpop.f32.mrb[0].mxu0
  %v1246 = vadd.f32 0.0, %v1245
  %v1247 = vpop.f32.mrb[0].mxu0
  %1248 = vmatprep.mubr.f32.mxu0 0.0
  %1249 = vmatmul.mubr.f32.gmra.mrb[0].mxu0 %v1169
  %v1250 = vpop.f32.mrb[0].mxu0
  %v1251 = vadd.f32 0.0, %v1250
  %v1252 = vpop.f32.mrb[0].mxu0
  %1253 = vmatprep.mubr.f32.mxu0 0.0
  %1254 = vmatmul.mubr.f32.gmra.mrb[0].mxu0 %v1172
  %v1255 = vpop.f32.mrb[0].mxu0
  %v1256 = vadd.f32 0.0, %v1255
  %v1257 = vpop.f32.mrb[0].mxu0
  %1258 = vdwg.mxu0
  %v1259 = vmul.f32 %v1241, 2.5
  %v1260 = vmul.f32 %v1246, 2.5
  %v1261 = vmul.f32 %v1251, 2.5
  %v1262 = vmul.f32 %v1256, 2.5
  %v1263 = vadd.f32 %v1259, %v591
  %v1264 = vadd.f32 %v1260, %v592
  %v1265 = vadd.f32 %v1261, %v593
  %v1266 = vadd.f32 %v1262, %v594
  %v1267 = vmul.f32 %v1158, %v1263
  %v1268 = vmul.f32 %v1159, %v1264
  %v1269 = vmul.f32 %v1160, %v1265
  %v1270 = vmul.f32 %v1161, %v1266
  %v1271 = vrot.slane %v1267, 1
  %v1272 = vrot.slane %v1268, 1
  %v1273 = vrot.slane %v1269, 1
  %v1274 = vrot.slane %v1270, 1
  %v1275 = vsel %vm628, %v1273, %v1274
  %v1276 = vsel %vm628, %v1272, %v1273
  %v1277 = vsel %vm628, %v1271, %v1272
  %v1278 = vsel %vm628, %v1274, %v1271
  %v1279 = vrot.slane %v1267, 7
  %v1280 = vrot.slane %v1268, 7
  %v1281 = vrot.slane %v1269, 7
  %v1282 = vrot.slane %v1270, 7
  %v1283 = vsel %vm637, %v1281, %v1282
  %v1284 = vsel %vm637, %v1280, %v1281
  %v1285 = vsel %vm637, %v1279, %v1280
  %v1286 = vsel %vm637, %v1282, %v1279
  %v1287 = vsel %vm608, %v1277, %v1286
  %v1288 = vsel %vm609, %v1276, %v1285
  %v1289 = vsel %vm610, %v1275, %v1284
  %v1290 = vsel %vm611, %v1278, %v1283
  %v1291 = vadd.f32 %v1267, %v1287
  %v1292 = vadd.f32 %v1268, %v1288
  %v1293 = vadd.f32 %v1269, %v1289
  %v1294 = vadd.f32 %v1270, %v1290
  %v1295 = vrot.slane %v1291, 2
  %v1296 = vrot.slane %v1292, 2
  %v1297 = vrot.slane %v1293, 2
  %v1298 = vrot.slane %v1294, 2
  %v1299 = vsel %vm654, %v1297, %v1298
  %v1300 = vsel %vm654, %v1296, %v1297
  %v1301 = vsel %vm654, %v1295, %v1296
  %v1302 = vsel %vm654, %v1298, %v1295
  %v1303 = vrot.slane %v1291, 6
  %v1304 = vrot.slane %v1292, 6
  %v1305 = vrot.slane %v1293, 6
  %v1306 = vrot.slane %v1294, 6
  %v1307 = vsel %vm663, %v1305, %v1306
  %v1308 = vsel %vm663, %v1304, %v1305
  %v1309 = vsel %vm663, %v1303, %v1304
  %v1310 = vsel %vm663, %v1306, %v1303
  %v1311 = vsel %vm616, %v1301, %v1310
  %v1312 = vsel %vm617, %v1300, %v1309
  %v1313 = vsel %vm618, %v1299, %v1308
  %v1314 = vsel %vm619, %v1302, %v1307
  %v1315 = vadd.f32 %v1291, %v1311
  %v1316 = vadd.f32 %v1292, %v1312
  %v1317 = vadd.f32 %v1293, %v1313
  %v1318 = vadd.f32 %v1294, %v1314
  %v1319 = vmul.f32 %v1315, %v1158
  %v1320 = vmul.f32 %v1316, %v1159
  %v1321 = vmul.f32 %v1317, %v1160
  %v1322 = vmul.f32 %v1318, %v1161
  %v1323 = vsub.f32 %v1263, %v1319
  %v1324 = vsub.f32 %v1264, %v1320
  %v1325 = vsub.f32 %v1265, %v1321
  %v1326 = vsub.f32 %v1266, %v1322
  %v1327 = vmul.f32 %v1323, 0.1
  %v1328 = vmul.f32 %v1324, 0.1
  %v1329 = vmul.f32 %v1325, 0.1
  %v1330 = vmul.f32 %v1326, 0.1
  %v1331 = vadd.f32 %v1158, %v1327
  %v1332 = vadd.f32 %v1159, %v1328
  %v1333 = vadd.f32 %v1160, %v1329
  %v1334 = vadd.f32 %v1161, %v1330
  %v1335 = vmul.f32 %v1331, %v1331
  %v1336 = vmul.f32 %v1332, %v1332
  %v1337 = vmul.f32 %v1333, %v1333
  %v1338 = vmul.f32 %v1334, %v1334
  %v1339 = vrot.slane %v1335, 1
  %v1340 = vrot.slane %v1336, 1
  %v1341 = vrot.slane %v1337, 1
  %v1342 = vrot.slane %v1338, 1
  %v1343 = vsel %vm628, %v1341, %v1342
  %v1344 = vsel %vm628, %v1340, %v1341
  %v1345 = vsel %vm628, %v1339, %v1340
  %v1346 = vsel %vm628, %v1342, %v1339
  %v1347 = vrot.slane %v1335, 7
  %v1348 = vrot.slane %v1336, 7
  %v1349 = vrot.slane %v1337, 7
  %v1350 = vrot.slane %v1338, 7
  %v1351 = vsel %vm637, %v1349, %v1350
  %v1352 = vsel %vm637, %v1348, %v1349
  %v1353 = vsel %vm637, %v1347, %v1348
  %v1354 = vsel %vm637, %v1350, %v1347
  %v1355 = vsel %vm608, %v1345, %v1354
  %v1356 = vsel %vm609, %v1344, %v1353
  %v1357 = vsel %vm610, %v1343, %v1352
  %v1358 = vsel %vm611, %v1346, %v1351
  %v1359 = vadd.f32 %v1335, %v1355
  %v1360 = vadd.f32 %v1336, %v1356
  %v1361 = vadd.f32 %v1337, %v1357
  %v1362 = vadd.f32 %v1338, %v1358
  %v1363 = vrot.slane %v1359, 2
  %v1364 = vrot.slane %v1360, 2
  %v1365 = vrot.slane %v1361, 2
  %v1366 = vrot.slane %v1362, 2
  %v1367 = vsel %vm654, %v1365, %v1366
  %v1368 = vsel %vm654, %v1364, %v1365
  %v1369 = vsel %vm654, %v1363, %v1364
  %v1370 = vsel %vm654, %v1366, %v1363
  %v1371 = vrot.slane %v1359, 6
  %v1372 = vrot.slane %v1360, 6
  %v1373 = vrot.slane %v1361, 6
  %v1374 = vrot.slane %v1362, 6
  %v1375 = vsel %vm663, %v1373, %v1374
  %v1376 = vsel %vm663, %v1372, %v1373
  %v1377 = vsel %vm663, %v1371, %v1372
  %v1378 = vsel %vm663, %v1374, %v1371
  %v1379 = vsel %vm616, %v1369, %v1378
  %v1380 = vsel %vm617, %v1368, %v1377
  %v1381 = vsel %vm618, %v1367, %v1376
  %v1382 = vsel %vm619, %v1370, %v1375
  %v1383 = vadd.f32 %v1359, %v1379
  %v1384 = vadd.f32 %v1360, %v1380
  %v1385 = vadd.f32 %v1361, %v1381
  %v1386 = vadd.f32 %v1362, %v1382
  %v1387 = vadd.f32 %v1383, 1e-06
  %v1388 = vadd.f32 %v1384, 1e-06
  %v1389 = vadd.f32 %v1385, 1e-06
  %v1390 = vadd.f32 %v1386, 1e-06
  %v1391 = vrsqrt.pop %v1387
  %v1392 = vrsqrt.pop %v1388
  %v1393 = vrsqrt.pop %v1389
  %v1394 = vrsqrt.pop %v1390
  %v1395 = vmul.f32 %v1331, %v1391
  %v1396 = vmul.f32 %v1332, %v1392
  %v1397 = vmul.f32 %v1333, %v1393
  %v1398 = vmul.f32 %v1334, %v1394
  %v1400 = vsel %vm53, %v1395, 0
  %v1403 = vsel %vm53, %v1396, 0
  %v1406 = vsel %vm53, %v1397, 0
  %v1409 = vsel %vm53, %v1398, 0
  %1411 = vmatprep.subr.mxu0 0.0
  %1412 = vmatpush1.msra.mxu0 %v45
  %1413 = vmatprep.subr.mxu0 0.0
  %1414 = vmatpush1.msra.mxu0 %v46
  %1415 = vmatprep.subr.mxu0 0.0
  %1416 = vmatpush1.msra.mxu0 %v47
  %1417 = vmatprep.subr.mxu0 0.0
  %1418 = vmatpush1.msra.mxu0 %v48
  %1419 = vmatprep.subr.mxu0 0.0
  %1420 = vmatpush1.msra.mxu0 0.0
  %1421 = vmatprep.subr.mxu0 0.0
  %1422 = vmatpush1.msra.mxu0 0.0
  %1423 = vmatprep.subr.mxu0 0.0
  %1424 = vmatpush1.msra.mxu0 0.0
  %1425 = vmatprep.subr.mxu0 0.0
  %1426 = vmatpush1.msra.mxu0 0.0
  %1427 = vmatprep.subr.mxu0 0.0
  %1428 = vmatpush1.msra.mxu0 0.0
  %1429 = vmatprep.subr.mxu0 0.0
  %1430 = vmatpush1.msra.mxu0 0.0
  %1431 = vmatprep.subr.mxu0 0.0
  %1432 = vmatpush1.msra.mxu0 0.0
  %1433 = vmatprep.subr.mxu0 0.0
  %1434 = vmatpush1.msra.mxu0 0.0
  %1435 = vmatprep.subr.mxu0 0.0
  %1436 = vmatpush1.msra.mxu0 0.0
  %1437 = vmatprep.subr.mxu0 0.0
  %1438 = vmatpush1.msra.mxu0 0.0
  %1439 = vmatprep.subr.mxu0 0.0
  %1440 = vmatpush1.msra.mxu0 0.0
  %1441 = vmatprep.subr.mxu0 0.0
  %1442 = vmatpush1.msra.mxu0 0.0
  %1443 = vmatprep.subr.mxu0 0.0
  %1444 = vmatpush1.msra.mxu0 0.0
  %1445 = vmatprep.subr.mxu0 0.0
  %1446 = vmatpush1.msra.mxu0 0.0
  %1447 = vmatprep.subr.mxu0 0.0
  %1448 = vmatpush1.msra.mxu0 0.0
  %1449 = vmatprep.subr.mxu0 0.0
  %1450 = vmatpush1.msra.mxu0 0.0
  %1451 = vmatprep.subr.mxu0 0.0
  %1452 = vmatpush1.msra.mxu0 0.0
  %1453 = vmatprep.subr.mxu0 0.0
  %1454 = vmatpush1.msra.mxu0 0.0
  %1455 = vmatprep.subr.mxu0 0.0
  %1456 = vmatpush1.msra.mxu0 0.0
  %1457 = vmatprep.subr.mxu0 0.0
  %1458 = vmatpush1.msra.mxu0 0.0
  %1459 = vmatprep.subr.mxu0 0.0
  %1460 = vmatpush1.msra.mxu0 0.0
  %1461 = vmatprep.subr.mxu0 0.0
  %1462 = vmatpush1.msra.mxu0 0.0
  %1463 = vmatprep.subr.mxu0 0.0
  %1464 = vmatpush1.msra.mxu0 0.0
  %1465 = vmatprep.subr.mxu0 0.0
  %1466 = vmatpush1.msra.mxu0 0.0
  %1467 = vmatprep.subr.mxu0 0.0
  %1468 = vmatpush1.msra.mxu0 0.0
  %1469 = vmatprep.subr.mxu0 0.0
  %1470 = vmatpush1.msra.mxu0 0.0
  %1471 = vmatprep.subr.mxu0 0.0
  %1472 = vmatpush1.msra.mxu0 0.0
  %1473 = vmatprep.subr.mxu0 0.0
  %1474 = vmatpush1.msra.mxu0 0.0
  %1475 = vmatprep.mubr.f32.mxu0 0.0
  %1476 = vmatmul.mubr.f32.gmra.mrb[0].mxu0 %v1400
  %v1477 = vpop.f32.mrb[0].mxu0
  %v1478 = vadd.f32 0.0, %v1477
  %v1479 = vpop.f32.mrb[0].mxu0
  %1480 = vmatprep.mubr.f32.mxu0 0.0
  %1481 = vmatmul.mubr.f32.gmra.mrb[0].mxu0 %v1403
  %v1482 = vpop.f32.mrb[0].mxu0
  %v1483 = vadd.f32 0.0, %v1482
  %v1484 = vpop.f32.mrb[0].mxu0
  %1485 = vmatprep.mubr.f32.mxu0 0.0
  %1486 = vmatmul.mubr.f32.gmra.mrb[0].mxu0 %v1406
  %v1487 = vpop.f32.mrb[0].mxu0
  %v1488 = vadd.f32 0.0, %v1487
  %v1489 = vpop.f32.mrb[0].mxu0
  %1490 = vmatprep.mubr.f32.mxu0 0.0
  %1491 = vmatmul.mubr.f32.gmra.mrb[0].mxu0 %v1409
  %v1492 = vpop.f32.mrb[0].mxu0
  %v1493 = vadd.f32 0.0, %v1492
  %v1494 = vpop.f32.mrb[0].mxu0
  %1495 = vdwg.mxu0
  %v1496 = vmul.f32 %v1478, 2.5
  %v1497 = vmul.f32 %v1483, 2.5
  %v1498 = vmul.f32 %v1488, 2.5
  %v1499 = vmul.f32 %v1493, 2.5
  %v1500 = vadd.f32 %v1496, %v591
  %v1501 = vadd.f32 %v1497, %v592
  %v1502 = vadd.f32 %v1498, %v593
  %v1503 = vadd.f32 %v1499, %v594
  %v1504 = vmul.f32 %v1395, %v1500
  %v1505 = vmul.f32 %v1396, %v1501
  %v1506 = vmul.f32 %v1397, %v1502
  %v1507 = vmul.f32 %v1398, %v1503
  %v1508 = vrot.slane %v1504, 1
  %v1509 = vrot.slane %v1505, 1
  %v1510 = vrot.slane %v1506, 1
  %v1511 = vrot.slane %v1507, 1
  %v1512 = vsel %vm628, %v1510, %v1511
  %v1513 = vsel %vm628, %v1509, %v1510
  %v1514 = vsel %vm628, %v1508, %v1509
  %v1515 = vsel %vm628, %v1511, %v1508
  %v1516 = vrot.slane %v1504, 7
  %v1517 = vrot.slane %v1505, 7
  %v1518 = vrot.slane %v1506, 7
  %v1519 = vrot.slane %v1507, 7
  %v1520 = vsel %vm637, %v1518, %v1519
  %v1521 = vsel %vm637, %v1517, %v1518
  %v1522 = vsel %vm637, %v1516, %v1517
  %v1523 = vsel %vm637, %v1519, %v1516
  %v1524 = vsel %vm608, %v1514, %v1523
  %v1525 = vsel %vm609, %v1513, %v1522
  %v1526 = vsel %vm610, %v1512, %v1521
  %v1527 = vsel %vm611, %v1515, %v1520
  %v1528 = vadd.f32 %v1504, %v1524
  %v1529 = vadd.f32 %v1505, %v1525
  %v1530 = vadd.f32 %v1506, %v1526
  %v1531 = vadd.f32 %v1507, %v1527
  %v1532 = vrot.slane %v1528, 2
  %v1533 = vrot.slane %v1529, 2
  %v1534 = vrot.slane %v1530, 2
  %v1535 = vrot.slane %v1531, 2
  %v1536 = vsel %vm654, %v1534, %v1535
  %v1537 = vsel %vm654, %v1533, %v1534
  %v1538 = vsel %vm654, %v1532, %v1533
  %v1539 = vsel %vm654, %v1535, %v1532
  %v1540 = vrot.slane %v1528, 6
  %v1541 = vrot.slane %v1529, 6
  %v1542 = vrot.slane %v1530, 6
  %v1543 = vrot.slane %v1531, 6
  %v1544 = vsel %vm663, %v1542, %v1543
  %v1545 = vsel %vm663, %v1541, %v1542
  %v1546 = vsel %vm663, %v1540, %v1541
  %v1547 = vsel %vm663, %v1543, %v1540
  %v1548 = vsel %vm616, %v1538, %v1547
  %v1549 = vsel %vm617, %v1537, %v1546
  %v1550 = vsel %vm618, %v1536, %v1545
  %v1551 = vsel %vm619, %v1539, %v1544
  %v1552 = vadd.f32 %v1528, %v1548
  %v1553 = vadd.f32 %v1529, %v1549
  %v1554 = vadd.f32 %v1530, %v1550
  %v1555 = vadd.f32 %v1531, %v1551
  %v1556 = vmul.f32 %v1552, %v1395
  %v1557 = vmul.f32 %v1553, %v1396
  %v1558 = vmul.f32 %v1554, %v1397
  %v1559 = vmul.f32 %v1555, %v1398
  %v1560 = vsub.f32 %v1500, %v1556
  %v1561 = vsub.f32 %v1501, %v1557
  %v1562 = vsub.f32 %v1502, %v1558
  %v1563 = vsub.f32 %v1503, %v1559
  %v1564 = vmul.f32 %v1560, 0.1
  %v1565 = vmul.f32 %v1561, 0.1
  %v1566 = vmul.f32 %v1562, 0.1
  %v1567 = vmul.f32 %v1563, 0.1
  %v1568 = vadd.f32 %v1395, %v1564
  %v1569 = vadd.f32 %v1396, %v1565
  %v1570 = vadd.f32 %v1397, %v1566
  %v1571 = vadd.f32 %v1398, %v1567
  %v1572 = vmul.f32 %v1568, %v1568
  %v1573 = vmul.f32 %v1569, %v1569
  %v1574 = vmul.f32 %v1570, %v1570
  %v1575 = vmul.f32 %v1571, %v1571
  %v1576 = vrot.slane %v1572, 1
  %v1577 = vrot.slane %v1573, 1
  %v1578 = vrot.slane %v1574, 1
  %v1579 = vrot.slane %v1575, 1
  %v1580 = vsel %vm628, %v1578, %v1579
  %v1581 = vsel %vm628, %v1577, %v1578
  %v1582 = vsel %vm628, %v1576, %v1577
  %v1583 = vsel %vm628, %v1579, %v1576
  %v1584 = vrot.slane %v1572, 7
  %v1585 = vrot.slane %v1573, 7
  %v1586 = vrot.slane %v1574, 7
  %v1587 = vrot.slane %v1575, 7
  %v1588 = vsel %vm637, %v1586, %v1587
  %v1589 = vsel %vm637, %v1585, %v1586
  %v1590 = vsel %vm637, %v1584, %v1585
  %v1591 = vsel %vm637, %v1587, %v1584
  %v1592 = vsel %vm608, %v1582, %v1591
  %v1593 = vsel %vm609, %v1581, %v1590
  %v1594 = vsel %vm610, %v1580, %v1589
  %v1595 = vsel %vm611, %v1583, %v1588
  %v1596 = vadd.f32 %v1572, %v1592
  %v1597 = vadd.f32 %v1573, %v1593
  %v1598 = vadd.f32 %v1574, %v1594
  %v1599 = vadd.f32 %v1575, %v1595
  %v1600 = vrot.slane %v1596, 2
  %v1601 = vrot.slane %v1597, 2
  %v1602 = vrot.slane %v1598, 2
  %v1603 = vrot.slane %v1599, 2
  %v1604 = vsel %vm654, %v1602, %v1603
  %v1605 = vsel %vm654, %v1601, %v1602
  %v1606 = vsel %vm654, %v1600, %v1601
  %v1607 = vsel %vm654, %v1603, %v1600
  %v1608 = vrot.slane %v1596, 6
  %v1609 = vrot.slane %v1597, 6
  %v1610 = vrot.slane %v1598, 6
  %v1611 = vrot.slane %v1599, 6
  %v1612 = vsel %vm663, %v1610, %v1611
  %v1613 = vsel %vm663, %v1609, %v1610
  %v1614 = vsel %vm663, %v1608, %v1609
  %v1615 = vsel %vm663, %v1611, %v1608
  %v1616 = vsel %vm616, %v1606, %v1615
  %v1617 = vsel %vm617, %v1605, %v1614
  %v1618 = vsel %vm618, %v1604, %v1613
  %v1619 = vsel %vm619, %v1607, %v1612
  %v1620 = vadd.f32 %v1596, %v1616
  %v1621 = vadd.f32 %v1597, %v1617
  %v1622 = vadd.f32 %v1598, %v1618
  %v1623 = vadd.f32 %v1599, %v1619
  %v1624 = vadd.f32 %v1620, 1e-06
  %v1625 = vadd.f32 %v1621, 1e-06
  %v1626 = vadd.f32 %v1622, 1e-06
  %v1627 = vadd.f32 %v1623, 1e-06
  %v1628 = vrsqrt.pop %v1624
  %v1629 = vrsqrt.pop %v1625
  %v1630 = vrsqrt.pop %v1626
  %v1631 = vrsqrt.pop %v1627
  %v1632 = vmul.f32 %v1568, %v1628
  %v1633 = vmul.f32 %v1569, %v1629
  %v1634 = vmul.f32 %v1570, %v1630
  %v1635 = vmul.f32 %v1571, %v1631
  %v1637 = vsel %vm53, %v1632, 0
  %v1640 = vsel %vm53, %v1633, 0
  %v1643 = vsel %vm53, %v1634, 0
  %v1646 = vsel %vm53, %v1635, 0
  %1648 = vmatprep.subr.mxu0 0.0
  %1649 = vmatpush1.msra.mxu0 %v45
  %1650 = vmatprep.subr.mxu0 0.0
  %1651 = vmatpush1.msra.mxu0 %v46
  %1652 = vmatprep.subr.mxu0 0.0
  %1653 = vmatpush1.msra.mxu0 %v47
  %1654 = vmatprep.subr.mxu0 0.0
  %1655 = vmatpush1.msra.mxu0 %v48
  %1656 = vmatprep.subr.mxu0 0.0
  %1657 = vmatpush1.msra.mxu0 0.0
  %1658 = vmatprep.subr.mxu0 0.0
  %1659 = vmatpush1.msra.mxu0 0.0
  %1660 = vmatprep.subr.mxu0 0.0
  %1661 = vmatpush1.msra.mxu0 0.0
  %1662 = vmatprep.subr.mxu0 0.0
  %1663 = vmatpush1.msra.mxu0 0.0
  %1664 = vmatprep.subr.mxu0 0.0
  %1665 = vmatpush1.msra.mxu0 0.0
  %1666 = vmatprep.subr.mxu0 0.0
  %1667 = vmatpush1.msra.mxu0 0.0
  %1668 = vmatprep.subr.mxu0 0.0
  %1669 = vmatpush1.msra.mxu0 0.0
  %1670 = vmatprep.subr.mxu0 0.0
  %1671 = vmatpush1.msra.mxu0 0.0
  %1672 = vmatprep.subr.mxu0 0.0
  %1673 = vmatpush1.msra.mxu0 0.0
  %1674 = vmatprep.subr.mxu0 0.0
  %1675 = vmatpush1.msra.mxu0 0.0
  %1676 = vmatprep.subr.mxu0 0.0
  %1677 = vmatpush1.msra.mxu0 0.0
  %1678 = vmatprep.subr.mxu0 0.0
  %1679 = vmatpush1.msra.mxu0 0.0
  %1680 = vmatprep.subr.mxu0 0.0
  %1681 = vmatpush1.msra.mxu0 0.0
  %1682 = vmatprep.subr.mxu0 0.0
  %1683 = vmatpush1.msra.mxu0 0.0
  %1684 = vmatprep.subr.mxu0 0.0
  %1685 = vmatpush1.msra.mxu0 0.0
  %1686 = vmatprep.subr.mxu0 0.0
  %1687 = vmatpush1.msra.mxu0 0.0
  %1688 = vmatprep.subr.mxu0 0.0
  %1689 = vmatpush1.msra.mxu0 0.0
  %1690 = vmatprep.subr.mxu0 0.0
  %1691 = vmatpush1.msra.mxu0 0.0
  %1692 = vmatprep.subr.mxu0 0.0
  %1693 = vmatpush1.msra.mxu0 0.0
  %1694 = vmatprep.subr.mxu0 0.0
  %1695 = vmatpush1.msra.mxu0 0.0
  %1696 = vmatprep.subr.mxu0 0.0
  %1697 = vmatpush1.msra.mxu0 0.0
  %1698 = vmatprep.subr.mxu0 0.0
  %1699 = vmatpush1.msra.mxu0 0.0
  %1700 = vmatprep.subr.mxu0 0.0
  %1701 = vmatpush1.msra.mxu0 0.0
  %1702 = vmatprep.subr.mxu0 0.0
  %1703 = vmatpush1.msra.mxu0 0.0
  %1704 = vmatprep.subr.mxu0 0.0
  %1705 = vmatpush1.msra.mxu0 0.0
  %1706 = vmatprep.subr.mxu0 0.0
  %1707 = vmatpush1.msra.mxu0 0.0
  %1708 = vmatprep.subr.mxu0 0.0
  %1709 = vmatpush1.msra.mxu0 0.0
  %1710 = vmatprep.subr.mxu0 0.0
  %1711 = vmatpush1.msra.mxu0 0.0
  %1712 = vmatprep.mubr.f32.mxu0 0.0
  %1713 = vmatmul.mubr.f32.gmra.mrb[0].mxu0 %v1637
  %v1714 = vpop.f32.mrb[0].mxu0
  %v1715 = vadd.f32 0.0, %v1714
  %v1716 = vpop.f32.mrb[0].mxu0
  %1717 = vmatprep.mubr.f32.mxu0 0.0
  %1718 = vmatmul.mubr.f32.gmra.mrb[0].mxu0 %v1640
  %v1719 = vpop.f32.mrb[0].mxu0
  %v1720 = vadd.f32 0.0, %v1719
  %v1721 = vpop.f32.mrb[0].mxu0
  %1722 = vmatprep.mubr.f32.mxu0 0.0
  %1723 = vmatmul.mubr.f32.gmra.mrb[0].mxu0 %v1643
  %v1724 = vpop.f32.mrb[0].mxu0
  %v1725 = vadd.f32 0.0, %v1724
  %v1726 = vpop.f32.mrb[0].mxu0
  %1727 = vmatprep.mubr.f32.mxu0 0.0
  %1728 = vmatmul.mubr.f32.gmra.mrb[0].mxu0 %v1646
  %v1729 = vpop.f32.mrb[0].mxu0
  %v1730 = vadd.f32 0.0, %v1729
  %v1731 = vpop.f32.mrb[0].mxu0
  %1732 = vdwg.mxu0
  %v1733 = vmul.f32 %v1715, 2.5
  %v1734 = vmul.f32 %v1720, 2.5
  %v1735 = vmul.f32 %v1725, 2.5
  %v1736 = vmul.f32 %v1730, 2.5
  %v1737 = vadd.f32 %v1733, %v591
  %v1738 = vadd.f32 %v1734, %v592
  %v1739 = vadd.f32 %v1735, %v593
  %v1740 = vadd.f32 %v1736, %v594
  %v1741 = vmul.f32 %v1632, %v1737
  %v1742 = vmul.f32 %v1633, %v1738
  %v1743 = vmul.f32 %v1634, %v1739
  %v1744 = vmul.f32 %v1635, %v1740
  %v1745 = vrot.slane %v1741, 1
  %v1746 = vrot.slane %v1742, 1
  %v1747 = vrot.slane %v1743, 1
  %v1748 = vrot.slane %v1744, 1
  %v1749 = vsel %vm628, %v1747, %v1748
  %v1750 = vsel %vm628, %v1746, %v1747
  %v1751 = vsel %vm628, %v1745, %v1746
  %v1752 = vsel %vm628, %v1748, %v1745
  %v1753 = vrot.slane %v1741, 7
  %v1754 = vrot.slane %v1742, 7
  %v1755 = vrot.slane %v1743, 7
  %v1756 = vrot.slane %v1744, 7
  %v1757 = vsel %vm637, %v1755, %v1756
  %v1758 = vsel %vm637, %v1754, %v1755
  %v1759 = vsel %vm637, %v1753, %v1754
  %v1760 = vsel %vm637, %v1756, %v1753
  %v1761 = vsel %vm608, %v1751, %v1760
  %v1762 = vsel %vm609, %v1750, %v1759
  %v1763 = vsel %vm610, %v1749, %v1758
  %v1764 = vsel %vm611, %v1752, %v1757
  %v1765 = vadd.f32 %v1741, %v1761
  %v1766 = vadd.f32 %v1742, %v1762
  %v1767 = vadd.f32 %v1743, %v1763
  %v1768 = vadd.f32 %v1744, %v1764
  %v1769 = vrot.slane %v1765, 2
  %v1770 = vrot.slane %v1766, 2
  %v1771 = vrot.slane %v1767, 2
  %v1772 = vrot.slane %v1768, 2
  %v1773 = vsel %vm654, %v1771, %v1772
  %v1774 = vsel %vm654, %v1770, %v1771
  %v1775 = vsel %vm654, %v1769, %v1770
  %v1776 = vsel %vm654, %v1772, %v1769
  %v1777 = vrot.slane %v1765, 6
  %v1778 = vrot.slane %v1766, 6
  %v1779 = vrot.slane %v1767, 6
  %v1780 = vrot.slane %v1768, 6
  %v1781 = vsel %vm663, %v1779, %v1780
  %v1782 = vsel %vm663, %v1778, %v1779
  %v1783 = vsel %vm663, %v1777, %v1778
  %v1784 = vsel %vm663, %v1780, %v1777
  %v1785 = vsel %vm616, %v1775, %v1784
  %v1786 = vsel %vm617, %v1774, %v1783
  %v1787 = vsel %vm618, %v1773, %v1782
  %v1788 = vsel %vm619, %v1776, %v1781
  %v1789 = vadd.f32 %v1765, %v1785
  %v1790 = vadd.f32 %v1766, %v1786
  %v1791 = vadd.f32 %v1767, %v1787
  %v1792 = vadd.f32 %v1768, %v1788
  %v1793 = vmul.f32 %v1789, %v1632
  %v1794 = vmul.f32 %v1790, %v1633
  %v1795 = vmul.f32 %v1791, %v1634
  %v1796 = vmul.f32 %v1792, %v1635
  %v1797 = vsub.f32 %v1737, %v1793
  %v1798 = vsub.f32 %v1738, %v1794
  %v1799 = vsub.f32 %v1739, %v1795
  %v1800 = vsub.f32 %v1740, %v1796
  %v1801 = vmul.f32 %v1797, 0.1
  %v1802 = vmul.f32 %v1798, 0.1
  %v1803 = vmul.f32 %v1799, 0.1
  %v1804 = vmul.f32 %v1800, 0.1
  %v1805 = vadd.f32 %v1632, %v1801
  %v1806 = vadd.f32 %v1633, %v1802
  %v1807 = vadd.f32 %v1634, %v1803
  %v1808 = vadd.f32 %v1635, %v1804
  %v1809 = vmul.f32 %v1805, %v1805
  %v1810 = vmul.f32 %v1806, %v1806
  %v1811 = vmul.f32 %v1807, %v1807
  %v1812 = vmul.f32 %v1808, %v1808
  %v1813 = vrot.slane %v1809, 1
  %v1814 = vrot.slane %v1810, 1
  %v1815 = vrot.slane %v1811, 1
  %v1816 = vrot.slane %v1812, 1
  %v1817 = vsel %vm628, %v1815, %v1816
  %v1818 = vsel %vm628, %v1814, %v1815
  %v1819 = vsel %vm628, %v1813, %v1814
  %v1820 = vsel %vm628, %v1816, %v1813
  %v1821 = vrot.slane %v1809, 7
  %v1822 = vrot.slane %v1810, 7
  %v1823 = vrot.slane %v1811, 7
  %v1824 = vrot.slane %v1812, 7
  %v1825 = vsel %vm637, %v1823, %v1824
  %v1826 = vsel %vm637, %v1822, %v1823
  %v1827 = vsel %vm637, %v1821, %v1822
  %v1828 = vsel %vm637, %v1824, %v1821
  %v1829 = vsel %vm608, %v1819, %v1828
  %v1830 = vsel %vm609, %v1818, %v1827
  %v1831 = vsel %vm610, %v1817, %v1826
  %v1832 = vsel %vm611, %v1820, %v1825
  %v1833 = vadd.f32 %v1809, %v1829
  %v1834 = vadd.f32 %v1810, %v1830
  %v1835 = vadd.f32 %v1811, %v1831
  %v1836 = vadd.f32 %v1812, %v1832
  %v1837 = vrot.slane %v1833, 2
  %v1838 = vrot.slane %v1834, 2
  %v1839 = vrot.slane %v1835, 2
  %v1840 = vrot.slane %v1836, 2
  %v1841 = vsel %vm654, %v1839, %v1840
  %v1842 = vsel %vm654, %v1838, %v1839
  %v1843 = vsel %vm654, %v1837, %v1838
  %v1844 = vsel %vm654, %v1840, %v1837
  %v1845 = vrot.slane %v1833, 6
  %v1846 = vrot.slane %v1834, 6
  %v1847 = vrot.slane %v1835, 6
  %v1848 = vrot.slane %v1836, 6
  %v1849 = vsel %vm663, %v1847, %v1848
  %v1850 = vsel %vm663, %v1846, %v1847
  %v1851 = vsel %vm663, %v1845, %v1846
  %v1852 = vsel %vm663, %v1848, %v1845
  %v1853 = vsel %vm616, %v1843, %v1852
  %v1854 = vsel %vm617, %v1842, %v1851
  %v1855 = vsel %vm618, %v1841, %v1850
  %v1856 = vsel %vm619, %v1844, %v1849
  %v1857 = vadd.f32 %v1833, %v1853
  %v1858 = vadd.f32 %v1834, %v1854
  %v1859 = vadd.f32 %v1835, %v1855
  %v1860 = vadd.f32 %v1836, %v1856
  %v1861 = vadd.f32 %v1857, 1e-06
  %v1862 = vadd.f32 %v1858, 1e-06
  %v1863 = vadd.f32 %v1859, 1e-06
  %v1864 = vadd.f32 %v1860, 1e-06
  %v1865 = vrsqrt.pop %v1861
  %v1866 = vrsqrt.pop %v1862
  %v1867 = vrsqrt.pop %v1863
  %v1868 = vrsqrt.pop %v1864
  %v1869 = vmul.f32 %v1805, %v1865
  %v1870 = vmul.f32 %v1806, %v1866
  %v1871 = vmul.f32 %v1807, %v1867
  %v1872 = vmul.f32 %v1808, %v1868
  %v1874 = vsel %vm53, %v1869, 0
  %v1877 = vsel %vm53, %v1870, 0
  %v1880 = vsel %vm53, %v1871, 0
  %v1883 = vsel %vm53, %v1872, 0
  %1885 = vmatprep.subr.mxu0 0.0
  %1886 = vmatpush1.msra.mxu0 %v45
  %1887 = vmatprep.subr.mxu0 0.0
  %1888 = vmatpush1.msra.mxu0 %v46
  %1889 = vmatprep.subr.mxu0 0.0
  %1890 = vmatpush1.msra.mxu0 %v47
  %1891 = vmatprep.subr.mxu0 0.0
  %1892 = vmatpush1.msra.mxu0 %v48
  %1893 = vmatprep.subr.mxu0 0.0
  %1894 = vmatpush1.msra.mxu0 0.0
  %1895 = vmatprep.subr.mxu0 0.0
  %1896 = vmatpush1.msra.mxu0 0.0
  %1897 = vmatprep.subr.mxu0 0.0
  %1898 = vmatpush1.msra.mxu0 0.0
  %1899 = vmatprep.subr.mxu0 0.0
  %1900 = vmatpush1.msra.mxu0 0.0
  %1901 = vmatprep.subr.mxu0 0.0
  %1902 = vmatpush1.msra.mxu0 0.0
  %1903 = vmatprep.subr.mxu0 0.0
  %1904 = vmatpush1.msra.mxu0 0.0
  %1905 = vmatprep.subr.mxu0 0.0
  %1906 = vmatpush1.msra.mxu0 0.0
  %1907 = vmatprep.subr.mxu0 0.0
  %1908 = vmatpush1.msra.mxu0 0.0
  %1909 = vmatprep.subr.mxu0 0.0
  %1910 = vmatpush1.msra.mxu0 0.0
  %1911 = vmatprep.subr.mxu0 0.0
  %1912 = vmatpush1.msra.mxu0 0.0
  %1913 = vmatprep.subr.mxu0 0.0
  %1914 = vmatpush1.msra.mxu0 0.0
  %1915 = vmatprep.subr.mxu0 0.0
  %1916 = vmatpush1.msra.mxu0 0.0
  %1917 = vmatprep.subr.mxu0 0.0
  %1918 = vmatpush1.msra.mxu0 0.0
  %1919 = vmatprep.subr.mxu0 0.0
  %1920 = vmatpush1.msra.mxu0 0.0
  %1921 = vmatprep.subr.mxu0 0.0
  %1922 = vmatpush1.msra.mxu0 0.0
  %1923 = vmatprep.subr.mxu0 0.0
  %1924 = vmatpush1.msra.mxu0 0.0
  %1925 = vmatprep.subr.mxu0 0.0
  %1926 = vmatpush1.msra.mxu0 0.0
  %1927 = vmatprep.subr.mxu0 0.0
  %1928 = vmatpush1.msra.mxu0 0.0
  %1929 = vmatprep.subr.mxu0 0.0
  %1930 = vmatpush1.msra.mxu0 0.0
  %1931 = vmatprep.subr.mxu0 0.0
  %1932 = vmatpush1.msra.mxu0 0.0
  %1933 = vmatprep.subr.mxu0 0.0
  %1934 = vmatpush1.msra.mxu0 0.0
  %1935 = vmatprep.subr.mxu0 0.0
  %1936 = vmatpush1.msra.mxu0 0.0
  %1937 = vmatprep.subr.mxu0 0.0
  %1938 = vmatpush1.msra.mxu0 0.0
  %1939 = vmatprep.subr.mxu0 0.0
  %1940 = vmatpush1.msra.mxu0 0.0
  %1941 = vmatprep.subr.mxu0 0.0
  %1942 = vmatpush1.msra.mxu0 0.0
  %1943 = vmatprep.subr.mxu0 0.0
  %1944 = vmatpush1.msra.mxu0 0.0
  %1945 = vmatprep.subr.mxu0 0.0
  %1946 = vmatpush1.msra.mxu0 0.0
  %1947 = vmatprep.subr.mxu0 0.0
  %1948 = vmatpush1.msra.mxu0 0.0
  %1949 = vmatprep.mubr.f32.mxu0 0.0
  %1950 = vmatmul.mubr.f32.gmra.mrb[0].mxu0 %v1874
  %v1951 = vpop.f32.mrb[0].mxu0
  %v1952 = vadd.f32 0.0, %v1951
  %v1953 = vpop.f32.mrb[0].mxu0
  %1954 = vmatprep.mubr.f32.mxu0 0.0
  %1955 = vmatmul.mubr.f32.gmra.mrb[0].mxu0 %v1877
  %v1956 = vpop.f32.mrb[0].mxu0
  %v1957 = vadd.f32 0.0, %v1956
  %v1958 = vpop.f32.mrb[0].mxu0
  %1959 = vmatprep.mubr.f32.mxu0 0.0
  %1960 = vmatmul.mubr.f32.gmra.mrb[0].mxu0 %v1880
  %v1961 = vpop.f32.mrb[0].mxu0
  %v1962 = vadd.f32 0.0, %v1961
  %v1963 = vpop.f32.mrb[0].mxu0
  %1964 = vmatprep.mubr.f32.mxu0 0.0
  %1965 = vmatmul.mubr.f32.gmra.mrb[0].mxu0 %v1883
  %v1966 = vpop.f32.mrb[0].mxu0
  %v1967 = vadd.f32 0.0, %v1966
  %v1968 = vpop.f32.mrb[0].mxu0
  %1969 = vdwg.mxu0
  %v1970 = vmul.f32 %v1952, 2.5
  %v1971 = vmul.f32 %v1957, 2.5
  %v1972 = vmul.f32 %v1962, 2.5
  %v1973 = vmul.f32 %v1967, 2.5
  %v1974 = vadd.f32 %v1970, %v591
  %v1975 = vadd.f32 %v1971, %v592
  %v1976 = vadd.f32 %v1972, %v593
  %v1977 = vadd.f32 %v1973, %v594
  %v1978 = vmul.f32 %v1869, %v1974
  %v1979 = vmul.f32 %v1870, %v1975
  %v1980 = vmul.f32 %v1871, %v1976
  %v1981 = vmul.f32 %v1872, %v1977
  %v1982 = vrot.slane %v1978, 1
  %v1983 = vrot.slane %v1979, 1
  %v1984 = vrot.slane %v1980, 1
  %v1985 = vrot.slane %v1981, 1
  %v1986 = vsel %vm628, %v1984, %v1985
  %v1987 = vsel %vm628, %v1983, %v1984
  %v1988 = vsel %vm628, %v1982, %v1983
  %v1989 = vsel %vm628, %v1985, %v1982
  %v1990 = vrot.slane %v1978, 7
  %v1991 = vrot.slane %v1979, 7
  %v1992 = vrot.slane %v1980, 7
  %v1993 = vrot.slane %v1981, 7
  %v1994 = vsel %vm637, %v1992, %v1993
  %v1995 = vsel %vm637, %v1991, %v1992
  %v1996 = vsel %vm637, %v1990, %v1991
  %v1997 = vsel %vm637, %v1993, %v1990
  %v1998 = vsel %vm608, %v1988, %v1997
  %v1999 = vsel %vm609, %v1987, %v1996
  %v2000 = vsel %vm610, %v1986, %v1995
  %v2001 = vsel %vm611, %v1989, %v1994
  %v2002 = vadd.f32 %v1978, %v1998
  %v2003 = vadd.f32 %v1979, %v1999
  %v2004 = vadd.f32 %v1980, %v2000
  %v2005 = vadd.f32 %v1981, %v2001
  %v2006 = vrot.slane %v2002, 2
  %v2007 = vrot.slane %v2003, 2
  %v2008 = vrot.slane %v2004, 2
  %v2009 = vrot.slane %v2005, 2
  %v2010 = vsel %vm654, %v2008, %v2009
  %v2011 = vsel %vm654, %v2007, %v2008
  %v2012 = vsel %vm654, %v2006, %v2007
  %v2013 = vsel %vm654, %v2009, %v2006
  %v2014 = vrot.slane %v2002, 6
  %v2015 = vrot.slane %v2003, 6
  %v2016 = vrot.slane %v2004, 6
  %v2017 = vrot.slane %v2005, 6
  %v2018 = vsel %vm663, %v2016, %v2017
  %v2019 = vsel %vm663, %v2015, %v2016
  %v2020 = vsel %vm663, %v2014, %v2015
  %v2021 = vsel %vm663, %v2017, %v2014
  %v2022 = vsel %vm616, %v2012, %v2021
  %v2023 = vsel %vm617, %v2011, %v2020
  %v2024 = vsel %vm618, %v2010, %v2019
  %v2025 = vsel %vm619, %v2013, %v2018
  %v2026 = vadd.f32 %v2002, %v2022
  %v2027 = vadd.f32 %v2003, %v2023
  %v2028 = vadd.f32 %v2004, %v2024
  %v2029 = vadd.f32 %v2005, %v2025
  %v2030 = vmul.f32 %v2026, %v1869
  %v2031 = vmul.f32 %v2027, %v1870
  %v2032 = vmul.f32 %v2028, %v1871
  %v2033 = vmul.f32 %v2029, %v1872
  %v2034 = vsub.f32 %v1974, %v2030
  %v2035 = vsub.f32 %v1975, %v2031
  %v2036 = vsub.f32 %v1976, %v2032
  %v2037 = vsub.f32 %v1977, %v2033
  %v2038 = vmul.f32 %v2034, 0.1
  %v2039 = vmul.f32 %v2035, 0.1
  %v2040 = vmul.f32 %v2036, 0.1
  %v2041 = vmul.f32 %v2037, 0.1
  %v2042 = vadd.f32 %v1869, %v2038
  %v2043 = vadd.f32 %v1870, %v2039
  %v2044 = vadd.f32 %v1871, %v2040
  %v2045 = vadd.f32 %v1872, %v2041
  %v2046 = vmul.f32 %v2042, %v2042
  %v2047 = vmul.f32 %v2043, %v2043
  %v2048 = vmul.f32 %v2044, %v2044
  %v2049 = vmul.f32 %v2045, %v2045
  %v2050 = vrot.slane %v2046, 1
  %v2051 = vrot.slane %v2047, 1
  %v2052 = vrot.slane %v2048, 1
  %v2053 = vrot.slane %v2049, 1
  %v2054 = vsel %vm628, %v2052, %v2053
  %v2055 = vsel %vm628, %v2051, %v2052
  %v2056 = vsel %vm628, %v2050, %v2051
  %v2057 = vsel %vm628, %v2053, %v2050
  %v2058 = vrot.slane %v2046, 7
  %v2059 = vrot.slane %v2047, 7
  %v2060 = vrot.slane %v2048, 7
  %v2061 = vrot.slane %v2049, 7
  %v2062 = vsel %vm637, %v2060, %v2061
  %v2063 = vsel %vm637, %v2059, %v2060
  %v2064 = vsel %vm637, %v2058, %v2059
  %v2065 = vsel %vm637, %v2061, %v2058
  %v2066 = vsel %vm608, %v2056, %v2065
  %v2067 = vsel %vm609, %v2055, %v2064
  %v2068 = vsel %vm610, %v2054, %v2063
  %v2069 = vsel %vm611, %v2057, %v2062
  %v2070 = vadd.f32 %v2046, %v2066
  %v2071 = vadd.f32 %v2047, %v2067
  %v2072 = vadd.f32 %v2048, %v2068
  %v2073 = vadd.f32 %v2049, %v2069
  %v2074 = vrot.slane %v2070, 2
  %v2075 = vrot.slane %v2071, 2
  %v2076 = vrot.slane %v2072, 2
  %v2077 = vrot.slane %v2073, 2
  %v2078 = vsel %vm654, %v2076, %v2077
  %v2079 = vsel %vm654, %v2075, %v2076
  %v2080 = vsel %vm654, %v2074, %v2075
  %v2081 = vsel %vm654, %v2077, %v2074
  %v2082 = vrot.slane %v2070, 6
  %v2083 = vrot.slane %v2071, 6
  %v2084 = vrot.slane %v2072, 6
  %v2085 = vrot.slane %v2073, 6
  %v2086 = vsel %vm663, %v2084, %v2085
  %v2087 = vsel %vm663, %v2083, %v2084
  %v2088 = vsel %vm663, %v2082, %v2083
  %v2089 = vsel %vm663, %v2085, %v2082
  %v2090 = vsel %vm616, %v2080, %v2089
  %v2091 = vsel %vm617, %v2079, %v2088
  %v2092 = vsel %vm618, %v2078, %v2087
  %v2093 = vsel %vm619, %v2081, %v2086
  %v2094 = vadd.f32 %v2070, %v2090
  %v2095 = vadd.f32 %v2071, %v2091
  %v2096 = vadd.f32 %v2072, %v2092
  %v2097 = vadd.f32 %v2073, %v2093
  %v2098 = vadd.f32 %v2094, 1e-06
  %v2099 = vadd.f32 %v2095, 1e-06
  %v2100 = vadd.f32 %v2096, 1e-06
  %v2101 = vadd.f32 %v2097, 1e-06
  %v2102 = vrsqrt.pop %v2098
  %v2103 = vrsqrt.pop %v2099
  %v2104 = vrsqrt.pop %v2100
  %v2105 = vrsqrt.pop %v2101
  %v2106 = vmul.f32 %v2042, %v2102
  %v2107 = vmul.f32 %v2043, %v2103
  %v2108 = vmul.f32 %v2044, %v2104
  %v2109 = vmul.f32 %v2045, %v2105
  %v2111 = vsel %vm53, %v2106, 0
  %v2114 = vsel %vm53, %v2107, 0
  %v2117 = vsel %vm53, %v2108, 0
  %v2120 = vsel %vm53, %v2109, 0
  %2122 = vmatprep.subr.mxu0 0.0
  %2123 = vmatpush1.msra.mxu0 %v45
  %2124 = vmatprep.subr.mxu0 0.0
  %2125 = vmatpush1.msra.mxu0 %v46
  %2126 = vmatprep.subr.mxu0 0.0
  %2127 = vmatpush1.msra.mxu0 %v47
  %2128 = vmatprep.subr.mxu0 0.0
  %2129 = vmatpush1.msra.mxu0 %v48
  %2130 = vmatprep.subr.mxu0 0.0
  %2131 = vmatpush1.msra.mxu0 0.0
  %2132 = vmatprep.subr.mxu0 0.0
  %2133 = vmatpush1.msra.mxu0 0.0
  %2134 = vmatprep.subr.mxu0 0.0
  %2135 = vmatpush1.msra.mxu0 0.0
  %2136 = vmatprep.subr.mxu0 0.0
  %2137 = vmatpush1.msra.mxu0 0.0
  %2138 = vmatprep.subr.mxu0 0.0
  %2139 = vmatpush1.msra.mxu0 0.0
  %2140 = vmatprep.subr.mxu0 0.0
  %2141 = vmatpush1.msra.mxu0 0.0
  %2142 = vmatprep.subr.mxu0 0.0
  %2143 = vmatpush1.msra.mxu0 0.0
  %2144 = vmatprep.subr.mxu0 0.0
  %2145 = vmatpush1.msra.mxu0 0.0
  %2146 = vmatprep.subr.mxu0 0.0
  %2147 = vmatpush1.msra.mxu0 0.0
  %2148 = vmatprep.subr.mxu0 0.0
  %2149 = vmatpush1.msra.mxu0 0.0
  %2150 = vmatprep.subr.mxu0 0.0
  %2151 = vmatpush1.msra.mxu0 0.0
  %2152 = vmatprep.subr.mxu0 0.0
  %2153 = vmatpush1.msra.mxu0 0.0
  %2154 = vmatprep.subr.mxu0 0.0
  %2155 = vmatpush1.msra.mxu0 0.0
  %2156 = vmatprep.subr.mxu0 0.0
  %2157 = vmatpush1.msra.mxu0 0.0
  %2158 = vmatprep.subr.mxu0 0.0
  %2159 = vmatpush1.msra.mxu0 0.0
  %2160 = vmatprep.subr.mxu0 0.0
  %2161 = vmatpush1.msra.mxu0 0.0
  %2162 = vmatprep.subr.mxu0 0.0
  %2163 = vmatpush1.msra.mxu0 0.0
  %2164 = vmatprep.subr.mxu0 0.0
  %2165 = vmatpush1.msra.mxu0 0.0
  %2166 = vmatprep.subr.mxu0 0.0
  %2167 = vmatpush1.msra.mxu0 0.0
  %2168 = vmatprep.subr.mxu0 0.0
  %2169 = vmatpush1.msra.mxu0 0.0
  %2170 = vmatprep.subr.mxu0 0.0
  %2171 = vmatpush1.msra.mxu0 0.0
  %2172 = vmatprep.subr.mxu0 0.0
  %2173 = vmatpush1.msra.mxu0 0.0
  %2174 = vmatprep.subr.mxu0 0.0
  %2175 = vmatpush1.msra.mxu0 0.0
  %2176 = vmatprep.subr.mxu0 0.0
  %2177 = vmatpush1.msra.mxu0 0.0
  %2178 = vmatprep.subr.mxu0 0.0
  %2179 = vmatpush1.msra.mxu0 0.0
  %2180 = vmatprep.subr.mxu0 0.0
  %2181 = vmatpush1.msra.mxu0 0.0
  %2182 = vmatprep.subr.mxu0 0.0
  %2183 = vmatpush1.msra.mxu0 0.0
  %2184 = vmatprep.subr.mxu0 0.0
  %2185 = vmatpush1.msra.mxu0 0.0
  %2186 = vmatprep.mubr.f32.mxu0 0.0
  %2187 = vmatmul.mubr.f32.gmra.mrb[0].mxu0 %v2111
  %v2188 = vpop.f32.mrb[0].mxu0
  %v2189 = vadd.f32 0.0, %v2188
  %v2190 = vpop.f32.mrb[0].mxu0
  %2191 = vmatprep.mubr.f32.mxu0 0.0
  %2192 = vmatmul.mubr.f32.gmra.mrb[0].mxu0 %v2114
  %v2193 = vpop.f32.mrb[0].mxu0
  %v2194 = vadd.f32 0.0, %v2193
  %v2195 = vpop.f32.mrb[0].mxu0
  %2196 = vmatprep.mubr.f32.mxu0 0.0
  %2197 = vmatmul.mubr.f32.gmra.mrb[0].mxu0 %v2117
  %v2198 = vpop.f32.mrb[0].mxu0
  %v2199 = vadd.f32 0.0, %v2198
  %v2200 = vpop.f32.mrb[0].mxu0
  %2201 = vmatprep.mubr.f32.mxu0 0.0
  %2202 = vmatmul.mubr.f32.gmra.mrb[0].mxu0 %v2120
  %v2203 = vpop.f32.mrb[0].mxu0
  %v2204 = vadd.f32 0.0, %v2203
  %v2205 = vpop.f32.mrb[0].mxu0
  %2206 = vdwg.mxu0
  %v2207 = vmul.f32 %v2189, 2.5
  %v2208 = vmul.f32 %v2194, 2.5
  %v2209 = vmul.f32 %v2199, 2.5
  %v2210 = vmul.f32 %v2204, 2.5
  %v2211 = vadd.f32 %v2207, %v591
  %v2212 = vadd.f32 %v2208, %v592
  %v2213 = vadd.f32 %v2209, %v593
  %v2214 = vadd.f32 %v2210, %v594
  %v2215 = vmul.f32 %v2106, %v2211
  %v2216 = vmul.f32 %v2107, %v2212
  %v2217 = vmul.f32 %v2108, %v2213
  %v2218 = vmul.f32 %v2109, %v2214
  %v2219 = vrot.slane %v2215, 1
  %v2220 = vrot.slane %v2216, 1
  %v2221 = vrot.slane %v2217, 1
  %v2222 = vrot.slane %v2218, 1
  %v2223 = vsel %vm628, %v2221, %v2222
  %v2224 = vsel %vm628, %v2220, %v2221
  %v2225 = vsel %vm628, %v2219, %v2220
  %v2226 = vsel %vm628, %v2222, %v2219
  %v2227 = vrot.slane %v2215, 7
  %v2228 = vrot.slane %v2216, 7
  %v2229 = vrot.slane %v2217, 7
  %v2230 = vrot.slane %v2218, 7
  %v2231 = vsel %vm637, %v2229, %v2230
  %v2232 = vsel %vm637, %v2228, %v2229
  %v2233 = vsel %vm637, %v2227, %v2228
  %v2234 = vsel %vm637, %v2230, %v2227
  %v2235 = vsel %vm608, %v2225, %v2234
  %v2236 = vsel %vm609, %v2224, %v2233
  %v2237 = vsel %vm610, %v2223, %v2232
  %v2238 = vsel %vm611, %v2226, %v2231
  %v2239 = vadd.f32 %v2215, %v2235
  %v2240 = vadd.f32 %v2216, %v2236
  %v2241 = vadd.f32 %v2217, %v2237
  %v2242 = vadd.f32 %v2218, %v2238
  %v2243 = vrot.slane %v2239, 2
  %v2244 = vrot.slane %v2240, 2
  %v2245 = vrot.slane %v2241, 2
  %v2246 = vrot.slane %v2242, 2
  %v2247 = vsel %vm654, %v2245, %v2246
  %v2248 = vsel %vm654, %v2244, %v2245
  %v2249 = vsel %vm654, %v2243, %v2244
  %v2250 = vsel %vm654, %v2246, %v2243
  %v2251 = vrot.slane %v2239, 6
  %v2252 = vrot.slane %v2240, 6
  %v2253 = vrot.slane %v2241, 6
  %v2254 = vrot.slane %v2242, 6
  %v2255 = vsel %vm663, %v2253, %v2254
  %v2256 = vsel %vm663, %v2252, %v2253
  %v2257 = vsel %vm663, %v2251, %v2252
  %v2258 = vsel %vm663, %v2254, %v2251
  %v2259 = vsel %vm616, %v2249, %v2258
  %v2260 = vsel %vm617, %v2248, %v2257
  %v2261 = vsel %vm618, %v2247, %v2256
  %v2262 = vsel %vm619, %v2250, %v2255
  %v2263 = vadd.f32 %v2239, %v2259
  %v2264 = vadd.f32 %v2240, %v2260
  %v2265 = vadd.f32 %v2241, %v2261
  %v2266 = vadd.f32 %v2242, %v2262
  %v2267 = vmul.f32 %v2263, %v2106
  %v2268 = vmul.f32 %v2264, %v2107
  %v2269 = vmul.f32 %v2265, %v2108
  %v2270 = vmul.f32 %v2266, %v2109
  %v2271 = vsub.f32 %v2211, %v2267
  %v2272 = vsub.f32 %v2212, %v2268
  %v2273 = vsub.f32 %v2213, %v2269
  %v2274 = vsub.f32 %v2214, %v2270
  %v2275 = vmul.f32 %v2271, 0.1
  %v2276 = vmul.f32 %v2272, 0.1
  %v2277 = vmul.f32 %v2273, 0.1
  %v2278 = vmul.f32 %v2274, 0.1
  %v2279 = vadd.f32 %v2106, %v2275
  %v2280 = vadd.f32 %v2107, %v2276
  %v2281 = vadd.f32 %v2108, %v2277
  %v2282 = vadd.f32 %v2109, %v2278
  %v2283 = vmul.f32 %v2279, %v2279
  %v2284 = vmul.f32 %v2280, %v2280
  %v2285 = vmul.f32 %v2281, %v2281
  %v2286 = vmul.f32 %v2282, %v2282
  %v2287 = vrot.slane %v2283, 1
  %v2288 = vrot.slane %v2284, 1
  %v2289 = vrot.slane %v2285, 1
  %v2290 = vrot.slane %v2286, 1
  %v2291 = vsel %vm628, %v2289, %v2290
  %v2292 = vsel %vm628, %v2288, %v2289
  %v2293 = vsel %vm628, %v2287, %v2288
  %v2294 = vsel %vm628, %v2290, %v2287
  %v2295 = vrot.slane %v2283, 7
  %v2296 = vrot.slane %v2284, 7
  %v2297 = vrot.slane %v2285, 7
  %v2298 = vrot.slane %v2286, 7
  %v2299 = vsel %vm637, %v2297, %v2298
  %v2300 = vsel %vm637, %v2296, %v2297
  %v2301 = vsel %vm637, %v2295, %v2296
  %v2302 = vsel %vm637, %v2298, %v2295
  %v2303 = vsel %vm608, %v2293, %v2302
  %v2304 = vsel %vm609, %v2292, %v2301
  %v2305 = vsel %vm610, %v2291, %v2300
  %v2306 = vsel %vm611, %v2294, %v2299
  %v2307 = vadd.f32 %v2283, %v2303
  %v2308 = vadd.f32 %v2284, %v2304
  %v2309 = vadd.f32 %v2285, %v2305
  %v2310 = vadd.f32 %v2286, %v2306
  %v2311 = vrot.slane %v2307, 2
  %v2312 = vrot.slane %v2308, 2
  %v2313 = vrot.slane %v2309, 2
  %v2314 = vrot.slane %v2310, 2
  %v2315 = vsel %vm654, %v2313, %v2314
  %v2316 = vsel %vm654, %v2312, %v2313
  %v2317 = vsel %vm654, %v2311, %v2312
  %v2318 = vsel %vm654, %v2314, %v2311
  %v2319 = vrot.slane %v2307, 6
  %v2320 = vrot.slane %v2308, 6
  %v2321 = vrot.slane %v2309, 6
  %v2322 = vrot.slane %v2310, 6
  %v2323 = vsel %vm663, %v2321, %v2322
  %v2324 = vsel %vm663, %v2320, %v2321
  %v2325 = vsel %vm663, %v2319, %v2320
  %v2326 = vsel %vm663, %v2322, %v2319
  %v2327 = vsel %vm616, %v2317, %v2326
  %v2328 = vsel %vm617, %v2316, %v2325
  %v2329 = vsel %vm618, %v2315, %v2324
  %v2330 = vsel %vm619, %v2318, %v2323
  %v2331 = vadd.f32 %v2307, %v2327
  %v2332 = vadd.f32 %v2308, %v2328
  %v2333 = vadd.f32 %v2309, %v2329
  %v2334 = vadd.f32 %v2310, %v2330
  %v2335 = vadd.f32 %v2331, 1e-06
  %v2336 = vadd.f32 %v2332, 1e-06
  %v2337 = vadd.f32 %v2333, 1e-06
  %v2338 = vadd.f32 %v2334, 1e-06
  %v2339 = vrsqrt.pop %v2335
  %v2340 = vrsqrt.pop %v2336
  %v2341 = vrsqrt.pop %v2337
  %v2342 = vrsqrt.pop %v2338
  %v2343 = vmul.f32 %v2279, %v2339
  %v2344 = vmul.f32 %v2280, %v2340
  %v2345 = vmul.f32 %v2281, %v2341
  %v2346 = vmul.f32 %v2282, %v2342
  %v2348 = vsel %vm53, %v2343, 0
  %v2351 = vsel %vm53, %v2344, 0
  %v2354 = vsel %vm53, %v2345, 0
  %v2357 = vsel %vm53, %v2346, 0
  %2359 = vmatprep.subr.mxu0 0.0
  %2360 = vmatpush1.msra.mxu0 %v45
  %2361 = vmatprep.subr.mxu0 0.0
  %2362 = vmatpush1.msra.mxu0 %v46
  %2363 = vmatprep.subr.mxu0 0.0
  %2364 = vmatpush1.msra.mxu0 %v47
  %2365 = vmatprep.subr.mxu0 0.0
  %2366 = vmatpush1.msra.mxu0 %v48
  %2367 = vmatprep.subr.mxu0 0.0
  %2368 = vmatpush1.msra.mxu0 0.0
  %2369 = vmatprep.subr.mxu0 0.0
  %2370 = vmatpush1.msra.mxu0 0.0
  %2371 = vmatprep.subr.mxu0 0.0
  %2372 = vmatpush1.msra.mxu0 0.0
  %2373 = vmatprep.subr.mxu0 0.0
  %2374 = vmatpush1.msra.mxu0 0.0
  %2375 = vmatprep.subr.mxu0 0.0
  %2376 = vmatpush1.msra.mxu0 0.0
  %2377 = vmatprep.subr.mxu0 0.0
  %2378 = vmatpush1.msra.mxu0 0.0
  %2379 = vmatprep.subr.mxu0 0.0
  %2380 = vmatpush1.msra.mxu0 0.0
  %2381 = vmatprep.subr.mxu0 0.0
  %2382 = vmatpush1.msra.mxu0 0.0
  %2383 = vmatprep.subr.mxu0 0.0
  %2384 = vmatpush1.msra.mxu0 0.0
  %2385 = vmatprep.subr.mxu0 0.0
  %2386 = vmatpush1.msra.mxu0 0.0
  %2387 = vmatprep.subr.mxu0 0.0
  %2388 = vmatpush1.msra.mxu0 0.0
  %2389 = vmatprep.subr.mxu0 0.0
  %2390 = vmatpush1.msra.mxu0 0.0
  %2391 = vmatprep.subr.mxu0 0.0
  %2392 = vmatpush1.msra.mxu0 0.0
  %2393 = vmatprep.subr.mxu0 0.0
  %2394 = vmatpush1.msra.mxu0 0.0
  %2395 = vmatprep.subr.mxu0 0.0
  %2396 = vmatpush1.msra.mxu0 0.0
  %2397 = vmatprep.subr.mxu0 0.0
  %2398 = vmatpush1.msra.mxu0 0.0
  %2399 = vmatprep.subr.mxu0 0.0
  %2400 = vmatpush1.msra.mxu0 0.0
  %2401 = vmatprep.subr.mxu0 0.0
  %2402 = vmatpush1.msra.mxu0 0.0
  %2403 = vmatprep.subr.mxu0 0.0
  %2404 = vmatpush1.msra.mxu0 0.0
  %2405 = vmatprep.subr.mxu0 0.0
  %2406 = vmatpush1.msra.mxu0 0.0
  %2407 = vmatprep.subr.mxu0 0.0
  %2408 = vmatpush1.msra.mxu0 0.0
  %2409 = vmatprep.subr.mxu0 0.0
  %2410 = vmatpush1.msra.mxu0 0.0
  %2411 = vmatprep.subr.mxu0 0.0
  %2412 = vmatpush1.msra.mxu0 0.0
  %2413 = vmatprep.subr.mxu0 0.0
  %2414 = vmatpush1.msra.mxu0 0.0
  %2415 = vmatprep.subr.mxu0 0.0
  %2416 = vmatpush1.msra.mxu0 0.0
  %2417 = vmatprep.subr.mxu0 0.0
  %2418 = vmatpush1.msra.mxu0 0.0
  %2419 = vmatprep.subr.mxu0 0.0
  %2420 = vmatpush1.msra.mxu0 0.0
  %2421 = vmatprep.subr.mxu0 0.0
  %2422 = vmatpush1.msra.mxu0 0.0
  %2423 = vmatprep.mubr.f32.mxu0 0.0
  %2424 = vmatmul.mubr.f32.gmra.mrb[0].mxu0 %v2348
  %v2425 = vpop.f32.mrb[0].mxu0
  %v2426 = vadd.f32 0.0, %v2425
  %v2427 = vpop.f32.mrb[0].mxu0
  %2428 = vmatprep.mubr.f32.mxu0 0.0
  %2429 = vmatmul.mubr.f32.gmra.mrb[0].mxu0 %v2351
  %v2430 = vpop.f32.mrb[0].mxu0
  %v2431 = vadd.f32 0.0, %v2430
  %v2432 = vpop.f32.mrb[0].mxu0
  %2433 = vmatprep.mubr.f32.mxu0 0.0
  %2434 = vmatmul.mubr.f32.gmra.mrb[0].mxu0 %v2354
  %v2435 = vpop.f32.mrb[0].mxu0
  %v2436 = vadd.f32 0.0, %v2435
  %v2437 = vpop.f32.mrb[0].mxu0
  %2438 = vmatprep.mubr.f32.mxu0 0.0
  %2439 = vmatmul.mubr.f32.gmra.mrb[0].mxu0 %v2357
  %v2440 = vpop.f32.mrb[0].mxu0
  %v2441 = vadd.f32 0.0, %v2440
  %v2442 = vpop.f32.mrb[0].mxu0
  %2443 = vdwg.mxu0
  %v2444 = vmul.f32 %v2426, 2.5
  %v2445 = vmul.f32 %v2431, 2.5
  %v2446 = vmul.f32 %v2436, 2.5
  %v2447 = vmul.f32 %v2441, 2.5
  %v2448 = vadd.f32 %v2444, %v591
  %v2449 = vadd.f32 %v2445, %v592
  %v2450 = vadd.f32 %v2446, %v593
  %v2451 = vadd.f32 %v2447, %v594
  %v2452 = vmul.f32 %v2343, %v2448
  %v2453 = vmul.f32 %v2344, %v2449
  %v2454 = vmul.f32 %v2345, %v2450
  %v2455 = vmul.f32 %v2346, %v2451
  %v2456 = vrot.slane %v2452, 1
  %v2457 = vrot.slane %v2453, 1
  %v2458 = vrot.slane %v2454, 1
  %v2459 = vrot.slane %v2455, 1
  %v2460 = vsel %vm628, %v2458, %v2459
  %v2461 = vsel %vm628, %v2457, %v2458
  %v2462 = vsel %vm628, %v2456, %v2457
  %v2463 = vsel %vm628, %v2459, %v2456
  %v2464 = vrot.slane %v2452, 7
  %v2465 = vrot.slane %v2453, 7
  %v2466 = vrot.slane %v2454, 7
  %v2467 = vrot.slane %v2455, 7
  %v2468 = vsel %vm637, %v2466, %v2467
  %v2469 = vsel %vm637, %v2465, %v2466
  %v2470 = vsel %vm637, %v2464, %v2465
  %v2471 = vsel %vm637, %v2467, %v2464
  %v2472 = vsel %vm608, %v2462, %v2471
  %v2473 = vsel %vm609, %v2461, %v2470
  %v2474 = vsel %vm610, %v2460, %v2469
  %v2475 = vsel %vm611, %v2463, %v2468
  %v2476 = vadd.f32 %v2452, %v2472
  %v2477 = vadd.f32 %v2453, %v2473
  %v2478 = vadd.f32 %v2454, %v2474
  %v2479 = vadd.f32 %v2455, %v2475
  %v2480 = vrot.slane %v2476, 2
  %v2481 = vrot.slane %v2477, 2
  %v2482 = vrot.slane %v2478, 2
  %v2483 = vrot.slane %v2479, 2
  %v2484 = vsel %vm654, %v2482, %v2483
  %v2485 = vsel %vm654, %v2481, %v2482
  %v2486 = vsel %vm654, %v2480, %v2481
  %v2487 = vsel %vm654, %v2483, %v2480
  %v2488 = vrot.slane %v2476, 6
  %v2489 = vrot.slane %v2477, 6
  %v2490 = vrot.slane %v2478, 6
  %v2491 = vrot.slane %v2479, 6
  %v2492 = vsel %vm663, %v2490, %v2491
  %v2493 = vsel %vm663, %v2489, %v2490
  %v2494 = vsel %vm663, %v2488, %v2489
  %v2495 = vsel %vm663, %v2491, %v2488
  %v2496 = vsel %vm616, %v2486, %v2495
  %v2497 = vsel %vm617, %v2485, %v2494
  %v2498 = vsel %vm618, %v2484, %v2493
  %v2499 = vsel %vm619, %v2487, %v2492
  %v2500 = vadd.f32 %v2476, %v2496
  %v2501 = vadd.f32 %v2477, %v2497
  %v2502 = vadd.f32 %v2478, %v2498
  %v2503 = vadd.f32 %v2479, %v2499
  %v2504 = vmul.f32 %v2500, %v2343
  %v2505 = vmul.f32 %v2501, %v2344
  %v2506 = vmul.f32 %v2502, %v2345
  %v2507 = vmul.f32 %v2503, %v2346
  %v2508 = vsub.f32 %v2448, %v2504
  %v2509 = vsub.f32 %v2449, %v2505
  %v2510 = vsub.f32 %v2450, %v2506
  %v2511 = vsub.f32 %v2451, %v2507
  %v2512 = vmul.f32 %v2508, 0.1
  %v2513 = vmul.f32 %v2509, 0.1
  %v2514 = vmul.f32 %v2510, 0.1
  %v2515 = vmul.f32 %v2511, 0.1
  %v2516 = vadd.f32 %v2343, %v2512
  %v2517 = vadd.f32 %v2344, %v2513
  %v2518 = vadd.f32 %v2345, %v2514
  %v2519 = vadd.f32 %v2346, %v2515
  %v2520 = vmul.f32 %v2516, %v2516
  %v2521 = vmul.f32 %v2517, %v2517
  %v2522 = vmul.f32 %v2518, %v2518
  %v2523 = vmul.f32 %v2519, %v2519
  %v2524 = vrot.slane %v2520, 1
  %v2525 = vrot.slane %v2521, 1
  %v2526 = vrot.slane %v2522, 1
  %v2527 = vrot.slane %v2523, 1
  %v2528 = vsel %vm628, %v2526, %v2527
  %v2529 = vsel %vm628, %v2525, %v2526
  %v2530 = vsel %vm628, %v2524, %v2525
  %v2531 = vsel %vm628, %v2527, %v2524
  %v2532 = vrot.slane %v2520, 7
  %v2533 = vrot.slane %v2521, 7
  %v2534 = vrot.slane %v2522, 7
  %v2535 = vrot.slane %v2523, 7
  %v2536 = vsel %vm637, %v2534, %v2535
  %v2537 = vsel %vm637, %v2533, %v2534
  %v2538 = vsel %vm637, %v2532, %v2533
  %v2539 = vsel %vm637, %v2535, %v2532
  %v2540 = vsel %vm608, %v2530, %v2539
  %v2541 = vsel %vm609, %v2529, %v2538
  %v2542 = vsel %vm610, %v2528, %v2537
  %v2543 = vsel %vm611, %v2531, %v2536
  %v2544 = vadd.f32 %v2520, %v2540
  %v2545 = vadd.f32 %v2521, %v2541
  %v2546 = vadd.f32 %v2522, %v2542
  %v2547 = vadd.f32 %v2523, %v2543
  %v2548 = vrot.slane %v2544, 2
  %v2549 = vrot.slane %v2545, 2
  %v2550 = vrot.slane %v2546, 2
  %v2551 = vrot.slane %v2547, 2
  %v2552 = vsel %vm654, %v2550, %v2551
  %v2553 = vsel %vm654, %v2549, %v2550
  %v2554 = vsel %vm654, %v2548, %v2549
  %v2555 = vsel %vm654, %v2551, %v2548
  %v2556 = vrot.slane %v2544, 6
  %v2557 = vrot.slane %v2545, 6
  %v2558 = vrot.slane %v2546, 6
  %v2559 = vrot.slane %v2547, 6
  %v2560 = vsel %vm663, %v2558, %v2559
  %v2561 = vsel %vm663, %v2557, %v2558
  %v2562 = vsel %vm663, %v2556, %v2557
  %v2563 = vsel %vm663, %v2559, %v2556
  %v2564 = vsel %vm616, %v2554, %v2563
  %v2565 = vsel %vm617, %v2553, %v2562
  %v2566 = vsel %vm618, %v2552, %v2561
  %v2567 = vsel %vm619, %v2555, %v2560
  %v2568 = vadd.f32 %v2544, %v2564
  %v2569 = vadd.f32 %v2545, %v2565
  %v2570 = vadd.f32 %v2546, %v2566
  %v2571 = vadd.f32 %v2547, %v2567
  %v2572 = vadd.f32 %v2568, 1e-06
  %v2573 = vadd.f32 %v2569, 1e-06
  %v2574 = vadd.f32 %v2570, 1e-06
  %v2575 = vadd.f32 %v2571, 1e-06
  %v2576 = vrsqrt.pop %v2572
  %v2577 = vrsqrt.pop %v2573
  %v2578 = vrsqrt.pop %v2574
  %v2579 = vrsqrt.pop %v2575
  %v2580 = vmul.f32 %v2516, %v2576
  %v2581 = vmul.f32 %v2517, %v2577
  %v2582 = vmul.f32 %v2518, %v2578
  %v2583 = vmul.f32 %v2519, %v2579
  %v2584 = vld [vmem:[%s7] sm:$0xff]
  %v2585 = vld [vmem:[%s7 + $0x8] sm:$0xff]
  %v2586 = vld [vmem:[%s7 + $0x10] sm:$0xff]
  %v2587 = vld [vmem:[%s7 + $0x18] sm:$0xff]
  %v2588 = vld [vmem:[%s7 + $0x20] sm:$0xff]
  %v2589 = vld [vmem:[%s7 + $0x28] sm:$0xff]
  %v2590 = vld [vmem:[%s7 + $0x30] sm:$0xff]
  %v2591 = vld [vmem:[%s7 + $0x38] sm:$0xff]
  %v2592 = vld [vmem:[%s7 + $0x40] sm:$0xff]
  %v2593 = vld [vmem:[%s7 + $0x48] sm:$0xff]
  %v2594 = vld [vmem:[%s7 + $0x50] sm:$0xff]
  %v2595 = vld [vmem:[%s7 + $0x58] sm:$0xff]
  %v2596 = vld [vmem:[%s7 + $0x60] sm:$0xff]
  %v2597 = vld [vmem:[%s7 + $0x68] sm:$0xff]
  %v2598 = vld [vmem:[%s7 + $0x70] sm:$0xff]
  %v2599 = vld [vmem:[%s7 + $0x78] sm:$0xff]
  %v2600 = vld [vmem:[%s8] sm:$0xff]
  %v2601 = vld [vmem:[%s8 + $0x8] sm:$0xff]
  %v2602 = vld [vmem:[%s8 + $0x10] sm:$0xff]
  %v2603 = vld [vmem:[%s8 + $0x18] sm:$0xff]
  %v2604 = vld [vmem:[%s8 + $0x20] sm:$0xff]
  %v2605 = vld [vmem:[%s8 + $0x28] sm:$0xff]
  %v2606 = vld [vmem:[%s8 + $0x30] sm:$0xff]
  %v2607 = vld [vmem:[%s8 + $0x38] sm:$0xff]
  %v2608 = vld [vmem:[%s8 + $0x40] sm:$0xff]
  %v2609 = vld [vmem:[%s8 + $0x48] sm:$0xff]
  %v2610 = vld [vmem:[%s8 + $0x50] sm:$0xff]
  %v2611 = vld [vmem:[%s8 + $0x58] sm:$0xff]
  %v2612 = vld [vmem:[%s8 + $0x60] sm:$0xff]
  %v2613 = vld [vmem:[%s8 + $0x68] sm:$0xff]
  %v2614 = vld [vmem:[%s8 + $0x70] sm:$0xff]
  %v2615 = vld [vmem:[%s8 + $0x78] sm:$0xff]
  %v2616 = vld [vmem:[%s9] sm:$0xf]
  %v2617 = vld [vmem:[%s10] sm:$0xf]
  %v2618 = vlaneseq
  %v2619 = vand.u32 %v2618, 127
  %vm2620 = vcmp.ge.s32.totalorder %v2619, 0
  %vm2621 = vcmp.lt.s32.totalorder %v2619, 16
  %vm2622 = vmand %vm2620, %vm2621
  %v2623 = vsel %vm2622, %v2580, -3.4028235e+38
  %v2624 = vsel %vm2622, %v2581, -3.4028235e+38
  %v2625 = vsel %vm2622, %v2582, -3.4028235e+38
  %v2626 = vsel %vm2622, %v2583, -3.4028235e+38
  %v2627 = vsel %vm53, %v2623, -inf
  %2628 = vmax.xlane.f32.xlu0 %v2627
  %v2629 = vpop.xlane.xlu0 %2628
  %v2630 = vsel %vm53, %v2624, -inf
  %2631 = vmax.xlane.f32.xlu0 %v2630
  %v2632 = vpop.xlane.xlu0 %2631
  %v2633 = vsel %vm53, %v2625, -inf
  %2634 = vmax.xlane.f32.xlu0 %v2633
  %v2635 = vpop.xlane.xlu0 %2634
  %v2636 = vsel %vm53, %v2626, -inf
  %2637 = vmax.xlane.f32.xlu0 %v2636
  %v2638 = vpop.xlane.xlu0 %2637
  %v2640 = vsel %vm53, %v2584, 0
  %v2643 = vsel %vm53, %v2585, 0
  %v2646 = vsel %vm53, %v2586, 0
  %v2649 = vsel %vm53, %v2587, 0
  %v2652 = vsel %vm53, %v2588, 0
  %v2655 = vsel %vm53, %v2589, 0
  %v2658 = vsel %vm53, %v2590, 0
  %v2661 = vsel %vm53, %v2591, 0
  %v2664 = vsel %vm53, %v2592, 0
  %v2667 = vsel %vm53, %v2593, 0
  %v2670 = vsel %vm53, %v2594, 0
  %v2673 = vsel %vm53, %v2595, 0
  %v2676 = vsel %vm53, %v2596, 0
  %v2679 = vsel %vm53, %v2597, 0
  %v2682 = vsel %vm53, %v2598, 0
  %v2685 = vsel %vm53, %v2599, 0
  %2687 = vmatprep.subr.mxu0 0.0
  %2688 = vmatpush1.msra.mxu0 %v2629
  %2689 = vmatprep.subr.mxu0 0.0
  %2690 = vmatpush1.msra.mxu0 %v2632
  %2691 = vmatprep.subr.mxu0 0.0
  %2692 = vmatpush1.msra.mxu0 %v2635
  %2693 = vmatprep.subr.mxu0 0.0
  %2694 = vmatpush1.msra.mxu0 %v2638
  %2695 = vmatprep.subr.mxu0 0.0
  %2696 = vmatpush1.msra.mxu0 0.0
  %2697 = vmatprep.subr.mxu0 0.0
  %2698 = vmatpush1.msra.mxu0 0.0
  %2699 = vmatprep.subr.mxu0 0.0
  %2700 = vmatpush1.msra.mxu0 0.0
  %2701 = vmatprep.subr.mxu0 0.0
  %2702 = vmatpush1.msra.mxu0 0.0
  %2703 = vmatprep.subr.mxu0 0.0
  %2704 = vmatpush1.msra.mxu0 0.0
  %2705 = vmatprep.subr.mxu0 0.0
  %2706 = vmatpush1.msra.mxu0 0.0
  %2707 = vmatprep.subr.mxu0 0.0
  %2708 = vmatpush1.msra.mxu0 0.0
  %2709 = vmatprep.subr.mxu0 0.0
  %2710 = vmatpush1.msra.mxu0 0.0
  %2711 = vmatprep.subr.mxu0 0.0
  %2712 = vmatpush1.msra.mxu0 0.0
  %2713 = vmatprep.subr.mxu0 0.0
  %2714 = vmatpush1.msra.mxu0 0.0
  %2715 = vmatprep.subr.mxu0 0.0
  %2716 = vmatpush1.msra.mxu0 0.0
  %2717 = vmatprep.subr.mxu0 0.0
  %2718 = vmatpush1.msra.mxu0 0.0
  %2719 = vmatprep.subr.mxu0 0.0
  %2720 = vmatpush1.msra.mxu0 0.0
  %2721 = vmatprep.subr.mxu0 0.0
  %2722 = vmatpush1.msra.mxu0 0.0
  %2723 = vmatprep.subr.mxu0 0.0
  %2724 = vmatpush1.msra.mxu0 0.0
  %2725 = vmatprep.subr.mxu0 0.0
  %2726 = vmatpush1.msra.mxu0 0.0
  %2727 = vmatprep.subr.mxu0 0.0
  %2728 = vmatpush1.msra.mxu0 0.0
  %2729 = vmatprep.subr.mxu0 0.0
  %2730 = vmatpush1.msra.mxu0 0.0
  %2731 = vmatprep.subr.mxu0 0.0
  %2732 = vmatpush1.msra.mxu0 0.0
  %2733 = vmatprep.subr.mxu0 0.0
  %2734 = vmatpush1.msra.mxu0 0.0
  %2735 = vmatprep.subr.mxu0 0.0
  %2736 = vmatpush1.msra.mxu0 0.0
  %2737 = vmatprep.subr.mxu0 0.0
  %2738 = vmatpush1.msra.mxu0 0.0
  %2739 = vmatprep.subr.mxu0 0.0
  %2740 = vmatpush1.msra.mxu0 0.0
  %2741 = vmatprep.subr.mxu0 0.0
  %2742 = vmatpush1.msra.mxu0 0.0
  %2743 = vmatprep.subr.mxu0 0.0
  %2744 = vmatpush1.msra.mxu0 0.0
  %2745 = vmatprep.subr.mxu0 0.0
  %2746 = vmatpush1.msra.mxu0 0.0
  %2747 = vmatprep.subr.mxu0 0.0
  %2748 = vmatpush1.msra.mxu0 0.0
  %2749 = vmatprep.subr.mxu0 0.0
  %2750 = vmatpush1.msra.mxu0 0.0
  %2751 = vmatprep.mubr.f32.mxu0 0.0
  %2752 = vmatmul.mubr.f32.gmra.mrb[0].mxu0 %v2640
  %v2753 = vpop.f32.mrb[0].mxu0
  %v2754 = vadd.f32 %v2600, %v2753
  %v2755 = vpop.f32.mrb[0].mxu0
  %2756 = vmatprep.mubr.f32.mxu0 0.0
  %2757 = vmatmul.mubr.f32.gmra.mrb[0].mxu0 %v2643
  %v2758 = vpop.f32.mrb[0].mxu0
  %v2759 = vadd.f32 %v2601, %v2758
  %v2760 = vpop.f32.mrb[0].mxu0
  %2761 = vmatprep.mubr.f32.mxu0 0.0
  %2762 = vmatmul.mubr.f32.gmra.mrb[0].mxu0 %v2646
  %v2763 = vpop.f32.mrb[0].mxu0
  %v2764 = vadd.f32 %v2602, %v2763
  %v2765 = vpop.f32.mrb[0].mxu0
  %2766 = vmatprep.mubr.f32.mxu0 0.0
  %2767 = vmatmul.mubr.f32.gmra.mrb[0].mxu0 %v2649
  %v2768 = vpop.f32.mrb[0].mxu0
  %v2769 = vadd.f32 %v2603, %v2768
  %v2770 = vpop.f32.mrb[0].mxu0
  %2771 = vmatprep.mubr.f32.mxu0 0.0
  %2772 = vmatmul.mubr.f32.gmra.mrb[0].mxu0 %v2652
  %v2773 = vpop.f32.mrb[0].mxu0
  %v2774 = vadd.f32 %v2604, %v2773
  %v2775 = vpop.f32.mrb[0].mxu0
  %2776 = vmatprep.mubr.f32.mxu0 0.0
  %2777 = vmatmul.mubr.f32.gmra.mrb[0].mxu0 %v2655
  %v2778 = vpop.f32.mrb[0].mxu0
  %v2779 = vadd.f32 %v2605, %v2778
  %v2780 = vpop.f32.mrb[0].mxu0
  %2781 = vmatprep.mubr.f32.mxu0 0.0
  %2782 = vmatmul.mubr.f32.gmra.mrb[0].mxu0 %v2658
  %v2783 = vpop.f32.mrb[0].mxu0
  %v2784 = vadd.f32 %v2606, %v2783
  %v2785 = vpop.f32.mrb[0].mxu0
  %2786 = vmatprep.mubr.f32.mxu0 0.0
  %2787 = vmatmul.mubr.f32.gmra.mrb[0].mxu0 %v2661
  %v2788 = vpop.f32.mrb[0].mxu0
  %v2789 = vadd.f32 %v2607, %v2788
  %v2790 = vpop.f32.mrb[0].mxu0
  %2791 = vmatprep.mubr.f32.mxu0 0.0
  %2792 = vmatmul.mubr.f32.gmra.mrb[0].mxu0 %v2664
  %v2793 = vpop.f32.mrb[0].mxu0
  %v2794 = vadd.f32 %v2608, %v2793
  %v2795 = vpop.f32.mrb[0].mxu0
  %2796 = vmatprep.mubr.f32.mxu0 0.0
  %2797 = vmatmul.mubr.f32.gmra.mrb[0].mxu0 %v2667
  %v2798 = vpop.f32.mrb[0].mxu0
  %v2799 = vadd.f32 %v2609, %v2798
  %v2800 = vpop.f32.mrb[0].mxu0
  %2801 = vmatprep.mubr.f32.mxu0 0.0
  %2802 = vmatmul.mubr.f32.gmra.mrb[0].mxu0 %v2670
  %v2803 = vpop.f32.mrb[0].mxu0
  %v2804 = vadd.f32 %v2610, %v2803
  %v2805 = vpop.f32.mrb[0].mxu0
  %2806 = vmatprep.mubr.f32.mxu0 0.0
  %2807 = vmatmul.mubr.f32.gmra.mrb[0].mxu0 %v2673
  %v2808 = vpop.f32.mrb[0].mxu0
  %v2809 = vadd.f32 %v2611, %v2808
  %v2810 = vpop.f32.mrb[0].mxu0
  %2811 = vmatprep.mubr.f32.mxu0 0.0
  %2812 = vmatmul.mubr.f32.gmra.mrb[0].mxu0 %v2676
  %v2813 = vpop.f32.mrb[0].mxu0
  %v2814 = vadd.f32 %v2612, %v2813
  %v2815 = vpop.f32.mrb[0].mxu0
  %2816 = vmatprep.mubr.f32.mxu0 0.0
  %2817 = vmatmul.mubr.f32.gmra.mrb[0].mxu0 %v2679
  %v2818 = vpop.f32.mrb[0].mxu0
  %v2819 = vadd.f32 %v2613, %v2818
  %v2820 = vpop.f32.mrb[0].mxu0
  %2821 = vmatprep.mubr.f32.mxu0 0.0
  %2822 = vmatmul.mubr.f32.gmra.mrb[0].mxu0 %v2682
  %v2823 = vpop.f32.mrb[0].mxu0
  %v2824 = vadd.f32 %v2614, %v2823
  %v2825 = vpop.f32.mrb[0].mxu0
  %2826 = vmatprep.mubr.f32.mxu0 0.0
  %2827 = vmatmul.mubr.f32.gmra.mrb[0].mxu0 %v2685
  %v2828 = vpop.f32.mrb[0].mxu0
  %v2829 = vadd.f32 %v2615, %v2828
  %v2830 = vpop.f32.mrb[0].mxu0
  %2831 = vdwg.mxu0
  %v2832 = vmax.f32 %v2754, 0.0
  %v2833 = vmax.f32 %v2759, 0.0
  %v2834 = vmax.f32 %v2764, 0.0
  %v2835 = vmax.f32 %v2769, 0.0
  %v2836 = vmax.f32 %v2774, 0.0
  %v2837 = vmax.f32 %v2779, 0.0
  %v2838 = vmax.f32 %v2784, 0.0
  %v2839 = vmax.f32 %v2789, 0.0
  %v2840 = vmax.f32 %v2794, 0.0
  %v2841 = vmax.f32 %v2799, 0.0
  %v2842 = vmax.f32 %v2804, 0.0
  %v2843 = vmax.f32 %v2809, 0.0
  %v2844 = vmax.f32 %v2814, 0.0
  %v2845 = vmax.f32 %v2819, 0.0
  %v2846 = vmax.f32 %v2824, 0.0
  %v2847 = vmax.f32 %v2829, 0.0
  %2848 = vmatprep.subr.mxu0 0.0
  %2849 = vmatpush1.msra.mxu0 %v2832
  %2850 = vmatprep.subr.mxu0 0.0
  %2851 = vmatpush1.msra.mxu0 %v2833
  %2852 = vmatprep.subr.mxu0 0.0
  %2853 = vmatpush1.msra.mxu0 %v2834
  %2854 = vmatprep.subr.mxu0 0.0
  %2855 = vmatpush1.msra.mxu0 %v2835
  %2856 = vmatprep.subr.mxu0 0.0
  %2857 = vmatpush1.msra.mxu0 %v2836
  %2858 = vmatprep.subr.mxu0 0.0
  %2859 = vmatpush1.msra.mxu0 %v2837
  %2860 = vmatprep.subr.mxu0 0.0
  %2861 = vmatpush1.msra.mxu0 %v2838
  %2862 = vmatprep.subr.mxu0 0.0
  %2863 = vmatpush1.msra.mxu0 %v2839
  %2864 = vmatprep.subr.mxu0 0.0
  %2865 = vmatpush1.msra.mxu0 %v2840
  %2866 = vmatprep.subr.mxu0 0.0
  %2867 = vmatpush1.msra.mxu0 %v2841
  %2868 = vmatprep.subr.mxu0 0.0
  %2869 = vmatpush1.msra.mxu0 %v2842
  %2870 = vmatprep.subr.mxu0 0.0
  %2871 = vmatpush1.msra.mxu0 %v2843
  %2872 = vmatprep.subr.mxu0 0.0
  %2873 = vmatpush1.msra.mxu0 %v2844
  %2874 = vmatprep.subr.mxu0 0.0
  %2875 = vmatpush1.msra.mxu0 %v2845
  %2876 = vmatprep.subr.mxu0 0.0
  %2877 = vmatpush1.msra.mxu0 %v2846
  %2878 = vmatprep.subr.mxu0 0.0
  %2879 = vmatpush1.msra.mxu0 %v2847
  %2880 = vmatprep.subr.mxu0 0.0
  %2881 = vmatpush1.msra.mxu0 0.0
  %2882 = vmatprep.subr.mxu0 0.0
  %2883 = vmatpush1.msra.mxu0 0.0
  %2884 = vmatprep.subr.mxu0 0.0
  %2885 = vmatpush1.msra.mxu0 0.0
  %2886 = vmatprep.subr.mxu0 0.0
  %2887 = vmatpush1.msra.mxu0 0.0
  %2888 = vmatprep.subr.mxu0 0.0
  %2889 = vmatpush1.msra.mxu0 0.0
  %2890 = vmatprep.subr.mxu0 0.0
  %2891 = vmatpush1.msra.mxu0 0.0
  %2892 = vmatprep.subr.mxu0 0.0
  %2893 = vmatpush1.msra.mxu0 0.0
  %2894 = vmatprep.subr.mxu0 0.0
  %2895 = vmatpush1.msra.mxu0 0.0
  %2896 = vmatprep.subr.mxu0 0.0
  %2897 = vmatpush1.msra.mxu0 0.0
  %2898 = vmatprep.subr.mxu0 0.0
  %2899 = vmatpush1.msra.mxu0 0.0
  %2900 = vmatprep.subr.mxu0 0.0
  %2901 = vmatpush1.msra.mxu0 0.0
  %2902 = vmatprep.subr.mxu0 0.0
  %2903 = vmatpush1.msra.mxu0 0.0
  %2904 = vmatprep.subr.mxu0 0.0
  %2905 = vmatpush1.msra.mxu0 0.0
  %2906 = vmatprep.subr.mxu0 0.0
  %2907 = vmatpush1.msra.mxu0 0.0
  %2908 = vmatprep.subr.mxu0 0.0
  %2909 = vmatpush1.msra.mxu0 0.0
  %2910 = vmatprep.subr.mxu0 0.0
  %2911 = vmatpush1.msra.mxu0 0.0
  %2912 = vmatprep.mubr.f32.mxu0 0.0
  %2913 = vmatmul.mubr.f32.gmra.mrb[0].mxu0 %v2616
  %v2914 = vpop.f32.mrb[0].mxu0
  %v2915 = vadd.f32 %v2617, %v2914
  %v2916 = vpop.f32.mrb[0].mxu0
  %2917 = vdwg.mxu0
  %vm2918 = vcmp.eq.s32.totalorder %v2619, 0
  %2920 = vset.pattern.permute.xlu0 0
  %2921 = vperm.xlu0 %2920, %v2915
  %v2922 = vpop.permute.xlu0 %2921
  %v2924 = vsel %vm2918, %v2922, 0.0
  %v2925 = vadd.f32 %v2924, 0.0
  %vm2926 = vcmp.ge.s32.totalorder %v2619, 16
  %vm2927 = vcmp.lt.s32.totalorder %v2619, 32
  %vm2928 = vmand %vm2926, %vm2927
  %v2929 = vsel %vm2928, %v2580, -3.4028235e+38
  %v2930 = vsel %vm2928, %v2581, -3.4028235e+38
  %v2931 = vsel %vm2928, %v2582, -3.4028235e+38
  %v2932 = vsel %vm2928, %v2583, -3.4028235e+38
  %v2933 = vsel %vm53, %v2929, -inf
  %2934 = vmax.xlane.f32.xlu0 %v2933
  %v2935 = vpop.xlane.xlu0 %2934
  %v2936 = vsel %vm53, %v2930, -inf
  %2937 = vmax.xlane.f32.xlu0 %v2936
  %v2938 = vpop.xlane.xlu0 %2937
  %v2939 = vsel %vm53, %v2931, -inf
  %2940 = vmax.xlane.f32.xlu0 %v2939
  %v2941 = vpop.xlane.xlu0 %2940
  %v2942 = vsel %vm53, %v2932, -inf
  %2943 = vmax.xlane.f32.xlu0 %v2942
  %v2944 = vpop.xlane.xlu0 %2943
  %2945 = vmatprep.subr.mxu0 0.0
  %2946 = vmatpush1.msra.mxu0 %v2935
  %2947 = vmatprep.subr.mxu0 0.0
  %2948 = vmatpush1.msra.mxu0 %v2938
  %2949 = vmatprep.subr.mxu0 0.0
  %2950 = vmatpush1.msra.mxu0 %v2941
  %2951 = vmatprep.subr.mxu0 0.0
  %2952 = vmatpush1.msra.mxu0 %v2944
  %2953 = vmatprep.subr.mxu0 0.0
  %2954 = vmatpush1.msra.mxu0 0.0
  %2955 = vmatprep.subr.mxu0 0.0
  %2956 = vmatpush1.msra.mxu0 0.0
  %2957 = vmatprep.subr.mxu0 0.0
  %2958 = vmatpush1.msra.mxu0 0.0
  %2959 = vmatprep.subr.mxu0 0.0
  %2960 = vmatpush1.msra.mxu0 0.0
  %2961 = vmatprep.subr.mxu0 0.0
  %2962 = vmatpush1.msra.mxu0 0.0
  %2963 = vmatprep.subr.mxu0 0.0
  %2964 = vmatpush1.msra.mxu0 0.0
  %2965 = vmatprep.subr.mxu0 0.0
  %2966 = vmatpush1.msra.mxu0 0.0
  %2967 = vmatprep.subr.mxu0 0.0
  %2968 = vmatpush1.msra.mxu0 0.0
  %2969 = vmatprep.subr.mxu0 0.0
  %2970 = vmatpush1.msra.mxu0 0.0
  %2971 = vmatprep.subr.mxu0 0.0
  %2972 = vmatpush1.msra.mxu0 0.0
  %2973 = vmatprep.subr.mxu0 0.0
  %2974 = vmatpush1.msra.mxu0 0.0
  %2975 = vmatprep.subr.mxu0 0.0
  %2976 = vmatpush1.msra.mxu0 0.0
  %2977 = vmatprep.subr.mxu0 0.0
  %2978 = vmatpush1.msra.mxu0 0.0
  %2979 = vmatprep.subr.mxu0 0.0
  %2980 = vmatpush1.msra.mxu0 0.0
  %2981 = vmatprep.subr.mxu0 0.0
  %2982 = vmatpush1.msra.mxu0 0.0
  %2983 = vmatprep.subr.mxu0 0.0
  %2984 = vmatpush1.msra.mxu0 0.0
  %2985 = vmatprep.subr.mxu0 0.0
  %2986 = vmatpush1.msra.mxu0 0.0
  %2987 = vmatprep.subr.mxu0 0.0
  %2988 = vmatpush1.msra.mxu0 0.0
  %2989 = vmatprep.subr.mxu0 0.0
  %2990 = vmatpush1.msra.mxu0 0.0
  %2991 = vmatprep.subr.mxu0 0.0
  %2992 = vmatpush1.msra.mxu0 0.0
  %2993 = vmatprep.subr.mxu0 0.0
  %2994 = vmatpush1.msra.mxu0 0.0
  %2995 = vmatprep.subr.mxu0 0.0
  %2996 = vmatpush1.msra.mxu0 0.0
  %2997 = vmatprep.subr.mxu0 0.0
  %2998 = vmatpush1.msra.mxu0 0.0
  %2999 = vmatprep.subr.mxu0 0.0
  %3000 = vmatpush1.msra.mxu0 0.0
  %3001 = vmatprep.subr.mxu0 0.0
  %3002 = vmatpush1.msra.mxu0 0.0
  %3003 = vmatprep.subr.mxu0 0.0
  %3004 = vmatpush1.msra.mxu0 0.0
  %3005 = vmatprep.subr.mxu0 0.0
  %3006 = vmatpush1.msra.mxu0 0.0
  %3007 = vmatprep.subr.mxu0 0.0
  %3008 = vmatpush1.msra.mxu0 0.0
  %3009 = vmatprep.mubr.f32.mxu0 0.0
  %3010 = vmatmul.mubr.f32.gmra.mrb[0].mxu0 %v2640
  %v3011 = vpop.f32.mrb[0].mxu0
  %v3012 = vadd.f32 %v2600, %v3011
  %v3013 = vpop.f32.mrb[0].mxu0
  %3014 = vmatprep.mubr.f32.mxu0 0.0
  %3015 = vmatmul.mubr.f32.gmra.mrb[0].mxu0 %v2643
  %v3016 = vpop.f32.mrb[0].mxu0
  %v3017 = vadd.f32 %v2601, %v3016
  %v3018 = vpop.f32.mrb[0].mxu0
  %3019 = vmatprep.mubr.f32.mxu0 0.0
  %3020 = vmatmul.mubr.f32.gmra.mrb[0].mxu0 %v2646
  %v3021 = vpop.f32.mrb[0].mxu0
  %v3022 = vadd.f32 %v2602, %v3021
  %v3023 = vpop.f32.mrb[0].mxu0
  %3024 = vmatprep.mubr.f32.mxu0 0.0
  %3025 = vmatmul.mubr.f32.gmra.mrb[0].mxu0 %v2649
  %v3026 = vpop.f32.mrb[0].mxu0
  %v3027 = vadd.f32 %v2603, %v3026
  %v3028 = vpop.f32.mrb[0].mxu0
  %3029 = vmatprep.mubr.f32.mxu0 0.0
  %3030 = vmatmul.mubr.f32.gmra.mrb[0].mxu0 %v2652
  %v3031 = vpop.f32.mrb[0].mxu0
  %v3032 = vadd.f32 %v2604, %v3031
  %v3033 = vpop.f32.mrb[0].mxu0
  %3034 = vmatprep.mubr.f32.mxu0 0.0
  %3035 = vmatmul.mubr.f32.gmra.mrb[0].mxu0 %v2655
  %v3036 = vpop.f32.mrb[0].mxu0
  %v3037 = vadd.f32 %v2605, %v3036
  %v3038 = vpop.f32.mrb[0].mxu0
  %3039 = vmatprep.mubr.f32.mxu0 0.0
  %3040 = vmatmul.mubr.f32.gmra.mrb[0].mxu0 %v2658
  %v3041 = vpop.f32.mrb[0].mxu0
  %v3042 = vadd.f32 %v2606, %v3041
  %v3043 = vpop.f32.mrb[0].mxu0
  %3044 = vmatprep.mubr.f32.mxu0 0.0
  %3045 = vmatmul.mubr.f32.gmra.mrb[0].mxu0 %v2661
  %v3046 = vpop.f32.mrb[0].mxu0
  %v3047 = vadd.f32 %v2607, %v3046
  %v3048 = vpop.f32.mrb[0].mxu0
  %3049 = vmatprep.mubr.f32.mxu0 0.0
  %3050 = vmatmul.mubr.f32.gmra.mrb[0].mxu0 %v2664
  %v3051 = vpop.f32.mrb[0].mxu0
  %v3052 = vadd.f32 %v2608, %v3051
  %v3053 = vpop.f32.mrb[0].mxu0
  %3054 = vmatprep.mubr.f32.mxu0 0.0
  %3055 = vmatmul.mubr.f32.gmra.mrb[0].mxu0 %v2667
  %v3056 = vpop.f32.mrb[0].mxu0
  %v3057 = vadd.f32 %v2609, %v3056
  %v3058 = vpop.f32.mrb[0].mxu0
  %3059 = vmatprep.mubr.f32.mxu0 0.0
  %3060 = vmatmul.mubr.f32.gmra.mrb[0].mxu0 %v2670
  %v3061 = vpop.f32.mrb[0].mxu0
  %v3062 = vadd.f32 %v2610, %v3061
  %v3063 = vpop.f32.mrb[0].mxu0
  %3064 = vmatprep.mubr.f32.mxu0 0.0
  %3065 = vmatmul.mubr.f32.gmra.mrb[0].mxu0 %v2673
  %v3066 = vpop.f32.mrb[0].mxu0
  %v3067 = vadd.f32 %v2611, %v3066
  %v3068 = vpop.f32.mrb[0].mxu0
  %3069 = vmatprep.mubr.f32.mxu0 0.0
  %3070 = vmatmul.mubr.f32.gmra.mrb[0].mxu0 %v2676
  %v3071 = vpop.f32.mrb[0].mxu0
  %v3072 = vadd.f32 %v2612, %v3071
  %v3073 = vpop.f32.mrb[0].mxu0
  %3074 = vmatprep.mubr.f32.mxu0 0.0
  %3075 = vmatmul.mubr.f32.gmra.mrb[0].mxu0 %v2679
  %v3076 = vpop.f32.mrb[0].mxu0
  %v3077 = vadd.f32 %v2613, %v3076
  %v3078 = vpop.f32.mrb[0].mxu0
  %3079 = vmatprep.mubr.f32.mxu0 0.0
  %3080 = vmatmul.mubr.f32.gmra.mrb[0].mxu0 %v2682
  %v3081 = vpop.f32.mrb[0].mxu0
  %v3082 = vadd.f32 %v2614, %v3081
  %v3083 = vpop.f32.mrb[0].mxu0
  %3084 = vmatprep.mubr.f32.mxu0 0.0
  %3085 = vmatmul.mubr.f32.gmra.mrb[0].mxu0 %v2685
  %v3086 = vpop.f32.mrb[0].mxu0
  %v3087 = vadd.f32 %v2615, %v3086
  %v3088 = vpop.f32.mrb[0].mxu0
  %3089 = vdwg.mxu0
  %v3090 = vmax.f32 %v3012, 0.0
  %v3091 = vmax.f32 %v3017, 0.0
  %v3092 = vmax.f32 %v3022, 0.0
  %v3093 = vmax.f32 %v3027, 0.0
  %v3094 = vmax.f32 %v3032, 0.0
  %v3095 = vmax.f32 %v3037, 0.0
  %v3096 = vmax.f32 %v3042, 0.0
  %v3097 = vmax.f32 %v3047, 0.0
  %v3098 = vmax.f32 %v3052, 0.0
  %v3099 = vmax.f32 %v3057, 0.0
  %v3100 = vmax.f32 %v3062, 0.0
  %v3101 = vmax.f32 %v3067, 0.0
  %v3102 = vmax.f32 %v3072, 0.0
  %v3103 = vmax.f32 %v3077, 0.0
  %v3104 = vmax.f32 %v3082, 0.0
  %v3105 = vmax.f32 %v3087, 0.0
  %3106 = vmatprep.subr.mxu0 0.0
  %3107 = vmatpush1.msra.mxu0 %v3090
  %3108 = vmatprep.subr.mxu0 0.0
  %3109 = vmatpush1.msra.mxu0 %v3091
  %3110 = vmatprep.subr.mxu0 0.0
  %3111 = vmatpush1.msra.mxu0 %v3092
  %3112 = vmatprep.subr.mxu0 0.0
  %3113 = vmatpush1.msra.mxu0 %v3093
  %3114 = vmatprep.subr.mxu0 0.0
  %3115 = vmatpush1.msra.mxu0 %v3094
  %3116 = vmatprep.subr.mxu0 0.0
  %3117 = vmatpush1.msra.mxu0 %v3095
  %3118 = vmatprep.subr.mxu0 0.0
  %3119 = vmatpush1.msra.mxu0 %v3096
  %3120 = vmatprep.subr.mxu0 0.0
  %3121 = vmatpush1.msra.mxu0 %v3097
  %3122 = vmatprep.subr.mxu0 0.0
  %3123 = vmatpush1.msra.mxu0 %v3098
  %3124 = vmatprep.subr.mxu0 0.0
  %3125 = vmatpush1.msra.mxu0 %v3099
  %3126 = vmatprep.subr.mxu0 0.0
  %3127 = vmatpush1.msra.mxu0 %v3100
  %3128 = vmatprep.subr.mxu0 0.0
  %3129 = vmatpush1.msra.mxu0 %v3101
  %3130 = vmatprep.subr.mxu0 0.0
  %3131 = vmatpush1.msra.mxu0 %v3102
  %3132 = vmatprep.subr.mxu0 0.0
  %3133 = vmatpush1.msra.mxu0 %v3103
  %3134 = vmatprep.subr.mxu0 0.0
  %3135 = vmatpush1.msra.mxu0 %v3104
  %3136 = vmatprep.subr.mxu0 0.0
  %3137 = vmatpush1.msra.mxu0 %v3105
  %3138 = vmatprep.subr.mxu0 0.0
  %3139 = vmatpush1.msra.mxu0 0.0
  %3140 = vmatprep.subr.mxu0 0.0
  %3141 = vmatpush1.msra.mxu0 0.0
  %3142 = vmatprep.subr.mxu0 0.0
  %3143 = vmatpush1.msra.mxu0 0.0
  %3144 = vmatprep.subr.mxu0 0.0
  %3145 = vmatpush1.msra.mxu0 0.0
  %3146 = vmatprep.subr.mxu0 0.0
  %3147 = vmatpush1.msra.mxu0 0.0
  %3148 = vmatprep.subr.mxu0 0.0
  %3149 = vmatpush1.msra.mxu0 0.0
  %3150 = vmatprep.subr.mxu0 0.0
  %3151 = vmatpush1.msra.mxu0 0.0
  %3152 = vmatprep.subr.mxu0 0.0
  %3153 = vmatpush1.msra.mxu0 0.0
  %3154 = vmatprep.subr.mxu0 0.0
  %3155 = vmatpush1.msra.mxu0 0.0
  %3156 = vmatprep.subr.mxu0 0.0
  %3157 = vmatpush1.msra.mxu0 0.0
  %3158 = vmatprep.subr.mxu0 0.0
  %3159 = vmatpush1.msra.mxu0 0.0
  %3160 = vmatprep.subr.mxu0 0.0
  %3161 = vmatpush1.msra.mxu0 0.0
  %3162 = vmatprep.subr.mxu0 0.0
  %3163 = vmatpush1.msra.mxu0 0.0
  %3164 = vmatprep.subr.mxu0 0.0
  %3165 = vmatpush1.msra.mxu0 0.0
  %3166 = vmatprep.subr.mxu0 0.0
  %3167 = vmatpush1.msra.mxu0 0.0
  %3168 = vmatprep.subr.mxu0 0.0
  %3169 = vmatpush1.msra.mxu0 0.0
  %3170 = vmatprep.mubr.f32.mxu0 0.0
  %3171 = vmatmul.mubr.f32.gmra.mrb[0].mxu0 %v2616
  %v3172 = vpop.f32.mrb[0].mxu0
  %v3173 = vadd.f32 %v2617, %v3172
  %v3174 = vpop.f32.mrb[0].mxu0
  %3175 = vdwg.mxu0
  %vm3176 = vcmp.eq.s32.totalorder %v2619, 1
  %3178 = vset.pattern.permute.xlu0 0
  %3179 = vperm.xlu0 %3178, %v3173
  %v3180 = vpop.permute.xlu0 %3179
  %v3182 = vsel %vm3176, %v3180, 0.0
  %v3183 = vadd.f32 %v2925, %v3182
  %vm3184 = vcmask 11264
  %3185 = vst.msk [vmem:[%s11] sm:$0xf] %vm3184, %v3183
  // Predicated region
  $region46: #{_lambda_.1} parent=0 // pred_check
    _
  $region47: #{_lambda_.1} parent=0 // pred_check_branch
    %3187 = sbr.rel (0) target = $region49
  $region48: #{_lambda_.1} parent=0 // pred_region
    _
  $region49: #{_lambda_.1} parent=0 // pred_fallthru
    _
  // Predicated region
  $region50: #{_lambda_.1} parent=0 // pred_check
    _
  $region51: #{_lambda_.1} parent=0 // pred_check_branch
    %3189 = sbr.rel (0) target = $region53
  $region52: #{_lambda_.1} parent=0 // pred_region
    _
  $region53: #{_lambda_.1} parent=0 // pred_fallthru
    _
  // Predicated region
  $region54: #{_lambda_.1} parent=0 // pred_check
    _
  $region55: #{_lambda_.1} parent=0 // pred_check_branch
    %3191 = sbr.rel (0) target = $region57
  $region56: #{_lambda_.1} parent=0 // pred_region
    _
  $region57: #{_lambda_.1} parent=0 // pred_fallthru
    _
  // Predicated region
  $region58: #{_lambda_.1} parent=0 // pred_check
    _
  $region59: #{_lambda_.1} parent=0 // pred_check_branch
    %3193 = sbr.rel (0) target = $region61
  $region60: #{_lambda_.1} parent=0 // pred_region
    _
  $region61: #{_lambda_.1} parent=0 // pred_fallthru
    _
  // Predicated region
  $region62: #{_lambda_.1} parent=0 // pred_check
    _
  $region63: #{_lambda_.1} parent=0 // pred_check_branch
    %3195 = sbr.rel (0) target = $region65
  $region64: #{_lambda_.1} parent=0 // pred_region
    _
  $region65: #{_lambda_.1} parent=0 // pred_fallthru
    _
  // Predicated region
  $region66: #{_lambda_.1} parent=0 // pred_check
    _
  $region67: #{_lambda_.1} parent=0 // pred_check_branch
    %3197 = sbr.rel (0) target = $region69
  $region68: #{_lambda_.1} parent=0 // pred_region
    _
  $region69: #{_lambda_.1} parent=0 // pred_fallthru
    _

</llo_original>
